<compile_context>
chip_gen: v6e
topology: v6e:2x2x1
jax: 0.10.0
libtpu: 0.0.40
codegen_flags: <defaults>
</compile_context>

<pallas_src>
import functools

import jax
import jax.numpy as jnp
from jax.experimental import pallas as pl
from jax.experimental.pallas import tpu as pltpu

EPS = 1e-5
C_IN, C_OUT = 3, 64
KH = KW = 7
STRIDE, PAD = 2, 3
K_DIM = C_IN * KH * KW          # 147
K_PAD = 160                     # aligned (mult. of 16/32) -> unmasked loads,
                                # without the +60% HBM bytes of padding to 256
TM_MAX = 512                    # row tile (lane dim of the output)

ATT_L = 1000                    # self.L
ATT_D = 128                     # self.D
ATT_K = 1                       # self.K


def _round_up(v, m):
    return (v + m - 1) // m * m


# ---------------------------------------------------------------------------
# Kernel 1: fused conv1 (im2col matmul) + batch-stats BN + ReLU, two-phase grid
# ---------------------------------------------------------------------------
def _stem_kernel(pT_ref, wT_ref, g_ref, b_ref, out_ref,
                 sum_sc, sq_sc, scale_sc, bias_sc, *, inv_m):
    phase = pl.program_id(0)
    i = pl.program_id(1)
    # (C_OUT, TM) = (64, Kp) @ (Kp, TM); bf16 operands, f32 accumulation (MXU).
    y = jnp.dot(wT_ref[...], pT_ref[...], preferred_element_type=jnp.float32)

    @pl.when(phase == 0)
    def _():
        @pl.when(i == 0)
        def _():
            sum_sc[...] = jnp.zeros_like(sum_sc)
            sq_sc[...] = jnp.zeros_like(sq_sc)

        # zero-padded M columns contribute 0 to both sums
        sum_sc[...] += jnp.sum(y, axis=1, keepdims=True)
        sq_sc[...] += jnp.sum(y * y, axis=1, keepdims=True)

        @pl.when(i == pl.num_programs(1) - 1)
        def _():
            mean = sum_sc[...] * inv_m
            var = sq_sc[...] * inv_m - mean * mean        # biased (BN train mode)
            scale = g_ref[...] * jax.lax.rsqrt(var + EPS)  # EUP rsqrt
            scale_sc[...] = scale
            bias_sc[...] = b_ref[...] - mean * scale

    @pl.when(phase == 1)
    def _():
        out_ref[...] = jnp.maximum(y * scale_sc[...] + bias_sc[...], 0.0
                                   ).astype(out_ref.dtype)


def _im2col_T(x):
    """x: (Nimg, C, H, W) -> patches^T (C*KH*KW, Nimg*Ho*Wo), k order (c, kh, kw)."""
    n, c, h, w = x.shape
    xp = jnp.pad(x, ((0, 0), (0, 0), (PAD, PAD), (PAD, PAD)))
    ho = (h + 2 * PAD - KH) // STRIDE + 1
    wo = (w + 2 * PAD - KW) // STRIDE + 1
    slabs = []
    for i in range(KH):
        for j in range(KW):
            slabs.append(xp[:, :, i:i + STRIDE * ho:STRIDE, j:j + STRIDE * wo:STRIDE])
    p = jnp.stack(slabs, axis=0)                   # (49, N, C, Ho, Wo)
    p = p.reshape(KH * KW, n, c, ho * wo)
    p = p.transpose(2, 0, 1, 3)                    # (C, 49, N, Ho*Wo)
    # TODO(synk): build directly from NHWC / on-chip im2col (pl.ANY + manual DMA)
    # to avoid this 49x-expanded XLA transpose at real image sizes.
    return p.reshape(c * KH * KW, n * ho * wo), ho, wo


def _resnet_stem(params, x_nchw):
    """conv1 -> bn1(batch stats) -> relu.  Returns lane-dense (64, M) bf16."""
    pT, ho, wo = _im2col_T(x_nchw)                 # (147, M) f32
    m = pT.shape[1]
    tm = max(128, min(TM_MAX, _round_up(m, 128)))
    mp = _round_up(m, tm)
    pT = jnp.pad(pT, ((0, K_PAD - K_DIM), (0, mp - m))).astype(jnp.bfloat16)
    wT = params["conv1_w"].reshape(C_OUT, K_DIM)
    wT = jnp.pad(wT, ((0, 0), (0, K_PAD - K_DIM))).astype(jnp.bfloat16)
    gamma = params["bn1_gamma"].reshape(C_OUT, 1)
    beta = params["bn1_beta"].reshape(C_OUT, 1)
    n_tiles = mp // tm

    out_T = pl.pallas_call(
        functools.partial(_stem_kernel, inv_m=1.0 / float(m)),
        out_shape=jax.ShapeDtypeStruct((C_OUT, mp), jnp.bfloat16),
        grid_spec=pltpu.PrefetchScalarGridSpec(
            num_scalar_prefetch=0,
            grid=(2, n_tiles),                     # (phase, row-tile)
            in_specs=[pl.BlockSpec((K_PAD, tm), lambda p, i: (0, i)),
                      pl.BlockSpec((C_OUT, K_PAD), lambda p, i: (0, 0)),
                      pl.BlockSpec((C_OUT, 1), lambda p, i: (0, 0)),
                      pl.BlockSpec((C_OUT, 1), lambda p, i: (0, 0))],
            # phase 0 pins the output to block 0 (never written back with junk);
            # phase 1 streams the real tiles out.
            out_specs=pl.BlockSpec((C_OUT, tm), lambda p, i: (0, p * i)),
            scratch_shapes=[pltpu.VMEM((C_OUT, 1), jnp.float32)] * 4),
        compiler_params=pltpu.CompilerParams(
            dimension_semantics=("arbitrary", "arbitrary")),
    )(pT, wT, gamma, beta)
    return out_T[:, :m], ho, wo


# ---------------------------------------------------------------------------
# Kernel 2: fc stand-in + both attention heads + softmax + MIL pooling + classifiers
# ---------------------------------------------------------------------------
def _mil_head_kernel(f_ref, wfc_ref, bfc_ref, w1_ref, b1_ref, v2_ref, a2b_ref,
                     wc_ref, cb_ref, yp_ref, att_ref):
    f = f_ref[0]                                                   # (N, 64)
    h = jnp.dot(f, wfc_ref[...], preferred_element_type=jnp.float32) + bfc_ref[...]  # (N, L)
    for head in range(2):                                          # static unroll
        t = jnp.tanh(jnp.dot(h, w1_ref[head], preferred_element_type=jnp.float32)
                     + b1_ref[head])                               # (N, D)
        logit = jnp.sum(t * v2_ref[head], axis=1, keepdims=True) + a2b_ref[head]  # (N, 1)
        mx = jnp.max(logit, axis=0, keepdims=True)
        e = jnp.exp(logit - mx)
        a = e / jnp.sum(e, axis=0, keepdims=True)                  # softmax over bag
        pooled = jnp.sum(a * h, axis=0, keepdims=True)             # (1, L) = A @ H
        s = jnp.sum(pooled * wc_ref[head], axis=1, keepdims=True) + cb_ref[head]
        yp_ref[0, head] = s                                        # (1, 1)
        att_ref[0, head] = a                                       # (N, 1)


def _mil_head(params, feats):
    B, N, _ = feats.shape
    L, D = ATT_L, ATT_D
    return pl.pallas_call(
        _mil_head_kernel,
        out_shape=(jax.ShapeDtypeStruct((B, 2, 1, 1), jnp.float32),
                   jax.ShapeDtypeStruct((B, 2, N, 1), jnp.float32)),
        grid_spec=pltpu.PrefetchScalarGridSpec(
            num_scalar_prefetch=0,
            grid=(B,),
            in_specs=[pl.BlockSpec((1, N, C_OUT), lambda b: (b, 0, 0)),
                      pl.BlockSpec((C_OUT, L), lambda b: (0, 0)),
                      pl.BlockSpec((1, L), lambda b: (0, 0)),
                      pl.BlockSpec((2, L, D), lambda b: (0, 0, 0)),
                      pl.BlockSpec((2, 1, D), lambda b: (0, 0, 0)),
                      pl.BlockSpec((2, 1, D), lambda b: (0, 0, 0)),
                      pl.BlockSpec((2, 1, 1), lambda b: (0, 0, 0)),
                      pl.BlockSpec((2, 1, L), lambda b: (0, 0, 0)),
                      pl.BlockSpec((2, 1, 1), lambda b: (0, 0, 0))],
            out_specs=[pl.BlockSpec((1, 2, 1, 1), lambda b: (b, 0, 0, 0)),
                       pl.BlockSpec((1, 2, N, 1), lambda b: (b, 0, 0, 0))]),
        compiler_params=pltpu.CompilerParams(
            dimension_semantics=("parallel",)),
    )(feats, params["fc_w"], params["fc_b"].reshape(1, L),
      params["att_w1"], params["att_b1"].reshape(2, 1, D),
      params["att_w2"].reshape(2, 1, D), params["att_b2"].reshape(2, 1, 1),
      params["cls_w"].reshape(2, 1, L), params["cls_b"].reshape(2, 1, 1))


# ---------------------------------------------------------------------------
# Full forward (matches AttentionSlide_MultiBatch.forward)
# ---------------------------------------------------------------------------
def attention_slide_forward(params, x):
    B, N = x.shape[0], x.shape[1]
    x1 = x.reshape(B * N, 3, x.shape[3], x.shape[4])

    feat_T, ho, wo = _resnet_stem(params, x1)                    # (64, B*N*Ho*Wo) bf16
    # TODO(synk): resnet34 maxpool + layer1..layer4 omitted; global-avg-pool the
    # stem features and let the head kernel's fc project 64 -> L=1000.
    pooled = feat_T.astype(jnp.float32).reshape(C_OUT, B * N, ho * wo).mean(axis=2)
    feats = pooled.T.reshape(B, N, C_OUT)                        # (B, N, 64)

    yp, att = _mil_head(params, feats)
    Y_prob = yp.reshape(B, 2)                                    # stack((p1, p2), dim=1)
    Y_hat = jnp.argmax(Y_prob, axis=1)
    A = jnp.squeeze(att, axis=-1)                                # (B, 2, N)
    return Y_prob, Y_hat, A


# ---------------------------------------------------------------------------
if __name__ == "__main__":
    key = jax.random.PRNGKey(0)
    ks = jax.random.split(key, 12)
    params = {
        "conv1_w": 0.05 * jax.random.normal(ks[0], (C_OUT, C_IN, KH, KW), jnp.float32),
        "bn1_gamma": 1.0 + 0.1 * jax.random.normal(ks[1], (C_OUT,), jnp.float32),
        "bn1_beta": 0.1 * jax.random.normal(ks[2], (C_OUT,), jnp.float32),
        "fc_w": 0.05 * jax.random.normal(ks[3], (C_OUT, ATT_L), jnp.float32),
        "fc_b": 0.05 * jax.random.normal(ks[4], (ATT_L,), jnp.float32),
        "att_w1": 0.05 * jax.random.normal(ks[5], (2, ATT_L, ATT_D), jnp.float32),
        "att_b1": 0.05 * jax.random.normal(ks[6], (2, ATT_D), jnp.float32),
        "att_w2": 0.05 * jax.random.normal(ks[7], (2, ATT_D), jnp.float32),
        "att_b2": 0.05 * jax.random.normal(ks[8], (2,), jnp.float32),
        "cls_w": 0.05 * jax.random.normal(ks[9], (2, ATT_L), jnp.float32),
        "cls_b": 0.05 * jax.random.normal(ks[10], (2,), jnp.float32),
    }

    # x: (batch_of_slides B=2, instances per slide N=4, 3, 16, 16)
    x = jax.random.normal(ks[11], (2, 4, 3, 16, 16), jnp.float32)

    fwd = jax.jit(attention_slide_forward)
    Y_prob, Y_hat, A = jax.block_until_ready(fwd(params, x))

    assert Y_prob.shape == (2, 2)
    assert Y_hat.shape == (2,)
    assert A.shape == (2, 2, 4)
    assert bool(jnp.all(jnp.isfinite(Y_prob)))
    assert bool(jnp.all(jnp.isfinite(A)))
    print("KERNEL_OK")
</pallas_src>

<mosaic_0001>
module attributes {stable_mosaic.version = 11 : i64} {
  func.func @_stem_kernel(%arg0: i32, %arg1: i32, %arg2: memref<160x512xbf16, #tpu.memory_space<vmem>>, %arg3: memref<64x160xbf16, #tpu.memory_space<vmem>>, %arg4: memref<64x1xf32, #tpu.memory_space<vmem>>, %arg5: memref<64x1xf32, #tpu.memory_space<vmem>>, %arg6: memref<64x512xbf16, #tpu.memory_space<vmem>>, %arg7: memref<64x1xf32, #tpu.memory_space<vmem>>, %arg8: memref<64x1xf32, #tpu.memory_space<vmem>>, %arg9: memref<64x1xf32, #tpu.memory_space<vmem>>, %arg10: memref<64x1xf32, #tpu.memory_space<vmem>>) attributes {dimension_semantics = [#tpu.dimension_semantics<arbitrary>, #tpu.dimension_semantics<arbitrary>], iteration_bounds = array<i64: 2, 1>, scalar_prefetch = 0 : i64, scratch_operands = 4 : i64, tpu.core_type = #tpu.core_type<tc>, window_params = [{transform_indices = @transform_0, window_bounds = array<i64: 160, 512>}, {pipeline_mode = #tpu.pipeline_mode<synchronous>, transform_indices = @transform_1, window_bounds = array<i64: 64, 160>}, {pipeline_mode = #tpu.pipeline_mode<synchronous>, transform_indices = @transform_2, window_bounds = array<i64: 64, 1>}, {pipeline_mode = #tpu.pipeline_mode<synchronous>, transform_indices = @transform_3, window_bounds = array<i64: 64, 1>}, {transform_indices = @transform_4, window_bounds = array<i64: 64, 512>}]} {
    %c0 = arith.constant 0 : index
    %c0_0 = arith.constant 0 : index
    %0 = vector.load %arg3[%c0, %c0_0] : memref<64x160xbf16, #tpu.memory_space<vmem>>, vector<64x160xbf16>
    %c0_1 = arith.constant 0 : index
    %c0_2 = arith.constant 0 : index
    %1 = vector.load %arg2[%c0_1, %c0_2] : memref<160x512xbf16, #tpu.memory_space<vmem>>, vector<160x512xbf16>
    %cst = arith.constant dense<0.000000e+00> : vector<64x512xf32>
    %2 = tpu.matmul %0, %1, %cst {dimension_numbers = #tpu.dot_dimension_numbers<[1], [0], [0], [1], [0, 0, 1, 1], [], []>} : vector<64x160xbf16>, vector<160x512xbf16>, vector<64x512xf32> -> vector<64x512xf32>
    %c0_i32 = arith.constant 0 : i32
    %3 = arith.cmpi eq, %arg0, %c0_i32 : i32
    %4 = arith.extui %3 : i1 to i32
    %c0_i32_3 = arith.constant 0 : i32
    %5 = arith.cmpi ne, %4, %c0_i32_3 : i32
    scf.if %5 {
      %c0_i32_5 = arith.constant 0 : i32
      %9 = arith.cmpi eq, %arg1, %c0_i32_5 : i32
      %10 = arith.extui %9 : i1 to i32
      %c0_i32_6 = arith.constant 0 : i32
      %11 = arith.cmpi ne, %10, %c0_i32_6 : i32
      scf.if %11 {
        %cst_19 = arith.constant 0.000000e+00 : f32
        %26 = vector.broadcast %cst_19 : f32 to vector<64x1xf32>
        %c0_20 = arith.constant 0 : index
        %c0_21 = arith.constant 0 : index
        %27 = vector.load %arg7[%c0_20, %c0_21] : memref<64x1xf32, #tpu.memory_space<vmem>>, vector<64x1xf32>
        tpu.vector_store %arg7[%c0_20, %c0_21], %26 {strides = array<i32>} : memref<64x1xf32, #tpu.memory_space<vmem>>, vector<64x1xf32>,
        %cst_22 = arith.constant 0.000000e+00 : f32
        %28 = vector.broadcast %cst_22 : f32 to vector<64x1xf32>
        %c0_23 = arith.constant 0 : index
        %c0_24 = arith.constant 0 : index
        %29 = vector.load %arg8[%c0_23, %c0_24] : memref<64x1xf32, #tpu.memory_space<vmem>>, vector<64x1xf32>
        tpu.vector_store %arg8[%c0_23, %c0_24], %28 {strides = array<i32>} : memref<64x1xf32, #tpu.memory_space<vmem>>, vector<64x1xf32>,
      } else {
      }
      %c0_7 = arith.constant 0 : index
      %c0_8 = arith.constant 0 : index
      %12 = vector.load %arg7[%c0_7, %c0_8] : memref<64x1xf32, #tpu.memory_space<vmem>>, vector<64x1xf32>
      %cst_9 = arith.constant dense<0.000000e+00> : vector<64xf32>
      %13 = vector.multi_reduction <add>, %2, %cst_9 [1] : vector<64x512xf32> to vector<64xf32>
      %14 = vector.shape_cast %13 : vector<64xf32> to vector<64x1xf32>
      %15 = arith.addf %12, %14 : vector<64x1xf32>
      %c0_10 = arith.constant 0 : index
      %c0_11 = arith.constant 0 : index
      %16 = vector.load %arg7[%c0_10, %c0_11] : memref<64x1xf32, #tpu.memory_space<vmem>>, vector<64x1xf32>
      tpu.vector_store %arg7[%c0_10, %c0_11], %15 {strides = array<i32>} : memref<64x1xf32, #tpu.memory_space<vmem>>, vector<64x1xf32>,
      %c0_12 = arith.constant 0 : index
      %c0_13 = arith.constant 0 : index
      %17 = vector.load %arg8[%c0_12, %c0_13] : memref<64x1xf32, #tpu.memory_space<vmem>>, vector<64x1xf32>
      %18 = arith.mulf %2, %2 : vector<64x512xf32>
      %cst_14 = arith.constant dense<0.000000e+00> : vector<64xf32>
      %19 = vector.multi_reduction <add>, %18, %cst_14 [1] : vector<64x512xf32> to vector<64xf32>
      %20 = vector.shape_cast %19 : vector<64xf32> to vector<64x1xf32>
      %21 = arith.addf %17, %20 : vector<64x1xf32>
      %c0_15 = arith.constant 0 : index
      %c0_16 = arith.constant 0 : index
      %22 = vector.load %arg8[%c0_15, %c0_16] : memref<64x1xf32, #tpu.memory_space<vmem>>, vector<64x1xf32>
      tpu.vector_store %arg8[%c0_15, %c0_16], %21 {strides = array<i32>} : memref<64x1xf32, #tpu.memory_space<vmem>>, vector<64x1xf32>,
      %c0_i32_17 = arith.constant 0 : i32
      %23 = arith.cmpi eq, %arg1, %c0_i32_17 : i32
      %24 = arith.extui %23 : i1 to i32
      %c0_i32_18 = arith.constant 0 : i32
      %25 = arith.cmpi ne, %24, %c0_i32_18 : i32
      scf.if %25 {
        %c0_19 = arith.constant 0 : index
        %c0_20 = arith.constant 0 : index
        %26 = vector.load %arg7[%c0_19, %c0_20] : memref<64x1xf32, #tpu.memory_space<vmem>>, vector<64x1xf32>
        %cst_21 = arith.constant 0.001953125 : f32
        %27 = vector.broadcast %cst_21 : f32 to vector<64x1xf32>
        %28 = arith.mulf %26, %27 : vector<64x1xf32>
        %c0_22 = arith.constant 0 : index
        %c0_23 = arith.constant 0 : index
        %29 = vector.load %arg8[%c0_22, %c0_23] : memref<64x1xf32, #tpu.memory_space<vmem>>, vector<64x1xf32>
        %cst_24 = arith.constant 0.001953125 : f32
        %30 = vector.broadcast %cst_24 : f32 to vector<64x1xf32>
        %31 = arith.mulf %29, %30 : vector<64x1xf32>
        %32 = arith.mulf %28, %28 : vector<64x1xf32>
        %33 = arith.subf %31, %32 : vector<64x1xf32>
        %c0_25 = arith.constant 0 : index
        %c0_26 = arith.constant 0 : index
        %34 = vector.load %arg4[%c0_25, %c0_26] : memref<64x1xf32, #tpu.memory_space<vmem>>, vector<64x1xf32>
        %cst_27 = arith.constant 9.99999974E-6 : f32
        %35 = vector.broadcast %cst_27 : f32 to vector<64x1xf32>
        %36 = arith.addf %33, %35 : vector<64x1xf32>
        %37 = math.rsqrt %36 : vector<64x1xf32>
        %38 = arith.mulf %34, %37 : vector<64x1xf32>
        %c0_28 = arith.constant 0 : index
        %c0_29 = arith.constant 0 : index
        %39 = vector.load %arg9[%c0_28, %c0_29] : memref<64x1xf32, #tpu.memory_space<vmem>>, vector<64x1xf32>
        tpu.vector_store %arg9[%c0_28, %c0_29], %38 {strides = array<i32>} : memref<64x1xf32, #tpu.memory_space<vmem>>, vector<64x1xf32>,
        %c0_30 = arith.constant 0 : index
        %c0_31 = arith.constant 0 : index
        %40 = vector.load %arg5[%c0_30, %c0_31] : memref<64x1xf32, #tpu.memory_space<vmem>>, vector<64x1xf32>
        %41 = arith.mulf %28, %38 : vector<64x1xf32>
        %42 = arith.subf %40, %41 : vector<64x1xf32>
        %c0_32 = arith.constant 0 : index
        %c0_33 = arith.constant 0 : index
        %43 = vector.load %arg10[%c0_32, %c0_33] : memref<64x1xf32, #tpu.memory_space<vmem>>, vector<64x1xf32>
        tpu.vector_store %arg10[%c0_32, %c0_33], %42 {strides = array<i32>} : memref<64x1xf32, #tpu.memory_space<vmem>>, vector<64x1xf32>,
      } else {
      }
    } else {
    }
    %c1_i32 = arith.constant 1 : i32
    %6 = arith.cmpi eq, %arg0, %c1_i32 : i32
    %7 = arith.extui %6 : i1 to i32
    %c0_i32_4 = arith.constant 0 : i32
    %8 = arith.cmpi ne, %7, %c0_i32_4 : i32
    scf.if %8 {
      %c0_5 = arith.constant 0 : index
      %c0_6 = arith.constant 0 : index
      %9 = vector.load %arg9[%c0_5, %c0_6] : memref<64x1xf32, #tpu.memory_space<vmem>>, vector<64x1xf32>
      %10 = vector.broadcast %9 : vector<64x1xf32> to vector<64x512xf32>
      %11 = arith.mulf %2, %10 : vector<64x512xf32>
      %c0_7 = arith.constant 0 : index
      %c0_8 = arith.constant 0 : index
      %12 = vector.load %arg10[%c0_7, %c0_8] : memref<64x1xf32, #tpu.memory_space<vmem>>, vector<64x1xf32>
      %13 = vector.broadcast %12 : vector<64x1xf32> to vector<64x512xf32>
      %14 = arith.addf %11, %13 : vector<64x512xf32>
      %cst_9 = arith.constant 0.000000e+00 : f32
      %15 = vector.broadcast %cst_9 : f32 to vector<64x512xf32>
      %16 = arith.maximumf %14, %15 : vector<64x512xf32>
      %17 = arith.truncf %16 : vector<64x512xf32> to vector<64x512xbf16>
      %c0_10 = arith.constant 0 : index
      %c0_11 = arith.constant 0 : index
      %18 = vector.load %arg6[%c0_10, %c0_11] : memref<64x512xbf16, #tpu.memory_space<vmem>>, vector<64x512xbf16>
      tpu.vector_store %arg6[%c0_10, %c0_11], %17 {strides = array<i32>} : memref<64x512xbf16, #tpu.memory_space<vmem>>, vector<64x512xbf16>,
    } else {
    }
    return
  }
  func.func @transform_0(%arg0: i32, %arg1: i32) -> (i32, i32) {
    %c0_i32 = arith.constant 0 : i32
    %c0_i32_0 = arith.constant 0 : i32
    return %c0_i32, %arg1 : i32, i32
  }
  func.func @transform_1(%arg0: i32, %arg1: i32) -> (i32, i32) {
    %c0_i32 = arith.constant 0 : i32
    %c0_i32_0 = arith.constant 0 : i32
    %c0_i32_1 = arith.constant 0 : i32
    return %c0_i32, %c0_i32_0 : i32, i32
  }
  func.func @transform_2(%arg0: i32, %arg1: i32) -> (i32, i32) {
    %c0_i32 = arith.constant 0 : i32
    %c0_i32_0 = arith.constant 0 : i32
    %c0_i32_1 = arith.constant 0 : i32
    return %c0_i32, %c0_i32_0 : i32, i32
  }
  func.func @transform_3(%arg0: i32, %arg1: i32) -> (i32, i32) {
    %c0_i32 = arith.constant 0 : i32
    %c0_i32_0 = arith.constant 0 : i32
    %c0_i32_1 = arith.constant 0 : i32
    return %c0_i32, %c0_i32_0 : i32, i32
  }
  func.func @transform_4(%arg0: i32, %arg1: i32) -> (i32, i32) {
    %0 = arith.muli %arg0, %arg1 : i32
    %c0_i32 = arith.constant 0 : i32
    %c0_i32_0 = arith.constant 0 : i32
    return %c0_i32, %0 : i32, i32
  }
}

module attributes {stable_mosaic.version = 11 : i64} {
  func.func @_mil_head_kernel(%arg0: i32, %arg1: memref<1x4x64xf32, #tpu.memory_space<vmem>>, %arg2: memref<64x1000xf32, #tpu.memory_space<vmem>>, %arg3: memref<1x1000xf32, #tpu.memory_space<vmem>>, %arg4: memref<2x1000x128xf32, #tpu.memory_space<vmem>>, %arg5: memref<2x1x128xf32, #tpu.memory_space<vmem>>, %arg6: memref<2x1x128xf32, #tpu.memory_space<vmem>>, %arg7: memref<2x1x1xf32, #tpu.memory_space<vmem>>, %arg8: memref<2x1x1000xf32, #tpu.memory_space<vmem>>, %arg9: memref<2x1x1xf32, #tpu.memory_space<vmem>>, %arg10: memref<1x2x1x1xf32, #tpu.memory_space<vmem>>, %arg11: memref<1x2x4x1xf32, #tpu.memory_space<vmem>>) attributes {dimension_semantics = [#tpu.dimension_semantics<parallel>], iteration_bounds = array<i64: 2>, scalar_prefetch = 0 : i64, scratch_operands = 0 : i64, tpu.core_type = #tpu.core_type<tc>, window_params = [{transform_indices = @transform_0, window_bounds = array<i64: 1, 4, 64>}, {pipeline_mode = #tpu.pipeline_mode<synchronous>, transform_indices = @transform_1, window_bounds = array<i64: 64, 1000>}, {pipeline_mode = #tpu.pipeline_mode<synchronous>, transform_indices = @transform_2, window_bounds = array<i64: 1, 1000>}, {pipeline_mode = #tpu.pipeline_mode<synchronous>, transform_indices = @transform_3, window_bounds = array<i64: 2, 1000, 128>}, {pipeline_mode = #tpu.pipeline_mode<synchronous>, transform_indices = @transform_4, window_bounds = array<i64: 2, 1, 128>}, {pipeline_mode = #tpu.pipeline_mode<synchronous>, transform_indices = @transform_5, window_bounds = array<i64: 2, 1, 128>}, {pipeline_mode = #tpu.pipeline_mode<synchronous>, transform_indices = @transform_6, window_bounds = array<i64: 2, 1, 1>}, {pipeline_mode = #tpu.pipeline_mode<synchronous>, transform_indices = @transform_7, window_bounds = array<i64: 2, 1, 1000>}, {pipeline_mode = #tpu.pipeline_mode<synchronous>, transform_indices = @transform_8, window_bounds = array<i64: 2, 1, 1>}, {transform_indices = @transform_9, window_bounds = array<i64: 1, 2, 1, 1>}, {transform_indices = @transform_10, window_bounds = array<i64: 1, 2, 4, 1>}]} {
    %c0 = arith.constant 0 : index
    %c0_0 = arith.constant 0 : index
    %c0_1 = arith.constant 0 : index
    %0 = vector.load %arg1[%c0, %c0_0, %c0_1] : memref<1x4x64xf32, #tpu.memory_space<vmem>>, vector<1x4x64xf32>
    %1 = vector.shape_cast %0 : vector<1x4x64xf32> to vector<4x64xf32>
    %c0_2 = arith.constant 0 : index
    %c0_3 = arith.constant 0 : index
    %2 = vector.load %arg2[%c0_2, %c0_3] : memref<64x1000xf32, #tpu.memory_space<vmem>>, vector<64x1000xf32>
    %cst = arith.constant dense<0.000000e+00> : vector<4x1000xf32>
    %3 = tpu.matmul %1, %2, %cst {dimension_numbers = #tpu.dot_dimension_numbers<[1], [0], [0], [1], [0, 0, 1, 1], [], []>} : vector<4x64xf32>, vector<64x1000xf32>, vector<4x1000xf32> -> vector<4x1000xf32>
    %c0_4 = arith.constant 0 : index
    %c0_5 = arith.constant 0 : index
    %4 = vector.load %arg3[%c0_4, %c0_5] : memref<1x1000xf32, #tpu.memory_space<vmem>>, vector<1x1000xf32>
    %5 = vector.broadcast %4 : vector<1x1000xf32> to vector<4x1000xf32>
    %6 = arith.addf %3, %5 : vector<4x1000xf32>
    %c0_6 = arith.constant 0 : index
    %c0_7 = arith.constant 0 : index
    %c0_8 = arith.constant 0 : index
    %7 = vector.load %arg4[%c0_6, %c0_7, %c0_8] : memref<2x1000x128xf32, #tpu.memory_space<vmem>>, vector<1x1000x128xf32>
    %8 = vector.shape_cast %7 : vector<1x1000x128xf32> to vector<1000x128xf32>
    %cst_9 = arith.constant dense<0.000000e+00> : vector<4x128xf32>
    %9 = tpu.matmul %6, %8, %cst_9 {dimension_numbers = #tpu.dot_dimension_numbers<[1], [0], [0], [1], [0, 0, 1, 1], [], []>} : vector<4x1000xf32>, vector<1000x128xf32>, vector<4x128xf32> -> vector<4x128xf32>
    %c0_10 = arith.constant 0 : index
    %c0_11 = arith.constant 0 : index
    %c0_12 = arith.constant 0 : index
    %10 = vector.load %arg5[%c0_10, %c0_11, %c0_12] : memref<2x1x128xf32, #tpu.memory_space<vmem>>, vector<1x1x128xf32>
    %11 = vector.shape_cast %10 : vector<1x1x128xf32> to vector<1x128xf32>
    %12 = vector.broadcast %11 : vector<1x128xf32> to vector<4x128xf32>
    %13 = arith.addf %9, %12 : vector<4x128xf32>
    %14 = math.tanh %13 : vector<4x128xf32>
    %c0_13 = arith.constant 0 : index
    %c0_14 = arith.constant 0 : index
    %c0_15 = arith.constant 0 : index
    %15 = vector.load %arg6[%c0_13, %c0_14, %c0_15] : memref<2x1x128xf32, #tpu.memory_space<vmem>>, vector<1x1x128xf32>
    %16 = vector.shape_cast %15 : vector<1x1x128xf32> to vector<1x128xf32>
    %17 = vector.broadcast %16 : vector<1x128xf32> to vector<4x128xf32>
    %18 = arith.mulf %14, %17 : vector<4x128xf32>
    %cst_16 = arith.constant dense<0.000000e+00> : vector<4xf32>
    %19 = vector.multi_reduction <add>, %18, %cst_16 [1] : vector<4x128xf32> to vector<4xf32>
    %20 = vector.shape_cast %19 : vector<4xf32> to vector<4x1xf32>
    %c0_17 = arith.constant 0 : index
    %c0_18 = arith.constant 0 : index
    %c0_19 = arith.constant 0 : index
    %21 = vector.load %arg7[%c0_17, %c0_18, %c0_19] : memref<2x1x1xf32, #tpu.memory_space<vmem>>, vector<1x1x1xf32>
    %22 = vector.shape_cast %21 : vector<1x1x1xf32> to vector<1x1xf32>
    %23 = vector.broadcast %22 : vector<1x1xf32> to vector<4x1xf32>
    %24 = arith.addf %20, %23 : vector<4x1xf32>
    %cst_20 = arith.constant dense<0xFF800000> : vector<1xf32>
    %25 = vector.multi_reduction <maximumf>, %24, %cst_20 [0] : vector<4x1xf32> to vector<1xf32>
    %26 = vector.shape_cast %25 : vector<1xf32> to vector<1x1xf32>
    %27 = vector.broadcast %26 : vector<1x1xf32> to vector<4x1xf32>
    %28 = arith.subf %24, %27 : vector<4x1xf32>
    %29 = math.exp %28 : vector<4x1xf32>
    %cst_21 = arith.constant dense<0.000000e+00> : vector<1xf32>
    %30 = vector.multi_reduction <add>, %29, %cst_21 [0] : vector<4x1xf32> to vector<1xf32>
    %31 = vector.shape_cast %30 : vector<1xf32> to vector<1x1xf32>
    %32 = vector.broadcast %31 : vector<1x1xf32> to vector<4x1xf32>
    %33 = arith.divf %29, %32 : vector<4x1xf32>
    %34 = vector.broadcast %33 : vector<4x1xf32> to vector<4x1000xf32>
    %35 = arith.mulf %34, %6 : vector<4x1000xf32>
    %cst_22 = arith.constant dense<0.000000e+00> : vector<1000xf32>
    %36 = vector.multi_reduction <add>, %35, %cst_22 [0] : vector<4x1000xf32> to vector<1000xf32>
    %37 = vector.shape_cast %36 : vector<1000xf32> to vector<1x1000xf32>
    %c0_23 = arith.constant 0 : index
    %c0_24 = arith.constant 0 : index
    %c0_25 = arith.constant 0 : index
    %38 = vector.load %arg8[%c0_23, %c0_24, %c0_25] : memref<2x1x1000xf32, #tpu.memory_space<vmem>>, vector<1x1x1000xf32>
    %39 = vector.shape_cast %38 : vector<1x1x1000xf32> to vector<1x1000xf32>
    %40 = arith.mulf %37, %39 : vector<1x1000xf32>
    %cst_26 = arith.constant dense<0.000000e+00> : vector<1xf32>
    %41 = vector.multi_reduction <add>, %40, %cst_26 [1] : vector<1x1000xf32> to vector<1xf32>
    %42 = vector.shape_cast %41 : vector<1xf32> to vector<1x1xf32>
    %c0_27 = arith.constant 0 : index
    %c0_28 = arith.constant 0 : index
    %c0_29 = arith.constant 0 : index
    %43 = vector.load %arg9[%c0_27, %c0_28, %c0_29] : memref<2x1x1xf32, #tpu.memory_space<vmem>>, vector<1x1x1xf32>
    %44 = vector.shape_cast %43 : vector<1x1x1xf32> to vector<1x1xf32>
    %45 = arith.addf %42, %44 : vector<1x1xf32>
    %c0_30 = arith.constant 0 : index
    %c0_31 = arith.constant 0 : index
    %c0_32 = arith.constant 0 : index
    %c0_33 = arith.constant 0 : index
    %46 = vector.load %arg10[%c0_30, %c0_31, %c0_32, %c0_33] : memref<1x2x1x1xf32, #tpu.memory_space<vmem>>, vector<1x1x1x1xf32>
    %47 = vector.shape_cast %46 : vector<1x1x1x1xf32> to vector<1x1xf32>
    %48 = vector.shape_cast %45 : vector<1x1xf32> to vector<1x1x1x1xf32>
    tpu.vector_store %arg10[%c0_30, %c0_31, %c0_32, %c0_33], %48 {strides = array<i32>} : memref<1x2x1x1xf32, #tpu.memory_space<vmem>>, vector<1x1x1x1xf32>,
    %c0_34 = arith.constant 0 : index
    %c0_35 = arith.constant 0 : index
    %c0_36 = arith.constant 0 : index
    %c0_37 = arith.constant 0 : index
    %49 = vector.load %arg11[%c0_34, %c0_35, %c0_36, %c0_37] : memref<1x2x4x1xf32, #tpu.memory_space<vmem>>, vector<1x1x4x1xf32>
    %50 = vector.shape_cast %49 : vector<1x1x4x1xf32> to vector<4x1xf32>
    %51 = vector.shape_cast %33 : vector<4x1xf32> to vector<1x1x4x1xf32>
    tpu.vector_store %arg11[%c0_34, %c0_35, %c0_36, %c0_37], %51 {strides = array<i32>} : memref<1x2x4x1xf32, #tpu.memory_space<vmem>>, vector<1x1x4x1xf32>,
    %c1 = arith.constant 1 : index
    %c0_38 = arith.constant 0 : index
    %c0_39 = arith.constant 0 : index
    %52 = vector.load %arg4[%c1, %c0_38, %c0_39] : memref<2x1000x128xf32, #tpu.memory_space<vmem>>, vector<1x1000x128xf32>
    %53 = vector.shape_cast %52 : vector<1x1000x128xf32> to vector<1000x128xf32>
    %cst_40 = arith.constant dense<0.000000e+00> : vector<4x128xf32>
    %54 = tpu.matmul %6, %53, %cst_40 {dimension_numbers = #tpu.dot_dimension_numbers<[1], [0], [0], [1], [0, 0, 1, 1], [], []>} : vector<4x1000xf32>, vector<1000x128xf32>, vector<4x128xf32> -> vector<4x128xf32>
    %c1_41 = arith.constant 1 : index
    %c0_42 = arith.constant 0 : index
    %c0_43 = arith.constant 0 : index
    %55 = vector.load %arg5[%c1_41, %c0_42, %c0_43] : memref<2x1x128xf32, #tpu.memory_space<vmem>>, vector<1x1x128xf32>
    %56 = vector.shape_cast %55 : vector<1x1x128xf32> to vector<1x128xf32>
    %57 = vector.broadcast %56 : vector<1x128xf32> to vector<4x128xf32>
    %58 = arith.addf %54, %57 : vector<4x128xf32>
    %59 = math.tanh %58 : vector<4x128xf32>
    %c1_44 = arith.constant 1 : index
    %c0_45 = arith.constant 0 : index
    %c0_46 = arith.constant 0 : index
    %60 = vector.load %arg6[%c1_44, %c0_45, %c0_46] : memref<2x1x128xf32, #tpu.memory_space<vmem>>, vector<1x1x128xf32>
    %61 = vector.shape_cast %60 : vector<1x1x128xf32> to vector<1x128xf32>
    %62 = vector.broadcast %61 : vector<1x128xf32> to vector<4x128xf32>
    %63 = arith.mulf %59, %62 : vector<4x128xf32>
    %cst_47 = arith.constant dense<0.000000e+00> : vector<4xf32>
    %64 = vector.multi_reduction <add>, %63, %cst_47 [1] : vector<4x128xf32> to vector<4xf32>
    %65 = vector.shape_cast %64 : vector<4xf32> to vector<4x1xf32>
    %c1_48 = arith.constant 1 : index
    %c0_49 = arith.constant 0 : index
    %c0_50 = arith.constant 0 : index
    %66 = vector.load %arg7[%c1_48, %c0_49, %c0_50] : memref<2x1x1xf32, #tpu.memory_space<vmem>>, vector<1x1x1xf32>
    %67 = vector.shape_cast %66 : vector<1x1x1xf32> to vector<1x1xf32>
    %68 = vector.broadcast %67 : vector<1x1xf32> to vector<4x1xf32>
    %69 = arith.addf %65, %68 : vector<4x1xf32>
    %cst_51 = arith.constant dense<0xFF800000> : vector<1xf32>
    %70 = vector.multi_reduction <maximumf>, %69, %cst_51 [0] : vector<4x1xf32> to vector<1xf32>
    %71 = vector.shape_cast %70 : vector<1xf32> to vector<1x1xf32>
    %72 = vector.broadcast %71 : vector<1x1xf32> to vector<4x1xf32>
    %73 = arith.subf %69, %72 : vector<4x1xf32>
    %74 = math.exp %73 : vector<4x1xf32>
    %cst_52 = arith.constant dense<0.000000e+00> : vector<1xf32>
    %75 = vector.multi_reduction <add>, %74, %cst_52 [0] : vector<4x1xf32> to vector<1xf32>
    %76 = vector.shape_cast %75 : vector<1xf32> to vector<1x1xf32>
    %77 = vector.broadcast %76 : vector<1x1xf32> to vector<4x1xf32>
    %78 = arith.divf %74, %77 : vector<4x1xf32>
    %79 = vector.broadcast %78 : vector<4x1xf32> to vector<4x1000xf32>
    %80 = arith.mulf %79, %6 : vector<4x1000xf32>
    %cst_53 = arith.constant dense<0.000000e+00> : vector<1000xf32>
    %81 = vector.multi_reduction <add>, %80, %cst_53 [0] : vector<4x1000xf32> to vector<1000xf32>
    %82 = vector.shape_cast %81 : vector<1000xf32> to vector<1x1000xf32>
    %c1_54 = arith.constant 1 : index
    %c0_55 = arith.constant 0 : index
    %c0_56 = arith.constant 0 : index
    %83 = vector.load %arg8[%c1_54, %c0_55, %c0_56] : memref<2x1x1000xf32, #tpu.memory_space<vmem>>, vector<1x1x1000xf32>
    %84 = vector.shape_cast %83 : vector<1x1x1000xf32> to vector<1x1000xf32>
    %85 = arith.mulf %82, %84 : vector<1x1000xf32>
    %cst_57 = arith.constant dense<0.000000e+00> : vector<1xf32>
    %86 = vector.multi_reduction <add>, %85, %cst_57 [1] : vector<1x1000xf32> to vector<1xf32>
    %87 = vector.shape_cast %86 : vector<1xf32> to vector<1x1xf32>
    %c1_58 = arith.constant 1 : index
    %c0_59 = arith.constant 0 : index
    %c0_60 = arith.constant 0 : index
    %88 = vector.load %arg9[%c1_58, %c0_59, %c0_60] : memref<2x1x1xf32, #tpu.memory_space<vmem>>, vector<1x1x1xf32>
    %89 = vector.shape_cast %88 : vector<1x1x1xf32> to vector<1x1xf32>
    %90 = arith.addf %87, %89 : vector<1x1xf32>
    %c0_61 = arith.constant 0 : index
    %c1_62 = arith.constant 1 : index
    %c0_63 = arith.constant 0 : index
    %c0_64 = arith.constant 0 : index
    %91 = vector.load %arg10[%c0_61, %c1_62, %c0_63, %c0_64] : memref<1x2x1x1xf32, #tpu.memory_space<vmem>>, vector<1x1x1x1xf32>
    %92 = vector.shape_cast %91 : vector<1x1x1x1xf32> to vector<1x1xf32>
    %93 = vector.shape_cast %90 : vector<1x1xf32> to vector<1x1x1x1xf32>
    tpu.vector_store %arg10[%c0_61, %c1_62, %c0_63, %c0_64], %93 {strides = array<i32>} : memref<1x2x1x1xf32, #tpu.memory_space<vmem>>, vector<1x1x1x1xf32>,
    %c0_65 = arith.constant 0 : index
    %c1_66 = arith.constant 1 : index
    %c0_67 = arith.constant 0 : index
    %c0_68 = arith.constant 0 : index
    %94 = vector.load %arg11[%c0_65, %c1_66, %c0_67, %c0_68] : memref<1x2x4x1xf32, #tpu.memory_space<vmem>>, vector<1x1x4x1xf32>
    %95 = vector.shape_cast %94 : vector<1x1x4x1xf32> to vector<4x1xf32>
    %96 = vector.shape_cast %78 : vector<4x1xf32> to vector<1x1x4x1xf32>
    tpu.vector_store %arg11[%c0_65, %c1_66, %c0_67, %c0_68], %96 {strides = array<i32>} : memref<1x2x4x1xf32, #tpu.memory_space<vmem>>, vector<1x1x4x1xf32>,
    return
  }
  func.func @transform_0(%arg0: i32) -> (i32, i32, i32) {
    %c0_i32 = arith.constant 0 : i32
    %c0_i32_0 = arith.constant 0 : i32
    %c0_i32_1 = arith.constant 0 : i32
    return %arg0, %c0_i32, %c0_i32_0 : i32, i32, i32
  }
  func.func @transform_1(%arg0: i32) -> (i32, i32) {
    %c0_i32 = arith.constant 0 : i32
    %c0_i32_0 = arith.constant 0 : i32
    %c0_i32_1 = arith.constant 0 : i32
    return %c0_i32, %c0_i32_0 : i32, i32
  }
  func.func @transform_2(%arg0: i32) -> (i32, i32) {
    %c0_i32 = arith.constant 0 : i32
    %c0_i32_0 = arith.constant 0 : i32
    %c0_i32_1 = arith.constant 0 : i32
    return %c0_i32, %c0_i32_0 : i32, i32
  }
  func.func @transform_3(%arg0: i32) -> (i32, i32, i32) {
    %c0_i32 = arith.constant 0 : i32
    %c0_i32_0 = arith.constant 0 : i32
    %c0_i32_1 = arith.constant 0 : i32
    %c0_i32_2 = arith.constant 0 : i32
    return %c0_i32, %c0_i32_0, %c0_i32_1 : i32, i32, i32
  }
  func.func @transform_4(%arg0: i32) -> (i32, i32, i32) {
    %c0_i32 = arith.constant 0 : i32
    %c0_i32_0 = arith.constant 0 : i32
    %c0_i32_1 = arith.constant 0 : i32
    %c0_i32_2 = arith.constant 0 : i32
    return %c0_i32, %c0_i32_0, %c0_i32_1 : i32, i32, i32
  }
  func.func @transform_5(%arg0: i32) -> (i32, i32, i32) {
    %c0_i32 = arith.constant 0 : i32
    %c0_i32_0 = arith.constant 0 : i32
    %c0_i32_1 = arith.constant 0 : i32
    %c0_i32_2 = arith.constant 0 : i32
    return %c0_i32, %c0_i32_0, %c0_i32_1 : i32, i32, i32
  }
  func.func @transform_6(%arg0: i32) -> (i32, i32, i32) {
    %c0_i32 = arith.constant 0 : i32
    %c0_i32_0 = arith.constant 0 : i32
    %c0_i32_1 = arith.constant 0 : i32
    %c0_i32_2 = arith.constant 0 : i32
    return %c0_i32, %c0_i32_0, %c0_i32_1 : i32, i32, i32
  }
  func.func @transform_7(%arg0: i32) -> (i32, i32, i32) {
    %c0_i32 = arith.constant 0 : i32
    %c0_i32_0 = arith.constant 0 : i32
    %c0_i32_1 = arith.constant 0 : i32
    %c0_i32_2 = arith.constant 0 : i32
    return %c0_i32, %c0_i32_0, %c0_i32_1 : i32, i32, i32
  }
  func.func @transform_8(%arg0: i32) -> (i32, i32, i32) {
    %c0_i32 = arith.constant 0 : i32
    %c0_i32_0 = arith.constant 0 : i32
    %c0_i32_1 = arith.constant 0 : i32
    %c0_i32_2 = arith.constant 0 : i32
    return %c0_i32, %c0_i32_0, %c0_i32_1 : i32, i32, i32
  }
  func.func @transform_9(%arg0: i32) -> (i32, i32, i32, i32) {
    %c0_i32 = arith.constant 0 : i32
    %c0_i32_0 = arith.constant 0 : i32
    %c0_i32_1 = arith.constant 0 : i32
    %c0_i32_2 = arith.constant 0 : i32
    return %arg0, %c0_i32, %c0_i32_0, %c0_i32_1 : i32, i32, i32, i32
  }
  func.func @transform_10(%arg0: i32) -> (i32, i32, i32, i32) {
    %c0_i32 = arith.constant 0 : i32
    %c0_i32_0 = arith.constant 0 : i32
    %c0_i32_1 = arith.constant 0 : i32
    %c0_i32_2 = arith.constant 0 : i32
    return %arg0, %c0_i32, %c0_i32_0, %c0_i32_1 : i32, i32, i32, i32
  }
}

</mosaic_0001>

<llo_original>
// kernel: attention_slide_forward.2
$region0: #{attention_slide_forward.2}
  #allocation0 [shape = 'u32[]', space=smem, size = 0x4, offset = 0x4, fixed_abs, tag = 'smem constant byte address 0x4 - core index']
  #allocation1 [shape = 'u32[144,128]{1,0:T(1,128)}', space=vmem, size = 0x12000, scoped, tag = 'internal scratch']
  #allocation2 [shape = 'f32[64,1]{1,0:T(8,128)}', space=vmem, size = 0x8000, scoped, tag = 'scratch operand']
  #allocation3 [shape = 'f32[64,1]{1,0:T(8,128)}', space=vmem, size = 0x8000, scoped, tag = 'scratch operand']
  #allocation4 [shape = 'f32[64,1]{1,0:T(8,128)}', space=vmem, size = 0x8000, scoped, tag = 'scratch operand']
  #allocation5 [shape = 'f32[64,1]{1,0:T(8,128)}', space=vmem, size = 0x8000, scoped, tag = 'scratch operand']
  %s0 = inlined_call_operand.vmem [shape: bf16[160,512], index: 0, kind: input, shape index: {}]
  %s1 = inlined_call_operand.vmem [shape: bf16[64,160], index: 1, kind: input, shape index: {}]
  %s2 = inlined_call_operand.vmem [shape: f32[64,1], index: 2, kind: input, shape index: {}]
  %s3 = inlined_call_operand.vmem [shape: f32[64,1], index: 3, kind: input, shape index: {}]
  %s4 = inlined_call_operand.vmem [shape: bf16[64,512], index: 4, kind: output, shape index: {}]
  %s5 = sld [smem:[#allocation0]]
  $region65: #{attention_slide_forward.2} parent=0
    _
  %s7 = ssub.s32 1, %s5
  %s8 = scalar_select 0, %s7, %s5
  loop: start=0, step=1, limit=4
  $region2: #{attention_slide_forward.2} parent=0 // loop_pre_header
    _
  $region3: #{attention_slide_forward.2} parent=0 // loop_header
    %s10 = sphi 0, %s14
    %p11 = scmp.ge.s32.totalorder %s10, 4
    %s17 = sphi 0, %s29
    %s18 = sphi 0, %s25
    %s19 = sphi 0, %s17
    %s20 = sphi 0, %s18
    %s21 = sphi 0, %s19
    %s22 = sphi 0, %s20
    %s32 = sphi 0, %s34
    %s35 = sphi 0, %s32
    %s36 = sphi 0, %s35
    %s52 = sphi 0, %s36
    %s56 = sphi 0, %s56
    %s58 = sphi 0, %s56
    %s59 = sphi 0, %s58
    %s73 = sphi 0, %s59
    %s77 = sphi 0, %s77
    %s79 = sphi 0, %s77
    %s80 = sphi 0, %s79
    %s94 = sphi 0, %s80
    %s98 = sphi 0, %s98
    %s100 = sphi 0, %s98
    %s101 = sphi 0, %s100
    %s115 = sphi 0, %s101
    %s123 = sphi 0, %s125
    %s126 = sphi 0, %s123
    %s127 = sphi 0, %s126
    %s143 = sphi 0, %s127
  $region4: #{attention_slide_forward.2} parent=0 // loop_header_branch
    %13 = sbr.rel (%p11) target = $region8
  $region5: #{attention_slide_forward.2} parent=0 // loop_body
    %s15 = ssub.s32 %s10, 1
    %s16 = ssub.s32 %s10, 2
    %s23 = sadd.s32 1, %s18
    %p24 = scmp.ge.s32.totalorder %s23, 1
    %s25 = scalar_select %p24, 0, %s23
    %s26 = sadd.s32 1, %s17
    %s27 = scalar_select %p24, %s26, %s17
    %p28 = scmp.ge.s32.totalorder %s27, 2
    %s29 = scalar_select %p28, 0, %s27
    %s30 = ssub.s32 %s18, %s25
    %p31 = scmp.eq.s32.totalorder %s30, 0
    %s33 = sadd.s32 %s32, 1
    %s34 = scalar_select %p31, %s32, %s33
    %p37 = pneg %p31
    %p38 = scmp.eq.s32.totalorder %s10, 1
    %p39 = por %p37, %p38
    %p40 = scmp.ne.s32.totalorder %s32, %s35
    %p41 = scmp.eq.s32.totalorder %s10, 0
    %p42 = por %p40, %p41
    %p43 = scmp.ne.s32.totalorder %s32, %s35
    %p44 = scmp.eq.s32.totalorder %s15, 1
    %p45 = por %p43, %p44
    %p46 = scmp.ne.s32.totalorder %s35, %s36
    %p47 = scmp.eq.s32.totalorder %s15, 0
    %p48 = por %p46, %p47
    %p49 = scmp.ne.s32.totalorder %s35, %s36
    %p50 = scmp.eq.s32.totalorder %s16, 1
    %p51 = por %p49, %p50
    %p53 = scmp.ne.s32.totalorder %s36, %s52
    %p54 = scmp.eq.s32.totalorder %s16, 0
    %p55 = por %p53, %p54
    %s57 = sadd.s32 %s56, 1
    %p60 = scmp.eq.s32.totalorder %s10, 1
    %p61 = scmp.ne.s32.totalorder %s56, %s58
    %p62 = scmp.eq.s32.totalorder %s10, 0
    %p63 = por %p61, %p62
    %p64 = scmp.ne.s32.totalorder %s56, %s58
    %p65 = scmp.eq.s32.totalorder %s15, 1
    %p66 = por %p64, %p65
    %p67 = scmp.ne.s32.totalorder %s58, %s59
    %p68 = scmp.eq.s32.totalorder %s15, 0
    %p69 = por %p67, %p68
    %p70 = scmp.ne.s32.totalorder %s58, %s59
    %p71 = scmp.eq.s32.totalorder %s16, 1
    %p72 = por %p70, %p71
    %p74 = scmp.ne.s32.totalorder %s59, %s73
    %p75 = scmp.eq.s32.totalorder %s16, 0
    %p76 = por %p74, %p75
    %s78 = sadd.s32 %s77, 1
    %p81 = scmp.eq.s32.totalorder %s10, 1
    %p82 = scmp.ne.s32.totalorder %s77, %s79
    %p83 = scmp.eq.s32.totalorder %s10, 0
    %p84 = por %p82, %p83
    %p85 = scmp.ne.s32.totalorder %s77, %s79
    %p86 = scmp.eq.s32.totalorder %s15, 1
    %p87 = por %p85, %p86
    %p88 = scmp.ne.s32.totalorder %s79, %s80
    %p89 = scmp.eq.s32.totalorder %s15, 0
    %p90 = por %p88, %p89
    %p91 = scmp.ne.s32.totalorder %s79, %s80
    %p92 = scmp.eq.s32.totalorder %s16, 1
    %p93 = por %p91, %p92
    %p95 = scmp.ne.s32.totalorder %s80, %s94
    %p96 = scmp.eq.s32.totalorder %s16, 0
    %p97 = por %p95, %p96
    %s99 = sadd.s32 %s98, 1
    %p102 = scmp.eq.s32.totalorder %s10, 1
    %p103 = scmp.ne.s32.totalorder %s98, %s100
    %p104 = scmp.eq.s32.totalorder %s10, 0
    %p105 = por %p103, %p104
    %p106 = scmp.ne.s32.totalorder %s98, %s100
    %p107 = scmp.eq.s32.totalorder %s15, 1
    %p108 = por %p106, %p107
    %p109 = scmp.ne.s32.totalorder %s100, %s101
    %p110 = scmp.eq.s32.totalorder %s15, 0
    %p111 = por %p109, %p110
    %p112 = scmp.ne.s32.totalorder %s100, %s101
    %p113 = scmp.eq.s32.totalorder %s16, 1
    %p114 = por %p112, %p113
    %p116 = scmp.ne.s32.totalorder %s101, %s115
    %p117 = scmp.eq.s32.totalorder %s16, 0
    %p118 = por %p116, %p117
    %s119 = smul.u32 %s17, %s18
    %s120 = smul.u32 %s29, %s25
    %s121 = ssub.s32 %s119, %s120
    %p122 = scmp.eq.s32.totalorder %s121, 0
    %s124 = sadd.s32 %s123, 1
    %s125 = scalar_select %p122, %s123, %s124
    %p128 = pneg %p122
    %p129 = scmp.eq.s32.totalorder %s10, 1
    %p130 = por %p128, %p129
    %p131 = scmp.ne.s32.totalorder %s123, %s126
    %p132 = scmp.eq.s32.totalorder %s10, 0
    %p133 = por %p131, %p132
    %p134 = scmp.ne.s32.totalorder %s123, %s126
    %p135 = scmp.eq.s32.totalorder %s15, 1
    %p136 = por %p134, %p135
    %p137 = scmp.ne.s32.totalorder %s126, %s127
    %p138 = scmp.eq.s32.totalorder %s15, 0
    %p139 = por %p137, %p138
    %p140 = scmp.ne.s32.totalorder %s126, %s127
    %p141 = scmp.eq.s32.totalorder %s16, 1
    %p142 = por %p140, %p141
    %p144 = scmp.ne.s32.totalorder %s127, %s143
    %p145 = scmp.eq.s32.totalorder %s16, 0
    %p146 = por %p144, %p145
    %p147 = scmp.le.s32.totalorder 1, %s10
    %p148 = scmp.lt.s32.totalorder %s10, 3
    %p149 = pnand %p147, %p148
    %p150 = pneg %p149
    // Predicated region
    $region9: #{attention_slide_forward.2} parent=5 // pred_check
      _
    $region10: #{attention_slide_forward.2} parent=5 // pred_check_branch
      %152 = sbr.rel (%p149) target = $region12
    $region11: #{attention_slide_forward.2} parent=5 // pred_region
      %s153 = ssub.s32 %s10, 1
      // Predicated region
      $region13: #{attention_slide_forward.2} parent=11 // pred_check
        %p154 = pneg %p48
      $region14: #{attention_slide_forward.2} parent=11 // pred_check_branch
        %156 = sbr.rel (%p154) target = $region16
      $region15: #{attention_slide_forward.2} parent=11 // pred_region
        %s157 = smul.u32 4, %s20
        %p158 = scmp.lt.s32.totalorder %s157, 3
        %s159 = scalar_select %p158, %s157, 3
        %s160 = smul.addr %s159, 4
        %s161 = scalar_lea.vmem %s0, %s160
        %s162 = smul.u32 4, %s20
      $region16: #{attention_slide_forward.2} parent=11 // pred_fallthru
        _
      // Predicated region
      $region17: #{attention_slide_forward.2} parent=11 // pred_check
        %p163 = pneg %p69
      $region18: #{attention_slide_forward.2} parent=11 // pred_check_branch
        %165 = sbr.rel (%p163) target = $region20
      $region19: #{attention_slide_forward.2} parent=11 // pred_region
        _
      $region20: #{attention_slide_forward.2} parent=11 // pred_fallthru
        _
      // Predicated region
      $region21: #{attention_slide_forward.2} parent=11 // pred_check
        %p166 = pneg %p90
      $region22: #{attention_slide_forward.2} parent=11 // pred_check_branch
        %168 = sbr.rel (%p166) target = $region24
      $region23: #{attention_slide_forward.2} parent=11 // pred_region
        _
      $region24: #{attention_slide_forward.2} parent=11 // pred_fallthru
        _
      // Predicated region
      $region25: #{attention_slide_forward.2} parent=11 // pred_check
        %p169 = pneg %p111
      $region26: #{attention_slide_forward.2} parent=11 // pred_check_branch
        %171 = sbr.rel (%p169) target = $region28
      $region27: #{attention_slide_forward.2} parent=11 // pred_region
        _
      $region28: #{attention_slide_forward.2} parent=11 // pred_fallthru
        _
    $region12: #{attention_slide_forward.2} parent=5 // pred_fallthru
      _
    %p172 = scmp.lt.s32.totalorder %s10, 2
    // Predicated region
    $region29: #{attention_slide_forward.2} parent=5 // pred_check
      %p173 = pneg %p172
    $region30: #{attention_slide_forward.2} parent=5 // pred_check_branch
      %175 = sbr.rel (%p173) target = $region32
    $region31: #{attention_slide_forward.2} parent=5 // pred_region
      _
    $region32: #{attention_slide_forward.2} parent=5 // pred_fallthru
      _
    %p176 = scmp.le.s32.totalorder 1, %s10
    %p177 = scmp.lt.s32.totalorder %s10, 3
    %p178 = pnand %p176, %p177
    %p179 = pneg %p178
    // Predicated region
    $region33: #{attention_slide_forward.2} parent=5 // pred_check
      _
    $region34: #{attention_slide_forward.2} parent=5 // pred_check_branch
      %181 = sbr.rel (%p178) target = $region36
    $region35: #{attention_slide_forward.2} parent=5 // pred_region
      %s182 = ssub.s32 %s10, 1
      %s183 = smul.u32 4, %s20
      %p184 = scmp.lt.s32.totalorder %s183, 3
      %s185 = scalar_select %p184, %s183, 3
      %s186 = smul.addr %s185, 4
      %s187 = scalar_lea.vmem %s0, %s186
      %p188 = pneg %p48
      %p189 = pneg %p45
      %p190 = pneg %p69
      %p191 = pneg %p66
      %p192 = pneg %p90
      %p193 = pneg %p87
      %p194 = pneg %p111
      %p195 = pneg %p108
      %p196 = pneg %p139
      %p197 = pneg %p136
      %s198 = smul.u32 %s19, %s20
      %s199 = smul.u32 4, %s198
      %p200 = scmp.lt.s32.totalorder %s199, 3
      %s201 = scalar_select %p200, %s199, 3
      %s202 = smul.addr %s201, 4
      %s203 = scalar_lea.vmem %s4, %s202
      %s204 = smul.u32 4, %s20
      %p205 = scmp.lt.s32.totalorder %s204, 3
      %s206 = scalar_select %p205, %s204, 3
      %s207 = smul.addr %s206, 4
      %s208 = scalar_lea.vmem %s0, %s207
      %s209 = smul.u32 4, %s20
      %s210 = smul.u32 %s19, %s20
      %s211 = smul.u32 4, %s210
      %p212 = scmp.lt.s32.totalorder %s211, 3
      %s213 = scalar_select %p212, %s211, 3
      %s214 = smul.addr %s213, 4
      %s215 = scalar_lea.vmem %s4, %s214
      %s216 = smul.u32 %s19, %s20
      %s217 = smul.u32 4, %s216
      %v219 = vld [vmem:[%s1] sm:$0xff]
      %v220 = vld [vmem:[%s1 + $0x8] sm:$0xff]
      %v221 = vld [vmem:[%s1 + $0x10] sm:$0xff]
      %v222 = vld [vmem:[%s1 + $0x18] sm:$0xff]
      %v223 = vld [vmem:[%s1 + $0x20] sm:$0xff]
      %v224 = vld [vmem:[%s1 + $0x28] sm:$0xff]
      %v225 = vld [vmem:[%s1 + $0x30] sm:$0xff]
      %v226 = vld [vmem:[%s1 + $0x38] sm:$0xff]
      %v227 = vld [vmem:[%s208] sm:$0xff]
      %v228 = vld [vmem:[%s208 + $0x8] sm:$0xff]
      %v229 = vld [vmem:[%s208 + $0x10] sm:$0xff]
      %v230 = vld [vmem:[%s208 + $0x18] sm:$0xff]
      %v231 = vld [vmem:[%s208 + $0x20] sm:$0xff]
      %v232 = vld [vmem:[%s208 + $0x28] sm:$0xff]
      %v233 = vld [vmem:[%s208 + $0x30] sm:$0xff]
      %v234 = vld [vmem:[%s208 + $0x38] sm:$0xff]
      %v235 = vld [vmem:[%s208 + $0x40] sm:$0xff]
      %v236 = vld [vmem:[%s208 + $0x48] sm:$0xff]
      %v237 = vld [vmem:[%s208 + $0x50] sm:$0xff]
      %v238 = vld [vmem:[%s208 + $0x58] sm:$0xff]
      %v239 = vld [vmem:[%s208 + $0x60] sm:$0xff]
      %v240 = vld [vmem:[%s208 + $0x68] sm:$0xff]
      %v241 = vld [vmem:[%s208 + $0x70] sm:$0xff]
      %v242 = vld [vmem:[%s208 + $0x78] sm:$0xff]
      %v243 = vld [vmem:[%s208 + $0x80] sm:$0xff]
      %v244 = vld [vmem:[%s208 + $0x88] sm:$0xff]
      %v245 = vld [vmem:[%s208 + $0x90] sm:$0xff]
      %v246 = vld [vmem:[%s208 + $0x98] sm:$0xff]
      %v247 = vld [vmem:[%s208 + $0xa0] sm:$0xff]
      %v248 = vld [vmem:[%s208 + $0xa8] sm:$0xff]
      %v249 = vld [vmem:[%s208 + $0xb0] sm:$0xff]
      %v250 = vld [vmem:[%s208 + $0xb8] sm:$0xff]
      %v251 = vld [vmem:[%s208 + $0xc0] sm:$0xff]
      %v252 = vld [vmem:[%s208 + $0xc8] sm:$0xff]
      %v253 = vld [vmem:[%s208 + $0xd0] sm:$0xff]
      %v254 = vld [vmem:[%s208 + $0xd8] sm:$0xff]
      %v255 = vld [vmem:[%s208 + $0xe0] sm:$0xff]
      %v256 = vld [vmem:[%s208 + $0xe8] sm:$0xff]
      %v257 = vld [vmem:[%s208 + $0xf0] sm:$0xff]
      %v258 = vld [vmem:[%s208 + $0xf8] sm:$0xff]
      %v259 = vld [vmem:[%s208 + $0x100] sm:$0xff]
      %v260 = vld [vmem:[%s208 + $0x108] sm:$0xff]
      %v261 = vld [vmem:[%s208 + $0x110] sm:$0xff]
      %v262 = vld [vmem:[%s208 + $0x118] sm:$0xff]
      %v263 = vld [vmem:[%s208 + $0x120] sm:$0xff]
      %v264 = vld [vmem:[%s208 + $0x128] sm:$0xff]
      %v265 = vld [vmem:[%s208 + $0x130] sm:$0xff]
      %v266 = vld [vmem:[%s208 + $0x138] sm:$0xff]
      %v275 = vunpack.c.l.b16 %v219
      %v276 = vunpack.c.h.b16 %v219
      %v277 = vunpack.c.l.b16 %v220
      %v278 = vunpack.c.h.b16 %v220
      %v279 = vunpack.c.l.b16 %v221
      %v280 = vunpack.c.h.b16 %v221
      %v281 = vunpack.c.l.b16 %v222
      %v282 = vunpack.c.h.b16 %v222
      %v283 = vunpack.c.l.b16 %v223
      %v284 = vunpack.c.h.b16 %v223
      %v285 = vunpack.c.l.b16 %v224
      %v286 = vunpack.c.h.b16 %v224
      %v287 = vunpack.c.l.b16 %v225
      %v288 = vunpack.c.h.b16 %v225
      %v289 = vunpack.c.l.b16 %v226
      %v290 = vunpack.c.h.b16 %v226
      %v291 = vpack.c.b16 %v277, %v275
      %v292 = vpack.c.b16 %v278, %v276
      %v293 = vpack.c.b16 %v281, %v279
      %v294 = vpack.c.b16 %v282, %v280
      %v295 = vpack.c.b16 %v285, %v283
      %v296 = vpack.c.b16 %v286, %v284
      %v297 = vpack.c.b16 %v289, %v287
      %v298 = vpack.c.b16 %v290, %v288
      %v343 = vunpack.c.l.b16 %v227
      %v344 = vunpack.c.h.b16 %v227
      %v345 = vunpack.c.l.b16 %v228
      %v346 = vunpack.c.h.b16 %v228
      %v347 = vunpack.c.l.b16 %v229
      %v348 = vunpack.c.h.b16 %v229
      %v349 = vunpack.c.l.b16 %v230
      %v350 = vunpack.c.h.b16 %v230
      %v351 = vunpack.c.l.b16 %v231
      %v352 = vunpack.c.h.b16 %v231
      %v353 = vunpack.c.l.b16 %v232
      %v354 = vunpack.c.h.b16 %v232
      %v355 = vunpack.c.l.b16 %v233
      %v356 = vunpack.c.h.b16 %v233
      %v357 = vunpack.c.l.b16 %v234
      %v358 = vunpack.c.h.b16 %v234
      %v359 = vunpack.c.l.b16 %v235
      %v360 = vunpack.c.h.b16 %v235
      %v361 = vunpack.c.l.b16 %v236
      %v362 = vunpack.c.h.b16 %v236
      %v363 = vunpack.c.l.b16 %v237
      %v364 = vunpack.c.h.b16 %v237
      %v365 = vunpack.c.l.b16 %v238
      %v366 = vunpack.c.h.b16 %v238
      %v367 = vunpack.c.l.b16 %v239
      %v368 = vunpack.c.h.b16 %v239
      %v369 = vunpack.c.l.b16 %v240
      %v370 = vunpack.c.h.b16 %v240
      %v371 = vunpack.c.l.b16 %v241
      %v372 = vunpack.c.h.b16 %v241
      %v373 = vunpack.c.l.b16 %v242
      %v374 = vunpack.c.h.b16 %v242
      %v375 = vunpack.c.l.b16 %v243
      %v376 = vunpack.c.h.b16 %v243
      %v377 = vunpack.c.l.b16 %v244
      %v378 = vunpack.c.h.b16 %v244
      %v379 = vunpack.c.l.b16 %v245
      %v380 = vunpack.c.h.b16 %v245
      %v381 = vunpack.c.l.b16 %v246
      %v382 = vunpack.c.h.b16 %v246
      %v383 = vunpack.c.l.b16 %v247
      %v384 = vunpack.c.h.b16 %v247
      %v385 = vunpack.c.l.b16 %v248
      %v386 = vunpack.c.h.b16 %v248
      %v387 = vunpack.c.l.b16 %v249
      %v388 = vunpack.c.h.b16 %v249
      %v389 = vunpack.c.l.b16 %v250
      %v390 = vunpack.c.h.b16 %v250
      %v391 = vunpack.c.l.b16 %v251
      %v392 = vunpack.c.h.b16 %v251
      %v393 = vunpack.c.l.b16 %v252
      %v394 = vunpack.c.h.b16 %v252
      %v395 = vunpack.c.l.b16 %v253
      %v396 = vunpack.c.h.b16 %v253
      %v397 = vunpack.c.l.b16 %v254
      %v398 = vunpack.c.h.b16 %v254
      %v399 = vunpack.c.l.b16 %v255
      %v400 = vunpack.c.h.b16 %v255
      %v401 = vunpack.c.l.b16 %v256
      %v402 = vunpack.c.h.b16 %v256
      %v403 = vunpack.c.l.b16 %v257
      %v404 = vunpack.c.h.b16 %v257
      %v405 = vunpack.c.l.b16 %v258
      %v406 = vunpack.c.h.b16 %v258
      %v407 = vunpack.c.l.b16 %v259
      %v408 = vunpack.c.h.b16 %v259
      %v409 = vunpack.c.l.b16 %v260
      %v410 = vunpack.c.h.b16 %v260
      %v411 = vunpack.c.l.b16 %v261
      %v412 = vunpack.c.h.b16 %v261
      %v413 = vunpack.c.l.b16 %v262
      %v414 = vunpack.c.h.b16 %v262
      %v415 = vunpack.c.l.b16 %v263
      %v416 = vunpack.c.h.b16 %v263
      %v417 = vunpack.c.l.b16 %v264
      %v418 = vunpack.c.h.b16 %v264
      %v419 = vunpack.c.l.b16 %v265
      %v420 = vunpack.c.h.b16 %v265
      %v421 = vunpack.c.l.b16 %v266
      %v422 = vunpack.c.h.b16 %v266
      %v423 = vpack.c.b16 %v347, %v343
      %v424 = vpack.c.b16 %v348, %v344
      %v425 = vpack.c.b16 %v349, %v345
      %v426 = vpack.c.b16 %v350, %v346
      %v427 = vpack.c.b16 %v355, %v351
      %v428 = vpack.c.b16 %v356, %v352
      %v429 = vpack.c.b16 %v357, %v353
      %v430 = vpack.c.b16 %v358, %v354
      %v431 = vpack.c.b16 %v363, %v359
      %v432 = vpack.c.b16 %v364, %v360
      %v433 = vpack.c.b16 %v365, %v361
      %v434 = vpack.c.b16 %v366, %v362
      %v435 = vpack.c.b16 %v371, %v367
      %v436 = vpack.c.b16 %v372, %v368
      %v437 = vpack.c.b16 %v373, %v369
      %v438 = vpack.c.b16 %v374, %v370
      %v439 = vpack.c.b16 %v379, %v375
      %v440 = vpack.c.b16 %v380, %v376
      %v441 = vpack.c.b16 %v381, %v377
      %v442 = vpack.c.b16 %v382, %v378
      %v443 = vpack.c.b16 %v387, %v383
      %v444 = vpack.c.b16 %v388, %v384
      %v445 = vpack.c.b16 %v389, %v385
      %v446 = vpack.c.b16 %v390, %v386
      %v447 = vpack.c.b16 %v395, %v391
      %v448 = vpack.c.b16 %v396, %v392
      %v449 = vpack.c.b16 %v397, %v393
      %v450 = vpack.c.b16 %v398, %v394
      %v451 = vpack.c.b16 %v403, %v399
      %v452 = vpack.c.b16 %v404, %v400
      %v453 = vpack.c.b16 %v405, %v401
      %v454 = vpack.c.b16 %v406, %v402
      %v455 = vpack.c.b16 %v411, %v407
      %v456 = vpack.c.b16 %v412, %v408
      %v457 = vpack.c.b16 %v413, %v409
      %v458 = vpack.c.b16 %v414, %v410
      %v459 = vpack.c.b16 %v419, %v415
      %v460 = vpack.c.b16 %v420, %v416
      %v461 = vpack.c.b16 %v421, %v417
      %v462 = vpack.c.b16 %v422, %v418
      %vm503 = vcmask 261120
      %v505 = vsel %vm503, %v292, 0
      %v508 = vsel %vm503, %v294, 0
      %v511 = vsel %vm503, %v296, 0
      %v514 = vsel %vm503, %v298, 0
      %516 = vmatprep.subr.bf16.mxu0 %v452
      %517 = vmatpush1.bf16.msra.mxu0 %v451
      %518 = vmatprep.subr.bf16.mxu0 %v448
      %519 = vmatpush1.bf16.msra.mxu0 %v447
      %520 = vmatprep.subr.bf16.mxu0 %v444
      %521 = vmatpush1.bf16.msra.mxu0 %v443
      %522 = vmatprep.subr.bf16.mxu0 %v440
      %523 = vmatpush1.bf16.msra.mxu0 %v439
      %524 = vmatprep.subr.bf16.mxu0 %v436
      %525 = vmatpush1.bf16.msra.mxu0 %v435
      %526 = vmatprep.subr.bf16.mxu0 %v432
      %527 = vmatpush1.bf16.msra.mxu0 %v431
      %528 = vmatprep.subr.bf16.mxu0 %v428
      %529 = vmatpush1.bf16.msra.mxu0 %v427
      %530 = vmatprep.subr.bf16.mxu0 %v424
      %531 = vmatpush1.bf16.msra.mxu0 %v423
      %532 = vmatprep.subr.bf16.mxu0 0
      %533 = vmatpush2.bf16.msra.mxu0 0
      %534 = vmatprep.subr.bf16.mxu0 0
      %535 = vmatpush2.bf16.msra.mxu0 0
      %536 = vmatprep.subr.bf16.mxu0 0
      %537 = vmatpush2.bf16.msra.mxu0 0
      %538 = vmatprep.subr.bf16.mxu0 0
      %539 = vmatpush2.bf16.msra.mxu0 0
      %540 = vmatprep.subr.bf16.mxu0 0
      %541 = vmatpush2.bf16.msra.mxu0 0
      %542 = vmatprep.subr.bf16.mxu0 0
      %543 = vmatpush2.bf16.msra.mxu0 0
      %544 = vmatprep.subr.bf16.mxu0 %v460
      %545 = vmatpush2.bf16.msra.mxu0 %v459
      %546 = vmatprep.subr.bf16.mxu0 %v456
      %547 = vmatpush2.bf16.msra.mxu0 %v455
      %548 = vmatprep.mubr.bf16.mxu0 %v505
      %549 = vmatmul.mubr.bf16.gmra.mxu0 %v291
      %v550 = vpop.f32.mrf.mxu0
      %v551 = vadd.f32 0.0, %v550
      %v552 = vpop.f32.mrf.mxu0
      %v553 = vadd.f32 0.0, %v552
      %v554 = vpop.f32.mrf.mxu0
      %v555 = vadd.f32 0.0, %v554
      %v556 = vpop.f32.mrf.mxu0
      %v557 = vadd.f32 0.0, %v556
      %558 = vmatprep.mubr.bf16.mxu0 %v508
      %559 = vmatmul.mubr.bf16.gmra.mxu0 %v293
      %v560 = vpop.f32.mrf.mxu0
      %v561 = vadd.f32 0.0, %v560
      %v562 = vpop.f32.mrf.mxu0
      %v563 = vadd.f32 0.0, %v562
      %v564 = vpop.f32.mrf.mxu0
      %v565 = vadd.f32 0.0, %v564
      %v566 = vpop.f32.mrf.mxu0
      %v567 = vadd.f32 0.0, %v566
      %568 = vmatprep.mubr.bf16.mxu0 %v511
      %569 = vmatmul.mubr.bf16.gmra.mxu0 %v295
      %v570 = vpop.f32.mrf.mxu0
      %v571 = vadd.f32 0.0, %v570
      %v572 = vpop.f32.mrf.mxu0
      %v573 = vadd.f32 0.0, %v572
      %v574 = vpop.f32.mrf.mxu0
      %v575 = vadd.f32 0.0, %v574
      %v576 = vpop.f32.mrf.mxu0
      %v577 = vadd.f32 0.0, %v576
      %578 = vmatprep.mubr.bf16.mxu0 %v514
      %579 = vmatmul.mubr.bf16.gmra.mxu0 %v297
      %v580 = vpop.f32.mrf.mxu0
      %v581 = vadd.f32 0.0, %v580
      %v582 = vpop.f32.mrf.mxu0
      %v583 = vadd.f32 0.0, %v582
      %v584 = vpop.f32.mrf.mxu0
      %v585 = vadd.f32 0.0, %v584
      %v586 = vpop.f32.mrf.mxu0
      %v587 = vadd.f32 0.0, %v586
      %588 = vdwg.mxu0
      %589 = vmatprep.subr.bf16.mxu0 %v454
      %590 = vmatpush1.bf16.msra.mxu0 %v453
      %591 = vmatprep.subr.bf16.mxu0 %v450
      %592 = vmatpush1.bf16.msra.mxu0 %v449
      %593 = vmatprep.subr.bf16.mxu0 %v446
      %594 = vmatpush1.bf16.msra.mxu0 %v445
      %595 = vmatprep.subr.bf16.mxu0 %v442
      %596 = vmatpush1.bf16.msra.mxu0 %v441
      %597 = vmatprep.subr.bf16.mxu0 %v438
      %598 = vmatpush1.bf16.msra.mxu0 %v437
      %599 = vmatprep.subr.bf16.mxu0 %v434
      %600 = vmatpush1.bf16.msra.mxu0 %v433
      %601 = vmatprep.subr.bf16.mxu0 %v430
      %602 = vmatpush1.bf16.msra.mxu0 %v429
      %603 = vmatprep.subr.bf16.mxu0 %v426
      %604 = vmatpush1.bf16.msra.mxu0 %v425
      %605 = vmatprep.subr.bf16.mxu0 0
      %606 = vmatpush2.bf16.msra.mxu0 0
      %607 = vmatprep.subr.bf16.mxu0 0
      %608 = vmatpush2.bf16.msra.mxu0 0
      %609 = vmatprep.subr.bf16.mxu0 0
      %610 = vmatpush2.bf16.msra.mxu0 0
      %611 = vmatprep.subr.bf16.mxu0 0
      %612 = vmatpush2.bf16.msra.mxu0 0
      %613 = vmatprep.subr.bf16.mxu0 0
      %614 = vmatpush2.bf16.msra.mxu0 0
      %615 = vmatprep.subr.bf16.mxu0 0
      %616 = vmatpush2.bf16.msra.mxu0 0
      %617 = vmatprep.subr.bf16.mxu0 %v462
      %618 = vmatpush2.bf16.msra.mxu0 %v461
      %619 = vmatprep.subr.bf16.mxu0 %v458
      %620 = vmatpush2.bf16.msra.mxu0 %v457
      %621 = vmatprep.mubr.bf16.mxu0 %v505
      %622 = vmatmul.mubr.bf16.gmra.mxu0 %v291
      %v623 = vpop.f32.mrf.mxu0
      %v624 = vadd.f32 0.0, %v623
      %v625 = vpop.f32.mrf.mxu0
      %v626 = vadd.f32 0.0, %v625
      %v627 = vpop.f32.mrf.mxu0
      %v628 = vadd.f32 0.0, %v627
      %v629 = vpop.f32.mrf.mxu0
      %v630 = vadd.f32 0.0, %v629
      %631 = vmatprep.mubr.bf16.mxu0 %v508
      %632 = vmatmul.mubr.bf16.gmra.mxu0 %v293
      %v633 = vpop.f32.mrf.mxu0
      %v634 = vadd.f32 0.0, %v633
      %v635 = vpop.f32.mrf.mxu0
      %v636 = vadd.f32 0.0, %v635
      %v637 = vpop.f32.mrf.mxu0
      %v638 = vadd.f32 0.0, %v637
      %v639 = vpop.f32.mrf.mxu0
      %v640 = vadd.f32 0.0, %v639
      %641 = vmatprep.mubr.bf16.mxu0 %v511
      %642 = vmatmul.mubr.bf16.gmra.mxu0 %v295
      %v643 = vpop.f32.mrf.mxu0
      %v644 = vadd.f32 0.0, %v643
      %v645 = vpop.f32.mrf.mxu0
      %v646 = vadd.f32 0.0, %v645
      %v647 = vpop.f32.mrf.mxu0
      %v648 = vadd.f32 0.0, %v647
      %v649 = vpop.f32.mrf.mxu0
      %v650 = vadd.f32 0.0, %v649
      %651 = vmatprep.mubr.bf16.mxu0 %v514
      %652 = vmatmul.mubr.bf16.gmra.mxu0 %v297
      %v653 = vpop.f32.mrf.mxu0
      %v654 = vadd.f32 0.0, %v653
      %v655 = vpop.f32.mrf.mxu0
      %v656 = vadd.f32 0.0, %v655
      %v657 = vpop.f32.mrf.mxu0
      %v658 = vadd.f32 0.0, %v657
      %v659 = vpop.f32.mrf.mxu0
      %v660 = vadd.f32 0.0, %v659
      %661 = vdwg.mxu0
      %p662 = scmp.eq.s32.totalorder %s19, 0
      // Predicated region
      $region37: #{attention_slide_forward.2} parent=35 // pred_check
        %p663 = pneg %p662
      $region38: #{attention_slide_forward.2} parent=35 // pred_check_branch
        %665 = sbr.rel (%p663) target = $region40
      $region39: #{attention_slide_forward.2} parent=35 // pred_region
        %p666 = scmp.eq.s32.totalorder %s20, 0
        // Predicated region
        $region41: #{attention_slide_forward.2} parent=39 // pred_check
          %p667 = pneg %p666
        $region42: #{attention_slide_forward.2} parent=39 // pred_check_branch
          %669 = sbr.rel (%p667) target = $region44
        $region43: #{attention_slide_forward.2} parent=39 // pred_region
          %vm670 = vcmask 7168
          %671 = vst.msk [vmem:[#allocation2] sm:$0xff] %vm670, 0.0
          %672 = vst.msk [vmem:[#allocation2 + $0x8] sm:$0xff] %vm670, 0.0
          %673 = vst.msk [vmem:[#allocation2 + $0x10] sm:$0xff] %vm670, 0.0
          %674 = vst.msk [vmem:[#allocation2 + $0x18] sm:$0xff] %vm670, 0.0
          %675 = vst.msk [vmem:[#allocation2 + $0x20] sm:$0xff] %vm670, 0.0
          %676 = vst.msk [vmem:[#allocation2 + $0x28] sm:$0xff] %vm670, 0.0
          %677 = vst.msk [vmem:[#allocation2 + $0x30] sm:$0xff] %vm670, 0.0
          %678 = vst.msk [vmem:[#allocation2 + $0x38] sm:$0xff] %vm670, 0.0
          %679 = vst.msk [vmem:[#allocation3] sm:$0xff] %vm670, 0.0
          %680 = vst.msk [vmem:[#allocation3 + $0x8] sm:$0xff] %vm670, 0.0
          %681 = vst.msk [vmem:[#allocation3 + $0x10] sm:$0xff] %vm670, 0.0
          %682 = vst.msk [vmem:[#allocation3 + $0x18] sm:$0xff] %vm670, 0.0
          %683 = vst.msk [vmem:[#allocation3 + $0x20] sm:$0xff] %vm670, 0.0
          %684 = vst.msk [vmem:[#allocation3 + $0x28] sm:$0xff] %vm670, 0.0
          %685 = vst.msk [vmem:[#allocation3 + $0x30] sm:$0xff] %vm670, 0.0
          %686 = vst.msk [vmem:[#allocation3 + $0x38] sm:$0xff] %vm670, 0.0
        $region44: #{attention_slide_forward.2} parent=39 // pred_fallthru
          _
        %v687 = vld [vmem:[#allocation2] sm:$0xff]
        %v688 = vld [vmem:[#allocation2 + $0x8] sm:$0xff]
        %v689 = vld [vmem:[#allocation2 + $0x10] sm:$0xff]
        %v690 = vld [vmem:[#allocation2 + $0x18] sm:$0xff]
        %v691 = vld [vmem:[#allocation2 + $0x20] sm:$0xff]
        %v692 = vld [vmem:[#allocation2 + $0x28] sm:$0xff]
        %v693 = vld [vmem:[#allocation2 + $0x30] sm:$0xff]
        %v694 = vld [vmem:[#allocation2 + $0x38] sm:$0xff]
        %v695 = vadd.f32 %v551, %v553
        %v696 = vadd.f32 %v695, %v624
        %v697 = vadd.f32 %v696, %v626
        %698 = vadd.xlane.f32.xlu0 %v697
        %v699 = vpop.xlane.xlu0 %698
        %v700 = vadd.f32 %v555, %v557
        %v701 = vadd.f32 %v700, %v628
        %v702 = vadd.f32 %v701, %v630
        %703 = vadd.xlane.f32.xlu0 %v702
        %v704 = vpop.xlane.xlu0 %703
        %v705 = vadd.f32 %v561, %v563
        %v706 = vadd.f32 %v705, %v634
        %v707 = vadd.f32 %v706, %v636
        %708 = vadd.xlane.f32.xlu0 %v707
        %v709 = vpop.xlane.xlu0 %708
        %v710 = vadd.f32 %v565, %v567
        %v711 = vadd.f32 %v710, %v638
        %v712 = vadd.f32 %v711, %v640
        %713 = vadd.xlane.f32.xlu0 %v712
        %v714 = vpop.xlane.xlu0 %713
        %v715 = vadd.f32 %v571, %v573
        %v716 = vadd.f32 %v715, %v644
        %v717 = vadd.f32 %v716, %v646
        %718 = vadd.xlane.f32.xlu0 %v717
        %v719 = vpop.xlane.xlu0 %718
        %v720 = vadd.f32 %v575, %v577
        %v721 = vadd.f32 %v720, %v648
        %v722 = vadd.f32 %v721, %v650
        %723 = vadd.xlane.f32.xlu0 %v722
        %v724 = vpop.xlane.xlu0 %723
        %v725 = vadd.f32 %v581, %v583
        %v726 = vadd.f32 %v725, %v654
        %v727 = vadd.f32 %v726, %v656
        %728 = vadd.xlane.f32.xlu0 %v727
        %v729 = vpop.xlane.xlu0 %728
        %v730 = vadd.f32 %v585, %v587
        %v731 = vadd.f32 %v730, %v658
        %v732 = vadd.f32 %v731, %v660
        %733 = vadd.xlane.f32.xlu0 %v732
        %v734 = vpop.xlane.xlu0 %733
        %v735 = vadd.f32 %v687, %v699
        %v736 = vadd.f32 %v688, %v704
        %v737 = vadd.f32 %v689, %v709
        %v738 = vadd.f32 %v690, %v714
        %v739 = vadd.f32 %v691, %v719
        %v740 = vadd.f32 %v692, %v724
        %v741 = vadd.f32 %v693, %v729
        %v742 = vadd.f32 %v694, %v734
        %vm743 = vcmask 7168
        %744 = vst.msk [vmem:[#allocation2] sm:$0xff] %vm743, %v735
        %745 = vst.msk [vmem:[#allocation2 + $0x8] sm:$0xff] %vm743, %v736
        %746 = vst.msk [vmem:[#allocation2 + $0x10] sm:$0xff] %vm743, %v737
        %747 = vst.msk [vmem:[#allocation2 + $0x18] sm:$0xff] %vm743, %v738
        %748 = vst.msk [vmem:[#allocation2 + $0x20] sm:$0xff] %vm743, %v739
        %749 = vst.msk [vmem:[#allocation2 + $0x28] sm:$0xff] %vm743, %v740
        %750 = vst.msk [vmem:[#allocation2 + $0x30] sm:$0xff] %vm743, %v741
        %751 = vst.msk [vmem:[#allocation2 + $0x38] sm:$0xff] %vm743, %v742
        %v752 = vld [vmem:[#allocation3] sm:$0xff]
        %v753 = vld [vmem:[#allocation3 + $0x8] sm:$0xff]
        %v754 = vld [vmem:[#allocation3 + $0x10] sm:$0xff]
        %v755 = vld [vmem:[#allocation3 + $0x18] sm:$0xff]
        %v756 = vld [vmem:[#allocation3 + $0x20] sm:$0xff]
        %v757 = vld [vmem:[#allocation3 + $0x28] sm:$0xff]
        %v758 = vld [vmem:[#allocation3 + $0x30] sm:$0xff]
        %v759 = vld [vmem:[#allocation3 + $0x38] sm:$0xff]
        %v760 = vmul.f32 %v551, %v551
        %v761 = vmul.f32 %v553, %v553
        %v762 = vmul.f32 %v624, %v624
        %v763 = vmul.f32 %v626, %v626
        %v764 = vmul.f32 %v555, %v555
        %v765 = vmul.f32 %v557, %v557
        %v766 = vmul.f32 %v628, %v628
        %v767 = vmul.f32 %v630, %v630
        %v768 = vmul.f32 %v561, %v561
        %v769 = vmul.f32 %v563, %v563
        %v770 = vmul.f32 %v634, %v634
        %v771 = vmul.f32 %v636, %v636
        %v772 = vmul.f32 %v565, %v565
        %v773 = vmul.f32 %v567, %v567
        %v774 = vmul.f32 %v638, %v638
        %v775 = vmul.f32 %v640, %v640
        %v776 = vmul.f32 %v571, %v571
        %v777 = vmul.f32 %v573, %v573
        %v778 = vmul.f32 %v644, %v644
        %v779 = vmul.f32 %v646, %v646
        %v780 = vmul.f32 %v575, %v575
        %v781 = vmul.f32 %v577, %v577
        %v782 = vmul.f32 %v648, %v648
        %v783 = vmul.f32 %v650, %v650
        %v784 = vmul.f32 %v581, %v581
        %v785 = vmul.f32 %v583, %v583
        %v786 = vmul.f32 %v654, %v654
        %v787 = vmul.f32 %v656, %v656
        %v788 = vmul.f32 %v585, %v585
        %v789 = vmul.f32 %v587, %v587
        %v790 = vmul.f32 %v658, %v658
        %v791 = vmul.f32 %v660, %v660
        %v792 = vadd.f32 %v760, %v761
        %v793 = vadd.f32 %v792, %v762
        %v794 = vadd.f32 %v793, %v763
        %795 = vadd.xlane.f32.xlu0 %v794
        %v796 = vpop.xlane.xlu0 %795
        %v797 = vadd.f32 %v764, %v765
        %v798 = vadd.f32 %v797, %v766
        %v799 = vadd.f32 %v798, %v767
        %800 = vadd.xlane.f32.xlu0 %v799
        %v801 = vpop.xlane.xlu0 %800
        %v802 = vadd.f32 %v768, %v769
        %v803 = vadd.f32 %v802, %v770
        %v804 = vadd.f32 %v803, %v771
        %805 = vadd.xlane.f32.xlu0 %v804
        %v806 = vpop.xlane.xlu0 %805
        %v807 = vadd.f32 %v772, %v773
        %v808 = vadd.f32 %v807, %v774
        %v809 = vadd.f32 %v808, %v775
        %810 = vadd.xlane.f32.xlu0 %v809
        %v811 = vpop.xlane.xlu0 %810
        %v812 = vadd.f32 %v776, %v777
        %v813 = vadd.f32 %v812, %v778
        %v814 = vadd.f32 %v813, %v779
        %815 = vadd.xlane.f32.xlu0 %v814
        %v816 = vpop.xlane.xlu0 %815
        %v817 = vadd.f32 %v780, %v781
        %v818 = vadd.f32 %v817, %v782
        %v819 = vadd.f32 %v818, %v783
        %820 = vadd.xlane.f32.xlu0 %v819
        %v821 = vpop.xlane.xlu0 %820
        %v822 = vadd.f32 %v784, %v785
        %v823 = vadd.f32 %v822, %v786
        %v824 = vadd.f32 %v823, %v787
        %825 = vadd.xlane.f32.xlu0 %v824
        %v826 = vpop.xlane.xlu0 %825
        %v827 = vadd.f32 %v788, %v789
        %v828 = vadd.f32 %v827, %v790
        %v829 = vadd.f32 %v828, %v791
        %830 = vadd.xlane.f32.xlu0 %v829
        %v831 = vpop.xlane.xlu0 %830
        %v832 = vadd.f32 %v752, %v796
        %v833 = vadd.f32 %v753, %v801
        %v834 = vadd.f32 %v754, %v806
        %v835 = vadd.f32 %v755, %v811
        %v836 = vadd.f32 %v756, %v816
        %v837 = vadd.f32 %v757, %v821
        %v838 = vadd.f32 %v758, %v826
        %v839 = vadd.f32 %v759, %v831
        %840 = vst.msk [vmem:[#allocation3] sm:$0xff] %vm743, %v832
        %841 = vst.msk [vmem:[#allocation3 + $0x8] sm:$0xff] %vm743, %v833
        %842 = vst.msk [vmem:[#allocation3 + $0x10] sm:$0xff] %vm743, %v834
        %843 = vst.msk [vmem:[#allocation3 + $0x18] sm:$0xff] %vm743, %v835
        %844 = vst.msk [vmem:[#allocation3 + $0x20] sm:$0xff] %vm743, %v836
        %845 = vst.msk [vmem:[#allocation3 + $0x28] sm:$0xff] %vm743, %v837
        %846 = vst.msk [vmem:[#allocation3 + $0x30] sm:$0xff] %vm743, %v838
        %847 = vst.msk [vmem:[#allocation3 + $0x38] sm:$0xff] %vm743, %v839
        // Predicated region
        $region45: #{attention_slide_forward.2} parent=39 // pred_check
          %p848 = pneg %p666
        $region46: #{attention_slide_forward.2} parent=39 // pred_check_branch
          %850 = sbr.rel (%p848) target = $region48
        $region47: #{attention_slide_forward.2} parent=39 // pred_region
          %v851 = vld [vmem:[#allocation2] sm:$0xff]
          %v852 = vld [vmem:[#allocation2 + $0x8] sm:$0xff]
          %v853 = vld [vmem:[#allocation2 + $0x10] sm:$0xff]
          %v854 = vld [vmem:[#allocation2 + $0x18] sm:$0xff]
          %v855 = vld [vmem:[#allocation2 + $0x20] sm:$0xff]
          %v856 = vld [vmem:[#allocation2 + $0x28] sm:$0xff]
          %v857 = vld [vmem:[#allocation2 + $0x30] sm:$0xff]
          %v858 = vld [vmem:[#allocation2 + $0x38] sm:$0xff]
          %v859 = vmul.f32 %v851, 0.001953125
          %v860 = vmul.f32 %v852, 0.001953125
          %v861 = vmul.f32 %v853, 0.001953125
          %v862 = vmul.f32 %v854, 0.001953125
          %v863 = vmul.f32 %v855, 0.001953125
          %v864 = vmul.f32 %v856, 0.001953125
          %v865 = vmul.f32 %v857, 0.001953125
          %v866 = vmul.f32 %v858, 0.001953125
          %v867 = vld [vmem:[#allocation3] sm:$0xff]
          %v868 = vld [vmem:[#allocation3 + $0x8] sm:$0xff]
          %v869 = vld [vmem:[#allocation3 + $0x10] sm:$0xff]
          %v870 = vld [vmem:[#allocation3 + $0x18] sm:$0xff]
          %v871 = vld [vmem:[#allocation3 + $0x20] sm:$0xff]
          %v872 = vld [vmem:[#allocation3 + $0x28] sm:$0xff]
          %v873 = vld [vmem:[#allocation3 + $0x30] sm:$0xff]
          %v874 = vld [vmem:[#allocation3 + $0x38] sm:$0xff]
          %v875 = vmul.f32 %v867, 0.001953125
          %v876 = vmul.f32 %v868, 0.001953125
          %v877 = vmul.f32 %v869, 0.001953125
          %v878 = vmul.f32 %v870, 0.001953125
          %v879 = vmul.f32 %v871, 0.001953125
          %v880 = vmul.f32 %v872, 0.001953125
          %v881 = vmul.f32 %v873, 0.001953125
          %v882 = vmul.f32 %v874, 0.001953125
          %v883 = vmul.f32 %v859, %v859
          %v884 = vmul.f32 %v860, %v860
          %v885 = vmul.f32 %v861, %v861
          %v886 = vmul.f32 %v862, %v862
          %v887 = vmul.f32 %v863, %v863
          %v888 = vmul.f32 %v864, %v864
          %v889 = vmul.f32 %v865, %v865
          %v890 = vmul.f32 %v866, %v866
          %v891 = vsub.f32 %v875, %v883
          %v892 = vsub.f32 %v876, %v884
          %v893 = vsub.f32 %v877, %v885
          %v894 = vsub.f32 %v878, %v886
          %v895 = vsub.f32 %v879, %v887
          %v896 = vsub.f32 %v880, %v888
          %v897 = vsub.f32 %v881, %v889
          %v898 = vsub.f32 %v882, %v890
          %v899 = vld [vmem:[%s2] sm:$0xff]
          %v900 = vld [vmem:[%s2 + $0x8] sm:$0xff]
          %v901 = vld [vmem:[%s2 + $0x10] sm:$0xff]
          %v902 = vld [vmem:[%s2 + $0x18] sm:$0xff]
          %v903 = vld [vmem:[%s2 + $0x20] sm:$0xff]
          %v904 = vld [vmem:[%s2 + $0x28] sm:$0xff]
          %v905 = vld [vmem:[%s2 + $0x30] sm:$0xff]
          %v906 = vld [vmem:[%s2 + $0x38] sm:$0xff]
          %v907 = vadd.f32 %v891, 1e-05
          %v908 = vadd.f32 %v892, 1e-05
          %v909 = vadd.f32 %v893, 1e-05
          %v910 = vadd.f32 %v894, 1e-05
          %v911 = vadd.f32 %v895, 1e-05
          %v912 = vadd.f32 %v896, 1e-05
          %v913 = vadd.f32 %v897, 1e-05
          %v914 = vadd.f32 %v898, 1e-05
          %v915 = vrsqrt.pop %v907
          %v916 = vrsqrt.pop %v908
          %v917 = vrsqrt.pop %v909
          %v918 = vrsqrt.pop %v910
          %v919 = vrsqrt.pop %v911
          %v920 = vrsqrt.pop %v912
          %v921 = vrsqrt.pop %v913
          %v922 = vrsqrt.pop %v914
          %v923 = vmul.f32 %v899, %v915
          %v924 = vmul.f32 %v900, %v916
          %v925 = vmul.f32 %v901, %v917
          %v926 = vmul.f32 %v902, %v918
          %v927 = vmul.f32 %v903, %v919
          %v928 = vmul.f32 %v904, %v920
          %v929 = vmul.f32 %v905, %v921
          %v930 = vmul.f32 %v906, %v922
          %931 = vst.msk [vmem:[#allocation4] sm:$0xff] %vm743, %v923
          %932 = vst.msk [vmem:[#allocation4 + $0x8] sm:$0xff] %vm743, %v924
          %933 = vst.msk [vmem:[#allocation4 + $0x10] sm:$0xff] %vm743, %v925
          %934 = vst.msk [vmem:[#allocation4 + $0x18] sm:$0xff] %vm743, %v926
          %935 = vst.msk [vmem:[#allocation4 + $0x20] sm:$0xff] %vm743, %v927
          %936 = vst.msk [vmem:[#allocation4 + $0x28] sm:$0xff] %vm743, %v928
          %937 = vst.msk [vmem:[#allocation4 + $0x30] sm:$0xff] %vm743, %v929
          %938 = vst.msk [vmem:[#allocation4 + $0x38] sm:$0xff] %vm743, %v930
          %v939 = vld [vmem:[%s3] sm:$0xff]
          %v940 = vld [vmem:[%s3 + $0x8] sm:$0xff]
          %v941 = vld [vmem:[%s3 + $0x10] sm:$0xff]
          %v942 = vld [vmem:[%s3 + $0x18] sm:$0xff]
          %v943 = vld [vmem:[%s3 + $0x20] sm:$0xff]
          %v944 = vld [vmem:[%s3 + $0x28] sm:$0xff]
          %v945 = vld [vmem:[%s3 + $0x30] sm:$0xff]
          %v946 = vld [vmem:[%s3 + $0x38] sm:$0xff]
          %v947 = vmul.f32 %v859, %v923
          %v948 = vmul.f32 %v860, %v924
          %v949 = vmul.f32 %v861, %v925
          %v950 = vmul.f32 %v862, %v926
          %v951 = vmul.f32 %v863, %v927
          %v952 = vmul.f32 %v864, %v928
          %v953 = vmul.f32 %v865, %v929
          %v954 = vmul.f32 %v866, %v930
          %v955 = vsub.f32 %v939, %v947
          %v956 = vsub.f32 %v940, %v948
          %v957 = vsub.f32 %v941, %v949
          %v958 = vsub.f32 %v942, %v950
          %v959 = vsub.f32 %v943, %v951
          %v960 = vsub.f32 %v944, %v952
          %v961 = vsub.f32 %v945, %v953
          %v962 = vsub.f32 %v946, %v954
          %963 = vst.msk [vmem:[#allocation5] sm:$0xff] %vm743, %v955
          %964 = vst.msk [vmem:[#allocation5 + $0x8] sm:$0xff] %vm743, %v956
          %965 = vst.msk [vmem:[#allocation5 + $0x10] sm:$0xff] %vm743, %v957
          %966 = vst.msk [vmem:[#allocation5 + $0x18] sm:$0xff] %vm743, %v958
          %967 = vst.msk [vmem:[#allocation5 + $0x20] sm:$0xff] %vm743, %v959
          %968 = vst.msk [vmem:[#allocation5 + $0x28] sm:$0xff] %vm743, %v960
          %969 = vst.msk [vmem:[#allocation5 + $0x30] sm:$0xff] %vm743, %v961
          %970 = vst.msk [vmem:[#allocation5 + $0x38] sm:$0xff] %vm743, %v962
        $region48: #{attention_slide_forward.2} parent=39 // pred_fallthru
          _
      $region40: #{attention_slide_forward.2} parent=35 // pred_fallthru
        _
      %p971 = scmp.eq.s32.totalorder %s19, 1
      // Predicated region
      $region49: #{attention_slide_forward.2} parent=35 // pred_check
        %p972 = pneg %p971
      $region50: #{attention_slide_forward.2} parent=35 // pred_check_branch
        %974 = sbr.rel (%p972) target = $region52
      $region51: #{attention_slide_forward.2} parent=35 // pred_region
        %v975 = vld [vmem:[#allocation4] sm:$0xff]
        %v976 = vld [vmem:[#allocation4 + $0x8] sm:$0xff]
        %v977 = vld [vmem:[#allocation4 + $0x10] sm:$0xff]
        %v978 = vld [vmem:[#allocation4 + $0x18] sm:$0xff]
        %v979 = vld [vmem:[#allocation4 + $0x20] sm:$0xff]
        %v980 = vld [vmem:[#allocation4 + $0x28] sm:$0xff]
        %v981 = vld [vmem:[#allocation4 + $0x30] sm:$0xff]
        %v982 = vld [vmem:[#allocation4 + $0x38] sm:$0xff]
        %984 = vset.pattern.permute.xlu0 0
        %985 = vperm.xlu0 %984, %v975
        %v986 = vpop.permute.xlu0 %985
        %989 = vset.pattern.permute.xlu0 0
        %990 = vperm.xlu0 %989, %v976
        %v991 = vpop.permute.xlu0 %990
        %994 = vset.pattern.permute.xlu0 0
        %995 = vperm.xlu0 %994, %v977
        %v996 = vpop.permute.xlu0 %995
        %999 = vset.pattern.permute.xlu0 0
        %1000 = vperm.xlu0 %999, %v978
        %v1001 = vpop.permute.xlu0 %1000
        %1004 = vset.pattern.permute.xlu0 0
        %1005 = vperm.xlu0 %1004, %v979
        %v1006 = vpop.permute.xlu0 %1005
        %1009 = vset.pattern.permute.xlu0 0
        %1010 = vperm.xlu0 %1009, %v980
        %v1011 = vpop.permute.xlu0 %1010
        %1014 = vset.pattern.permute.xlu0 0
        %1015 = vperm.xlu0 %1014, %v981
        %v1016 = vpop.permute.xlu0 %1015
        %1019 = vset.pattern.permute.xlu0 0
        %1020 = vperm.xlu0 %1019, %v982
        %v1021 = vpop.permute.xlu0 %1020
        %v1023 = vmul.f32 %v551, %v986
        %v1024 = vmul.f32 %v553, %v986
        %v1025 = vmul.f32 %v624, %v986
        %v1026 = vmul.f32 %v626, %v986
        %v1027 = vmul.f32 %v555, %v991
        %v1028 = vmul.f32 %v557, %v991
        %v1029 = vmul.f32 %v628, %v991
        %v1030 = vmul.f32 %v630, %v991
        %v1031 = vmul.f32 %v561, %v996
        %v1032 = vmul.f32 %v563, %v996
        %v1033 = vmul.f32 %v634, %v996
        %v1034 = vmul.f32 %v636, %v996
        %v1035 = vmul.f32 %v565, %v1001
        %v1036 = vmul.f32 %v567, %v1001
        %v1037 = vmul.f32 %v638, %v1001
        %v1038 = vmul.f32 %v640, %v1001
        %v1039 = vmul.f32 %v571, %v1006
        %v1040 = vmul.f32 %v573, %v1006
        %v1041 = vmul.f32 %v644, %v1006
        %v1042 = vmul.f32 %v646, %v1006
        %v1043 = vmul.f32 %v575, %v1011
        %v1044 = vmul.f32 %v577, %v1011
        %v1045 = vmul.f32 %v648, %v1011
        %v1046 = vmul.f32 %v650, %v1011
        %v1047 = vmul.f32 %v581, %v1016
        %v1048 = vmul.f32 %v583, %v1016
        %v1049 = vmul.f32 %v654, %v1016
        %v1050 = vmul.f32 %v656, %v1016
        %v1051 = vmul.f32 %v585, %v1021
        %v1052 = vmul.f32 %v587, %v1021
        %v1053 = vmul.f32 %v658, %v1021
        %v1054 = vmul.f32 %v660, %v1021
        %v1055 = vld [vmem:[#allocation5] sm:$0xff]
        %v1056 = vld [vmem:[#allocation5 + $0x8] sm:$0xff]
        %v1057 = vld [vmem:[#allocation5 + $0x10] sm:$0xff]
        %v1058 = vld [vmem:[#allocation5 + $0x18] sm:$0xff]
        %v1059 = vld [vmem:[#allocation5 + $0x20] sm:$0xff]
        %v1060 = vld [vmem:[#allocation5 + $0x28] sm:$0xff]
        %v1061 = vld [vmem:[#allocation5 + $0x30] sm:$0xff]
        %v1062 = vld [vmem:[#allocation5 + $0x38] sm:$0xff]
        %1064 = vset.pattern.permute.xlu0 0
        %1065 = vperm.xlu0 %1064, %v1055
        %v1066 = vpop.permute.xlu0 %1065
        %1069 = vset.pattern.permute.xlu0 0
        %1070 = vperm.xlu0 %1069, %v1056
        %v1071 = vpop.permute.xlu0 %1070
        %1074 = vset.pattern.permute.xlu0 0
        %1075 = vperm.xlu0 %1074, %v1057
        %v1076 = vpop.permute.xlu0 %1075
        %1079 = vset.pattern.permute.xlu0 0
        %1080 = vperm.xlu0 %1079, %v1058
        %v1081 = vpop.permute.xlu0 %1080
        %1084 = vset.pattern.permute.xlu0 0
        %1085 = vperm.xlu0 %1084, %v1059
        %v1086 = vpop.permute.xlu0 %1085
        %1089 = vset.pattern.permute.xlu0 0
        %1090 = vperm.xlu0 %1089, %v1060
        %v1091 = vpop.permute.xlu0 %1090
        %1094 = vset.pattern.permute.xlu0 0
        %1095 = vperm.xlu0 %1094, %v1061
        %v1096 = vpop.permute.xlu0 %1095
        %1099 = vset.pattern.permute.xlu0 0
        %1100 = vperm.xlu0 %1099, %v1062
        %v1101 = vpop.permute.xlu0 %1100
        %v1103 = vadd.f32 %v1023, %v1066
        %v1104 = vadd.f32 %v1024, %v1066
        %v1105 = vadd.f32 %v1025, %v1066
        %v1106 = vadd.f32 %v1026, %v1066
        %v1107 = vadd.f32 %v1027, %v1071
        %v1108 = vadd.f32 %v1028, %v1071
        %v1109 = vadd.f32 %v1029, %v1071
        %v1110 = vadd.f32 %v1030, %v1071
        %v1111 = vadd.f32 %v1031, %v1076
        %v1112 = vadd.f32 %v1032, %v1076
        %v1113 = vadd.f32 %v1033, %v1076
        %v1114 = vadd.f32 %v1034, %v1076
        %v1115 = vadd.f32 %v1035, %v1081
        %v1116 = vadd.f32 %v1036, %v1081
        %v1117 = vadd.f32 %v1037, %v1081
        %v1118 = vadd.f32 %v1038, %v1081
        %v1119 = vadd.f32 %v1039, %v1086
        %v1120 = vadd.f32 %v1040, %v1086
        %v1121 = vadd.f32 %v1041, %v1086
        %v1122 = vadd.f32 %v1042, %v1086
        %v1123 = vadd.f32 %v1043, %v1091
        %v1124 = vadd.f32 %v1044, %v1091
        %v1125 = vadd.f32 %v1045, %v1091
        %v1126 = vadd.f32 %v1046, %v1091
        %v1127 = vadd.f32 %v1047, %v1096
        %v1128 = vadd.f32 %v1048, %v1096
        %v1129 = vadd.f32 %v1049, %v1096
        %v1130 = vadd.f32 %v1050, %v1096
        %v1131 = vadd.f32 %v1051, %v1101
        %v1132 = vadd.f32 %v1052, %v1101
        %v1133 = vadd.f32 %v1053, %v1101
        %v1134 = vadd.f32 %v1054, %v1101
        %v1135 = vmax.f32 %v1103, 0.0
        %v1136 = vmax.f32 %v1104, 0.0
        %v1137 = vmax.f32 %v1105, 0.0
        %v1138 = vmax.f32 %v1106, 0.0
        %v1139 = vmax.f32 %v1107, 0.0
        %v1140 = vmax.f32 %v1108, 0.0
        %v1141 = vmax.f32 %v1109, 0.0
        %v1142 = vmax.f32 %v1110, 0.0
        %v1143 = vmax.f32 %v1111, 0.0
        %v1144 = vmax.f32 %v1112, 0.0
        %v1145 = vmax.f32 %v1113, 0.0
        %v1146 = vmax.f32 %v1114, 0.0
        %v1147 = vmax.f32 %v1115, 0.0
        %v1148 = vmax.f32 %v1116, 0.0
        %v1149 = vmax.f32 %v1117, 0.0
        %v1150 = vmax.f32 %v1118, 0.0
        %v1151 = vmax.f32 %v1119, 0.0
        %v1152 = vmax.f32 %v1120, 0.0
        %v1153 = vmax.f32 %v1121, 0.0
        %v1154 = vmax.f32 %v1122, 0.0
        %v1155 = vmax.f32 %v1123, 0.0
        %v1156 = vmax.f32 %v1124, 0.0
        %v1157 = vmax.f32 %v1125, 0.0
        %v1158 = vmax.f32 %v1126, 0.0
        %v1159 = vmax.f32 %v1127, 0.0
        %v1160 = vmax.f32 %v1128, 0.0
        %v1161 = vmax.f32 %v1129, 0.0
        %v1162 = vmax.f32 %v1130, 0.0
        %v1163 = vmax.f32 %v1131, 0.0
        %v1164 = vmax.f32 %v1132, 0.0
        %v1165 = vmax.f32 %v1133, 0.0
        %v1166 = vmax.f32 %v1134, 0.0
        %v1167 = vpack.c.bf16 %v1139, %v1135
        %v1168 = vpack.c.bf16 %v1140, %v1136
        %v1169 = vpack.c.bf16 %v1141, %v1137
        %v1170 = vpack.c.bf16 %v1142, %v1138
        %v1171 = vpack.c.bf16 %v1147, %v1143
        %v1172 = vpack.c.bf16 %v1148, %v1144
        %v1173 = vpack.c.bf16 %v1149, %v1145
        %v1174 = vpack.c.bf16 %v1150, %v1146
        %v1175 = vpack.c.bf16 %v1155, %v1151
        %v1176 = vpack.c.bf16 %v1156, %v1152
        %v1177 = vpack.c.bf16 %v1157, %v1153
        %v1178 = vpack.c.bf16 %v1158, %v1154
        %v1179 = vpack.c.bf16 %v1163, %v1159
        %v1180 = vpack.c.bf16 %v1164, %v1160
        %v1181 = vpack.c.bf16 %v1165, %v1161
        %v1182 = vpack.c.bf16 %v1166, %v1162
        %v1199 = vunpack.c.l.b16 %v1167
        %v1200 = vunpack.c.l.b16 %v1168
        %v1201 = vunpack.c.l.b16 %v1169
        %v1202 = vunpack.c.l.b16 %v1170
        %v1203 = vunpack.c.h.b16 %v1167
        %v1204 = vunpack.c.h.b16 %v1168
        %v1205 = vunpack.c.h.b16 %v1169
        %v1206 = vunpack.c.h.b16 %v1170
        %v1207 = vunpack.c.l.b16 %v1171
        %v1208 = vunpack.c.l.b16 %v1172
        %v1209 = vunpack.c.l.b16 %v1173
        %v1210 = vunpack.c.l.b16 %v1174
        %v1211 = vunpack.c.h.b16 %v1171
        %v1212 = vunpack.c.h.b16 %v1172
        %v1213 = vunpack.c.h.b16 %v1173
        %v1214 = vunpack.c.h.b16 %v1174
        %v1215 = vunpack.c.l.b16 %v1175
        %v1216 = vunpack.c.l.b16 %v1176
        %v1217 = vunpack.c.l.b16 %v1177
        %v1218 = vunpack.c.l.b16 %v1178
        %v1219 = vunpack.c.h.b16 %v1175
        %v1220 = vunpack.c.h.b16 %v1176
        %v1221 = vunpack.c.h.b16 %v1177
        %v1222 = vunpack.c.h.b16 %v1178
        %v1223 = vunpack.c.l.b16 %v1179
        %v1224 = vunpack.c.l.b16 %v1180
        %v1225 = vunpack.c.l.b16 %v1181
        %v1226 = vunpack.c.l.b16 %v1182
        %v1227 = vunpack.c.h.b16 %v1179
        %v1228 = vunpack.c.h.b16 %v1180
        %v1229 = vunpack.c.h.b16 %v1181
        %v1230 = vunpack.c.h.b16 %v1182
        %v1231 = vpack.c.b16 %v1200, %v1199
        %v1232 = vpack.c.b16 %v1202, %v1201
        %v1233 = vpack.c.b16 %v1204, %v1203
        %v1234 = vpack.c.b16 %v1206, %v1205
        %v1235 = vpack.c.b16 %v1208, %v1207
        %v1236 = vpack.c.b16 %v1210, %v1209
        %v1237 = vpack.c.b16 %v1212, %v1211
        %v1238 = vpack.c.b16 %v1214, %v1213
        %v1239 = vpack.c.b16 %v1216, %v1215
        %v1240 = vpack.c.b16 %v1218, %v1217
        %v1241 = vpack.c.b16 %v1220, %v1219
        %v1242 = vpack.c.b16 %v1222, %v1221
        %v1243 = vpack.c.b16 %v1224, %v1223
        %v1244 = vpack.c.b16 %v1226, %v1225
        %v1245 = vpack.c.b16 %v1228, %v1227
        %v1246 = vpack.c.b16 %v1230, %v1229
        %1263 = vst [vmem:[%s215] sm:$0xff] %v1231
        %1264 = vst [vmem:[%s215 + $0x8] sm:$0xff] %v1232
        %1265 = vst [vmem:[%s215 + $0x10] sm:$0xff] %v1233
        %1266 = vst [vmem:[%s215 + $0x18] sm:$0xff] %v1234
        %1267 = vst [vmem:[%s215 + $0x20] sm:$0xff] %v1235
        %1268 = vst [vmem:[%s215 + $0x28] sm:$0xff] %v1236
        %1269 = vst [vmem:[%s215 + $0x30] sm:$0xff] %v1237
        %1270 = vst [vmem:[%s215 + $0x38] sm:$0xff] %v1238
        %1271 = vst [vmem:[%s215 + $0x40] sm:$0xff] %v1239
        %1272 = vst [vmem:[%s215 + $0x48] sm:$0xff] %v1240
        %1273 = vst [vmem:[%s215 + $0x50] sm:$0xff] %v1241
        %1274 = vst [vmem:[%s215 + $0x58] sm:$0xff] %v1242
        %1275 = vst [vmem:[%s215 + $0x60] sm:$0xff] %v1243
        %1276 = vst [vmem:[%s215 + $0x68] sm:$0xff] %v1244
        %1277 = vst [vmem:[%s215 + $0x70] sm:$0xff] %v1245
        %1278 = vst [vmem:[%s215 + $0x78] sm:$0xff] %v1246
      $region52: #{attention_slide_forward.2} parent=35 // pred_fallthru
        _
      %s1279 = smul.u32 %s19, %s20
      %s1280 = smul.u32 4, %s1279
      %p1281 = scmp.lt.s32.totalorder %s1280, 3
      %s1282 = scalar_select %p1281, %s1280, 3
      %s1283 = smul.addr %s1282, 4
      %s1284 = scalar_lea.vmem %s4, %s1283
      // Predicated region
      $region53: #{attention_slide_forward.2} parent=35 // pred_check
        %p1285 = pneg %p136
      $region54: #{attention_slide_forward.2} parent=35 // pred_check_branch
        %1287 = sbr.rel (%p1285) target = $region56
      $region55: #{attention_slide_forward.2} parent=35 // pred_region
        %s1288 = smul.u32 %s19, %s20
        %s1289 = smul.u32 4, %s1288
      $region56: #{attention_slide_forward.2} parent=35 // pred_fallthru
        _
    $region36: #{attention_slide_forward.2} parent=5 // pred_fallthru
      _
    %p1290 = scmp.le.s32.totalorder 2, %s10
    // Predicated region
    $region57: #{attention_slide_forward.2} parent=5 // pred_check
      %p1291 = pneg %p1290
    $region58: #{attention_slide_forward.2} parent=5 // pred_check_branch
      %1293 = sbr.rel (%p1291) target = $region60
    $region59: #{attention_slide_forward.2} parent=5 // pred_region
      %s1294 = ssub.s32 %s10, 2
      // Predicated region
      $region61: #{attention_slide_forward.2} parent=59 // pred_check
        %p1295 = pneg %p142
      $region62: #{attention_slide_forward.2} parent=59 // pred_check_branch
        %1297 = sbr.rel (%p1295) target = $region64
      $region63: #{attention_slide_forward.2} parent=59 // pred_region
        %s1298 = smul.u32 %s21, %s22
        %s1299 = smul.u32 4, %s1298
        %p1300 = scmp.lt.s32.totalorder %s1299, 3
        %s1301 = scalar_select %p1300, %s1299, 3
        %s1302 = smul.addr %s1301, 4
        %s1303 = scalar_lea.vmem %s4, %s1302
      $region64: #{attention_slide_forward.2} parent=59 // pred_fallthru
        _
    $region60: #{attention_slide_forward.2} parent=5 // pred_fallthru
      _
  $region6: #{attention_slide_forward.2} parent=0 // loop_footer
    %s14 = sadd.s32 1, %s10
  $region7: #{attention_slide_forward.2} parent=0 // loop_footer_branch
    %9 = sbr.rel target = $region3
  $region8: #{attention_slide_forward.2} parent=0 // loop_exit
    _

// kernel: attention_slide_forward.3
$region0: #{attention_slide_forward.3}
  #allocation0 [shape = 'u32[]', space=smem, size = 0x4, offset = 0x4, fixed_abs, tag = 'smem constant byte address 0x4 - core index']
  #allocation1 [shape = 'u32[144,128]{1,0:T(1,128)}', space=vmem, size = 0x12000, scoped, tag = 'internal scratch']
  %s0 = inlined_call_operand.vmem [shape: f32[2,4,64], index: 0, kind: input, shape index: {}]
  %s1 = inlined_call_operand.vmem [shape: f32[64,1000], index: 1, kind: input, shape index: {}]
  %s2 = inlined_call_operand.vmem [shape: f32[1,1000], index: 2, kind: input, shape index: {}]
  %s3 = inlined_call_operand.vmem [shape: f32[2,1000,128], index: 3, kind: input, shape index: {}]
  %s4 = inlined_call_operand.vmem [shape: f32[2,1,128], index: 4, kind: input, shape index: {}]
  %s5 = inlined_call_operand.vmem [shape: f32[2,1,128], index: 5, kind: input, shape index: {}]
  %s6 = inlined_call_operand.vmem [shape: f32[2,1,1], index: 6, kind: input, shape index: {}]
  %s7 = inlined_call_operand.vmem [shape: f32[2,1,1000], index: 7, kind: input, shape index: {}]
  %s8 = inlined_call_operand.vmem [shape: f32[2,1,1], index: 8, kind: input, shape index: {}]
  %s9 = inlined_call_operand.vmem [shape: f32[2,2,1,1], index: 9, kind: output, shape index: {0}]
  %s10 = inlined_call_operand.vmem [shape: f32[2,2,4,1], index: 10, kind: output, shape index: {1}]
  %11 = xla_tuple %s9, %s10
  %s12 = sld [smem:[#allocation0]]
  $region77: #{attention_slide_forward.3} parent=0
    _
  %s14 = ssub.s32 1, %s12
  %s15 = scalar_select 0, %s14, %s12
  loop: start=0, step=1, limit=4
  $region2: #{attention_slide_forward.3} parent=0 // loop_pre_header
    _
  $region3: #{attention_slide_forward.3} parent=0 // loop_header
    %s17 = sphi 0, %s21
    %p18 = scmp.ge.s32.totalorder %s17, 4
    %s27 = sphi 0, %s29
    %s30 = sphi 0, %s27
    %s31 = sphi 0, %s30
    %s47 = sphi 0, %s31
    %s51 = sphi 0, %s51
    %s53 = sphi 0, %s51
    %s54 = sphi 0, %s53
    %s68 = sphi 0, %s54
    %s72 = sphi 0, %s72
    %s74 = sphi 0, %s72
    %s75 = sphi 0, %s74
    %s89 = sphi 0, %s75
    %s93 = sphi 0, %s93
    %s95 = sphi 0, %s93
    %s96 = sphi 0, %s95
    %s110 = sphi 0, %s96
    %s114 = sphi 0, %s114
    %s116 = sphi 0, %s114
    %s117 = sphi 0, %s116
    %s131 = sphi 0, %s117
    %s135 = sphi 0, %s135
    %s137 = sphi 0, %s135
    %s138 = sphi 0, %s137
    %s152 = sphi 0, %s138
    %s156 = sphi 0, %s156
    %s158 = sphi 0, %s156
    %s159 = sphi 0, %s158
    %s173 = sphi 0, %s159
    %s177 = sphi 0, %s177
    %s179 = sphi 0, %s177
    %s180 = sphi 0, %s179
    %s194 = sphi 0, %s180
    %s198 = sphi 0, %s198
    %s200 = sphi 0, %s198
    %s201 = sphi 0, %s200
    %s215 = sphi 0, %s201
    %s221 = sphi 0, %s223
    %s224 = sphi 0, %s221
    %s225 = sphi 0, %s224
    %s241 = sphi 0, %s225
    %s247 = sphi 0, %s249
    %s250 = sphi 0, %s247
    %s251 = sphi 0, %s250
    %s267 = sphi 0, %s251
  $region4: #{attention_slide_forward.3} parent=0 // loop_header_branch
    %20 = sbr.rel (%p18) target = $region8
  $region5: #{attention_slide_forward.3} parent=0 // loop_body
    %s22 = ssub.s32 %s17, 1
    %s23 = ssub.s32 %s17, 2
    %s24 = sadd.s32 %s17, 1
    %s25 = ssub.s32 %s17, %s24
    %p26 = scmp.eq.s32.totalorder %s25, 0
    %s28 = sadd.s32 %s27, 1
    %s29 = scalar_select %p26, %s27, %s28
    %p32 = pneg %p26
    %p33 = scmp.eq.s32.totalorder %s17, 1
    %p34 = por %p32, %p33
    %p35 = scmp.ne.s32.totalorder %s27, %s30
    %p36 = scmp.eq.s32.totalorder %s17, 0
    %p37 = por %p35, %p36
    %p38 = scmp.ne.s32.totalorder %s27, %s30
    %p39 = scmp.eq.s32.totalorder %s22, 1
    %p40 = por %p38, %p39
    %p41 = scmp.ne.s32.totalorder %s30, %s31
    %p42 = scmp.eq.s32.totalorder %s22, 0
    %p43 = por %p41, %p42
    %p44 = scmp.ne.s32.totalorder %s30, %s31
    %p45 = scmp.eq.s32.totalorder %s23, 1
    %p46 = por %p44, %p45
    %p48 = scmp.ne.s32.totalorder %s31, %s47
    %p49 = scmp.eq.s32.totalorder %s23, 0
    %p50 = por %p48, %p49
    %s52 = sadd.s32 %s51, 1
    %p55 = scmp.eq.s32.totalorder %s17, 1
    %p56 = scmp.ne.s32.totalorder %s51, %s53
    %p57 = scmp.eq.s32.totalorder %s17, 0
    %p58 = por %p56, %p57
    %p59 = scmp.ne.s32.totalorder %s51, %s53
    %p60 = scmp.eq.s32.totalorder %s22, 1
    %p61 = por %p59, %p60
    %p62 = scmp.ne.s32.totalorder %s53, %s54
    %p63 = scmp.eq.s32.totalorder %s22, 0
    %p64 = por %p62, %p63
    %p65 = scmp.ne.s32.totalorder %s53, %s54
    %p66 = scmp.eq.s32.totalorder %s23, 1
    %p67 = por %p65, %p66
    %p69 = scmp.ne.s32.totalorder %s54, %s68
    %p70 = scmp.eq.s32.totalorder %s23, 0
    %p71 = por %p69, %p70
    %s73 = sadd.s32 %s72, 1
    %p76 = scmp.eq.s32.totalorder %s17, 1
    %p77 = scmp.ne.s32.totalorder %s72, %s74
    %p78 = scmp.eq.s32.totalorder %s17, 0
    %p79 = por %p77, %p78
    %p80 = scmp.ne.s32.totalorder %s72, %s74
    %p81 = scmp.eq.s32.totalorder %s22, 1
    %p82 = por %p80, %p81
    %p83 = scmp.ne.s32.totalorder %s74, %s75
    %p84 = scmp.eq.s32.totalorder %s22, 0
    %p85 = por %p83, %p84
    %p86 = scmp.ne.s32.totalorder %s74, %s75
    %p87 = scmp.eq.s32.totalorder %s23, 1
    %p88 = por %p86, %p87
    %p90 = scmp.ne.s32.totalorder %s75, %s89
    %p91 = scmp.eq.s32.totalorder %s23, 0
    %p92 = por %p90, %p91
    %s94 = sadd.s32 %s93, 1
    %p97 = scmp.eq.s32.totalorder %s17, 1
    %p98 = scmp.ne.s32.totalorder %s93, %s95
    %p99 = scmp.eq.s32.totalorder %s17, 0
    %p100 = por %p98, %p99
    %p101 = scmp.ne.s32.totalorder %s93, %s95
    %p102 = scmp.eq.s32.totalorder %s22, 1
    %p103 = por %p101, %p102
    %p104 = scmp.ne.s32.totalorder %s95, %s96
    %p105 = scmp.eq.s32.totalorder %s22, 0
    %p106 = por %p104, %p105
    %p107 = scmp.ne.s32.totalorder %s95, %s96
    %p108 = scmp.eq.s32.totalorder %s23, 1
    %p109 = por %p107, %p108
    %p111 = scmp.ne.s32.totalorder %s96, %s110
    %p112 = scmp.eq.s32.totalorder %s23, 0
    %p113 = por %p111, %p112
    %s115 = sadd.s32 %s114, 1
    %p118 = scmp.eq.s32.totalorder %s17, 1
    %p119 = scmp.ne.s32.totalorder %s114, %s116
    %p120 = scmp.eq.s32.totalorder %s17, 0
    %p121 = por %p119, %p120
    %p122 = scmp.ne.s32.totalorder %s114, %s116
    %p123 = scmp.eq.s32.totalorder %s22, 1
    %p124 = por %p122, %p123
    %p125 = scmp.ne.s32.totalorder %s116, %s117
    %p126 = scmp.eq.s32.totalorder %s22, 0
    %p127 = por %p125, %p126
    %p128 = scmp.ne.s32.totalorder %s116, %s117
    %p129 = scmp.eq.s32.totalorder %s23, 1
    %p130 = por %p128, %p129
    %p132 = scmp.ne.s32.totalorder %s117, %s131
    %p133 = scmp.eq.s32.totalorder %s23, 0
    %p134 = por %p132, %p133
    %s136 = sadd.s32 %s135, 1
    %p139 = scmp.eq.s32.totalorder %s17, 1
    %p140 = scmp.ne.s32.totalorder %s135, %s137
    %p141 = scmp.eq.s32.totalorder %s17, 0
    %p142 = por %p140, %p141
    %p143 = scmp.ne.s32.totalorder %s135, %s137
    %p144 = scmp.eq.s32.totalorder %s22, 1
    %p145 = por %p143, %p144
    %p146 = scmp.ne.s32.totalorder %s137, %s138
    %p147 = scmp.eq.s32.totalorder %s22, 0
    %p148 = por %p146, %p147
    %p149 = scmp.ne.s32.totalorder %s137, %s138
    %p150 = scmp.eq.s32.totalorder %s23, 1
    %p151 = por %p149, %p150
    %p153 = scmp.ne.s32.totalorder %s138, %s152
    %p154 = scmp.eq.s32.totalorder %s23, 0
    %p155 = por %p153, %p154
    %s157 = sadd.s32 %s156, 1
    %p160 = scmp.eq.s32.totalorder %s17, 1
    %p161 = scmp.ne.s32.totalorder %s156, %s158
    %p162 = scmp.eq.s32.totalorder %s17, 0
    %p163 = por %p161, %p162
    %p164 = scmp.ne.s32.totalorder %s156, %s158
    %p165 = scmp.eq.s32.totalorder %s22, 1
    %p166 = por %p164, %p165
    %p167 = scmp.ne.s32.totalorder %s158, %s159
    %p168 = scmp.eq.s32.totalorder %s22, 0
    %p169 = por %p167, %p168
    %p170 = scmp.ne.s32.totalorder %s158, %s159
    %p171 = scmp.eq.s32.totalorder %s23, 1
    %p172 = por %p170, %p171
    %p174 = scmp.ne.s32.totalorder %s159, %s173
    %p175 = scmp.eq.s32.totalorder %s23, 0
    %p176 = por %p174, %p175
    %s178 = sadd.s32 %s177, 1
    %p181 = scmp.eq.s32.totalorder %s17, 1
    %p182 = scmp.ne.s32.totalorder %s177, %s179
    %p183 = scmp.eq.s32.totalorder %s17, 0
    %p184 = por %p182, %p183
    %p185 = scmp.ne.s32.totalorder %s177, %s179
    %p186 = scmp.eq.s32.totalorder %s22, 1
    %p187 = por %p185, %p186
    %p188 = scmp.ne.s32.totalorder %s179, %s180
    %p189 = scmp.eq.s32.totalorder %s22, 0
    %p190 = por %p188, %p189
    %p191 = scmp.ne.s32.totalorder %s179, %s180
    %p192 = scmp.eq.s32.totalorder %s23, 1
    %p193 = por %p191, %p192
    %p195 = scmp.ne.s32.totalorder %s180, %s194
    %p196 = scmp.eq.s32.totalorder %s23, 0
    %p197 = por %p195, %p196
    %s199 = sadd.s32 %s198, 1
    %p202 = scmp.eq.s32.totalorder %s17, 1
    %p203 = scmp.ne.s32.totalorder %s198, %s200
    %p204 = scmp.eq.s32.totalorder %s17, 0
    %p205 = por %p203, %p204
    %p206 = scmp.ne.s32.totalorder %s198, %s200
    %p207 = scmp.eq.s32.totalorder %s22, 1
    %p208 = por %p206, %p207
    %p209 = scmp.ne.s32.totalorder %s200, %s201
    %p210 = scmp.eq.s32.totalorder %s22, 0
    %p211 = por %p209, %p210
    %p212 = scmp.ne.s32.totalorder %s200, %s201
    %p213 = scmp.eq.s32.totalorder %s23, 1
    %p214 = por %p212, %p213
    %p216 = scmp.ne.s32.totalorder %s201, %s215
    %p217 = scmp.eq.s32.totalorder %s23, 0
    %p218 = por %p216, %p217
    %s219 = ssub.s32 %s17, %s24
    %p220 = scmp.eq.s32.totalorder %s219, 0
    %s222 = sadd.s32 %s221, 1
    %s223 = scalar_select %p220, %s221, %s222
    %p226 = pneg %p220
    %p227 = scmp.eq.s32.totalorder %s17, 1
    %p228 = por %p226, %p227
    %p229 = scmp.ne.s32.totalorder %s221, %s224
    %p230 = scmp.eq.s32.totalorder %s17, 0
    %p231 = por %p229, %p230
    %p232 = scmp.ne.s32.totalorder %s221, %s224
    %p233 = scmp.eq.s32.totalorder %s22, 1
    %p234 = por %p232, %p233
    %p235 = scmp.ne.s32.totalorder %s224, %s225
    %p236 = scmp.eq.s32.totalorder %s22, 0
    %p237 = por %p235, %p236
    %p238 = scmp.ne.s32.totalorder %s224, %s225
    %p239 = scmp.eq.s32.totalorder %s23, 1
    %p240 = por %p238, %p239
    %p242 = scmp.ne.s32.totalorder %s225, %s241
    %p243 = scmp.eq.s32.totalorder %s23, 0
    %p244 = por %p242, %p243
    %s245 = ssub.s32 %s17, %s24
    %p246 = scmp.eq.s32.totalorder %s245, 0
    %s248 = sadd.s32 %s247, 1
    %s249 = scalar_select %p246, %s247, %s248
    %p252 = pneg %p246
    %p253 = scmp.eq.s32.totalorder %s17, 1
    %p254 = por %p252, %p253
    %p255 = scmp.ne.s32.totalorder %s247, %s250
    %p256 = scmp.eq.s32.totalorder %s17, 0
    %p257 = por %p255, %p256
    %p258 = scmp.ne.s32.totalorder %s247, %s250
    %p259 = scmp.eq.s32.totalorder %s22, 1
    %p260 = por %p258, %p259
    %p261 = scmp.ne.s32.totalorder %s250, %s251
    %p262 = scmp.eq.s32.totalorder %s22, 0
    %p263 = por %p261, %p262
    %p264 = scmp.ne.s32.totalorder %s250, %s251
    %p265 = scmp.eq.s32.totalorder %s23, 1
    %p266 = por %p264, %p265
    %p268 = scmp.ne.s32.totalorder %s251, %s267
    %p269 = scmp.eq.s32.totalorder %s23, 0
    %p270 = por %p268, %p269
    %p271 = scmp.le.s32.totalorder 1, %s17
    %p272 = scmp.lt.s32.totalorder %s17, 3
    %p273 = pnand %p271, %p272
    %p274 = pneg %p273
    // Predicated region
    $region9: #{attention_slide_forward.3} parent=5 // pred_check
      _
    $region10: #{attention_slide_forward.3} parent=5 // pred_check_branch
      %276 = sbr.rel (%p273) target = $region12
    $region11: #{attention_slide_forward.3} parent=5 // pred_region
      %s277 = ssub.s32 %s17, 1
      // Predicated region
      $region13: #{attention_slide_forward.3} parent=11 // pred_check
        %p278 = pneg %p64
      $region14: #{attention_slide_forward.3} parent=11 // pred_check_branch
        %280 = sbr.rel (%p278) target = $region16
      $region15: #{attention_slide_forward.3} parent=11 // pred_region
        _
      $region16: #{attention_slide_forward.3} parent=11 // pred_fallthru
        _
      // Predicated region
      $region17: #{attention_slide_forward.3} parent=11 // pred_check
        %p281 = pneg %p85
      $region18: #{attention_slide_forward.3} parent=11 // pred_check_branch
        %283 = sbr.rel (%p281) target = $region20
      $region19: #{attention_slide_forward.3} parent=11 // pred_region
        _
      $region20: #{attention_slide_forward.3} parent=11 // pred_fallthru
        _
      // Predicated region
      $region21: #{attention_slide_forward.3} parent=11 // pred_check
        %p284 = pneg %p106
      $region22: #{attention_slide_forward.3} parent=11 // pred_check_branch
        %286 = sbr.rel (%p284) target = $region24
      $region23: #{attention_slide_forward.3} parent=11 // pred_region
        _
      $region24: #{attention_slide_forward.3} parent=11 // pred_fallthru
        _
      // Predicated region
      $region25: #{attention_slide_forward.3} parent=11 // pred_check
        %p287 = pneg %p127
      $region26: #{attention_slide_forward.3} parent=11 // pred_check_branch
        %289 = sbr.rel (%p287) target = $region28
      $region27: #{attention_slide_forward.3} parent=11 // pred_region
        _
      $region28: #{attention_slide_forward.3} parent=11 // pred_fallthru
        _
      // Predicated region
      $region29: #{attention_slide_forward.3} parent=11 // pred_check
        %p290 = pneg %p148
      $region30: #{attention_slide_forward.3} parent=11 // pred_check_branch
        %292 = sbr.rel (%p290) target = $region32
      $region31: #{attention_slide_forward.3} parent=11 // pred_region
        _
      $region32: #{attention_slide_forward.3} parent=11 // pred_fallthru
        _
      // Predicated region
      $region33: #{attention_slide_forward.3} parent=11 // pred_check
        %p293 = pneg %p169
      $region34: #{attention_slide_forward.3} parent=11 // pred_check_branch
        %295 = sbr.rel (%p293) target = $region36
      $region35: #{attention_slide_forward.3} parent=11 // pred_region
        _
      $region36: #{attention_slide_forward.3} parent=11 // pred_fallthru
        _
      // Predicated region
      $region37: #{attention_slide_forward.3} parent=11 // pred_check
        %p296 = pneg %p190
      $region38: #{attention_slide_forward.3} parent=11 // pred_check_branch
        %298 = sbr.rel (%p296) target = $region40
      $region39: #{attention_slide_forward.3} parent=11 // pred_region
        _
      $region40: #{attention_slide_forward.3} parent=11 // pred_fallthru
        _
      // Predicated region
      $region41: #{attention_slide_forward.3} parent=11 // pred_check
        %p299 = pneg %p211
      $region42: #{attention_slide_forward.3} parent=11 // pred_check_branch
        %301 = sbr.rel (%p299) target = $region44
      $region43: #{attention_slide_forward.3} parent=11 // pred_region
        _
      $region44: #{attention_slide_forward.3} parent=11 // pred_fallthru
        _
    $region12: #{attention_slide_forward.3} parent=5 // pred_fallthru
      _
    %p302 = scmp.lt.s32.totalorder %s17, 2
    // Predicated region
    $region45: #{attention_slide_forward.3} parent=5 // pred_check
      %p303 = pneg %p302
    $region46: #{attention_slide_forward.3} parent=5 // pred_check_branch
      %305 = sbr.rel (%p303) target = $region48
    $region47: #{attention_slide_forward.3} parent=5 // pred_region
      // Predicated region
      $region49: #{attention_slide_forward.3} parent=47 // pred_check
        %p306 = pneg %p37
      $region50: #{attention_slide_forward.3} parent=47 // pred_check_branch
        %308 = sbr.rel (%p306) target = $region52
      $region51: #{attention_slide_forward.3} parent=47 // pred_region
        %p309 = scmp.lt.s32.totalorder %s17, 1
        %s310 = scalar_select %p309, %s17, 1
        %s311 = smul.addr %s310, 4
        %s312 = scalar_lea.vmem %s0, %s311
      $region52: #{attention_slide_forward.3} parent=47 // pred_fallthru
        _
    $region48: #{attention_slide_forward.3} parent=5 // pred_fallthru
      _
    %p313 = scmp.le.s32.totalorder 1, %s17
    %p314 = scmp.lt.s32.totalorder %s17, 3
    %p315 = pnand %p313, %p314
    %p316 = pneg %p315
    // Predicated region
    $region53: #{attention_slide_forward.3} parent=5 // pred_check
      _
    $region54: #{attention_slide_forward.3} parent=5 // pred_check_branch
      %318 = sbr.rel (%p315) target = $region56
    $region55: #{attention_slide_forward.3} parent=5 // pred_region
      %s319 = ssub.s32 %s17, 1
      %p320 = scmp.lt.s32.totalorder %s22, 1
      %s321 = scalar_select %p320, %s22, 1
      %s322 = smul.addr %s321, 4
      %s323 = scalar_lea.vmem %s0, %s322
      %p324 = pneg %p43
      %p325 = pneg %p40
      %p326 = pneg %p64
      %p327 = pneg %p61
      %p328 = pneg %p85
      %p329 = pneg %p82
      %p330 = pneg %p106
      %p331 = pneg %p103
      %p332 = pneg %p127
      %p333 = pneg %p124
      %p334 = pneg %p148
      %p335 = pneg %p145
      %p336 = pneg %p169
      %p337 = pneg %p166
      %p338 = pneg %p190
      %p339 = pneg %p187
      %p340 = pneg %p211
      %p341 = pneg %p208
      %p342 = pneg %p237
      %p343 = pneg %p234
      %p344 = scmp.lt.s32.totalorder %s22, 1
      %s345 = scalar_select %p344, %s22, 1
      %s346 = smul.addr %s345, 2
      %s347 = scalar_lea.vmem %s9, %s346
      %p348 = pneg %p263
      %p349 = pneg %p260
      %p350 = scmp.lt.s32.totalorder %s22, 1
      %s351 = scalar_select %p350, %s22, 1
      %s352 = smul.addr %s351, 2
      %s353 = smul.addr %s352, 4
      %s354 = scalar_lea.vmem %s10, %s353
      %p355 = scmp.lt.s32.totalorder %s22, 1
      %s356 = scalar_select %p355, %s22, 1
      %s357 = smul.addr %s356, 4
      %s358 = scalar_lea.vmem %s0, %s357
      %p359 = scmp.lt.s32.totalorder %s22, 1
      %s360 = scalar_select %p359, %s22, 1
      %s361 = smul.addr %s360, 2
      %s362 = scalar_lea.vmem %s9, %s361
      %p363 = scmp.lt.s32.totalorder %s22, 1
      %s364 = scalar_select %p363, %s22, 1
      %s365 = smul.addr %s364, 2
      %s366 = smul.addr %s365, 4
      %s367 = scalar_lea.vmem %s10, %s366
      %v368 = vld [vmem:[%s358] sm:$0xf]
      %v369 = vld [vmem:[%s1] sm:$0xff]
      %v370 = vld [vmem:[%s1 + $0x8] sm:$0xff]
      %v371 = vld [vmem:[%s1 + $0x10] sm:$0xff]
      %v372 = vld [vmem:[%s1 + $0x18] sm:$0xff]
      %v373 = vld [vmem:[%s1 + $0x20] sm:$0xff]
      %v374 = vld [vmem:[%s1 + $0x28] sm:$0xff]
      %v375 = vld [vmem:[%s1 + $0x30] sm:$0xff]
      %v376 = vld [vmem:[%s1 + $0x38] sm:$0xff]
      %v377 = vld [vmem:[%s1 + $0x40] sm:$0xff]
      %v378 = vld [vmem:[%s1 + $0x48] sm:$0xff]
      %v379 = vld [vmem:[%s1 + $0x50] sm:$0xff]
      %v380 = vld [vmem:[%s1 + $0x58] sm:$0xff]
      %v381 = vld [vmem:[%s1 + $0x60] sm:$0xff]
      %v382 = vld [vmem:[%s1 + $0x68] sm:$0xff]
      %v383 = vld [vmem:[%s1 + $0x70] sm:$0xff]
      %v384 = vld [vmem:[%s1 + $0x78] sm:$0xff]
      %v385 = vld [vmem:[%s1 + $0x80] sm:$0xff]
      %v386 = vld [vmem:[%s1 + $0x88] sm:$0xff]
      %v387 = vld [vmem:[%s1 + $0x90] sm:$0xff]
      %v388 = vld [vmem:[%s1 + $0x98] sm:$0xff]
      %v389 = vld [vmem:[%s1 + $0xa0] sm:$0xff]
      %v390 = vld [vmem:[%s1 + $0xa8] sm:$0xff]
      %v391 = vld [vmem:[%s1 + $0xb0] sm:$0xff]
      %v392 = vld [vmem:[%s1 + $0xb8] sm:$0xff]
      %v393 = vld [vmem:[%s1 + $0xc0] sm:$0xff]
      %v394 = vld [vmem:[%s1 + $0xc8] sm:$0xff]
      %v395 = vld [vmem:[%s1 + $0xd0] sm:$0xff]
      %v396 = vld [vmem:[%s1 + $0xd8] sm:$0xff]
      %v397 = vld [vmem:[%s1 + $0xe0] sm:$0xff]
      %v398 = vld [vmem:[%s1 + $0xe8] sm:$0xff]
      %v399 = vld [vmem:[%s1 + $0xf0] sm:$0xff]
      %v400 = vld [vmem:[%s1 + $0xf8] sm:$0xff]
      %v401 = vld [vmem:[%s1 + $0x100] sm:$0xff]
      %v402 = vld [vmem:[%s1 + $0x108] sm:$0xff]
      %v403 = vld [vmem:[%s1 + $0x110] sm:$0xff]
      %v404 = vld [vmem:[%s1 + $0x118] sm:$0xff]
      %v405 = vld [vmem:[%s1 + $0x120] sm:$0xff]
      %v406 = vld [vmem:[%s1 + $0x128] sm:$0xff]
      %v407 = vld [vmem:[%s1 + $0x130] sm:$0xff]
      %v408 = vld [vmem:[%s1 + $0x138] sm:$0xff]
      %v409 = vld [vmem:[%s1 + $0x140] sm:$0xff]
      %v410 = vld [vmem:[%s1 + $0x148] sm:$0xff]
      %v411 = vld [vmem:[%s1 + $0x150] sm:$0xff]
      %v412 = vld [vmem:[%s1 + $0x158] sm:$0xff]
      %v413 = vld [vmem:[%s1 + $0x160] sm:$0xff]
      %v414 = vld [vmem:[%s1 + $0x168] sm:$0xff]
      %v415 = vld [vmem:[%s1 + $0x170] sm:$0xff]
      %v416 = vld [vmem:[%s1 + $0x178] sm:$0xff]
      %v417 = vld [vmem:[%s1 + $0x180] sm:$0xff]
      %v418 = vld [vmem:[%s1 + $0x188] sm:$0xff]
      %v419 = vld [vmem:[%s1 + $0x190] sm:$0xff]
      %v420 = vld [vmem:[%s1 + $0x198] sm:$0xff]
      %v421 = vld [vmem:[%s1 + $0x1a0] sm:$0xff]
      %v422 = vld [vmem:[%s1 + $0x1a8] sm:$0xff]
      %v423 = vld [vmem:[%s1 + $0x1b0] sm:$0xff]
      %v424 = vld [vmem:[%s1 + $0x1b8] sm:$0xff]
      %v425 = vld [vmem:[%s1 + $0x1c0] sm:$0xff]
      %v426 = vld [vmem:[%s1 + $0x1c8] sm:$0xff]
      %v427 = vld [vmem:[%s1 + $0x1d0] sm:$0xff]
      %v428 = vld [vmem:[%s1 + $0x1d8] sm:$0xff]
      %v429 = vld [vmem:[%s1 + $0x1e0] sm:$0xff]
      %v430 = vld [vmem:[%s1 + $0x1e8] sm:$0xff]
      %v431 = vld [vmem:[%s1 + $0x1f0] sm:$0xff]
      %v432 = vld [vmem:[%s1 + $0x1f8] sm:$0xff]
      %v433 = vld [vmem:[%s2] sm:$0xff]
      %v435 = vlaneseq
      %v436 = vshrl.u32 %v435, 7
      %v437 = vsub.s32 0, %v436
      %v438 = vrot.slane %v433, %v437
      %v439 = vlaneseq
      %v440 = vshrl.u32 %v439, 7
      %v441 = vsub.s32 1, %v440
      %v442 = vrot.slane %v433, %v441
      %v443 = vlaneseq
      %v444 = vshrl.u32 %v443, 7
      %v445 = vsub.s32 2, %v444
      %v446 = vrot.slane %v433, %v445
      %v447 = vlaneseq
      %v448 = vshrl.u32 %v447, 7
      %v449 = vsub.s32 3, %v448
      %v450 = vrot.slane %v433, %v449
      %v451 = vlaneseq
      %v452 = vshrl.u32 %v451, 7
      %v453 = vsub.s32 4, %v452
      %v454 = vrot.slane %v433, %v453
      %v455 = vlaneseq
      %v456 = vshrl.u32 %v455, 7
      %v457 = vsub.s32 5, %v456
      %v458 = vrot.slane %v433, %v457
      %v459 = vlaneseq
      %v460 = vshrl.u32 %v459, 7
      %v461 = vsub.s32 6, %v460
      %v462 = vrot.slane %v433, %v461
      %v463 = vlaneseq
      %v464 = vshrl.u32 %v463, 7
      %v465 = vsub.s32 7, %v464
      %v466 = vrot.slane %v433, %v465
      %vm475 = vcmask 523264
      %v477 = vsel %vm475, %v368, 0
      %479 = vmatprep.subr.mxu0 0.0
      %480 = vmatpush1.msra.mxu0 0.0
      %481 = vmatprep.subr.mxu0 0.0
      %482 = vmatpush1.msra.mxu0 0.0
      %483 = vmatprep.subr.mxu0 0.0
      %484 = vmatpush1.msra.mxu0 0.0
      %485 = vmatprep.subr.mxu0 0.0
      %486 = vmatpush1.msra.mxu0 0.0
      %487 = vmatprep.subr.mxu0 0.0
      %488 = vmatpush1.msra.mxu0 0.0
      %489 = vmatprep.subr.mxu0 0.0
      %490 = vmatpush1.msra.mxu0 0.0
      %491 = vmatprep.subr.mxu0 0.0
      %492 = vmatpush1.msra.mxu0 0.0
      %493 = vmatprep.subr.mxu0 0.0
      %494 = vmatpush1.msra.mxu0 0.0
      %495 = vmatprep.subr.mxu0 %v426
      %496 = vmatpush1.msra.mxu0 %v425
      %497 = vmatprep.subr.mxu0 %v418
      %498 = vmatpush1.msra.mxu0 %v417
      %499 = vmatprep.subr.mxu0 %v410
      %500 = vmatpush1.msra.mxu0 %v409
      %501 = vmatprep.subr.mxu0 %v402
      %502 = vmatpush1.msra.mxu0 %v401
      %503 = vmatprep.subr.mxu0 %v394
      %504 = vmatpush1.msra.mxu0 %v393
      %505 = vmatprep.subr.mxu0 %v386
      %506 = vmatpush1.msra.mxu0 %v385
      %507 = vmatprep.subr.mxu0 %v378
      %508 = vmatpush1.msra.mxu0 %v377
      %509 = vmatprep.subr.mxu0 %v370
      %510 = vmatpush1.msra.mxu0 %v369
      %511 = vmatprep.subr.mxu0 0.0
      %512 = vmatpush2.msra.mxu0 0.0
      %513 = vmatprep.subr.mxu0 0.0
      %514 = vmatpush2.msra.mxu0 0.0
      %515 = vmatprep.subr.mxu0 0.0
      %516 = vmatpush2.msra.mxu0 0.0
      %517 = vmatprep.subr.mxu0 0.0
      %518 = vmatpush2.msra.mxu0 0.0
      %519 = vmatprep.subr.mxu0 0.0
      %520 = vmatpush2.msra.mxu0 0.0
      %521 = vmatprep.subr.mxu0 0.0
      %522 = vmatpush2.msra.mxu0 0.0
      %523 = vmatprep.subr.mxu0 0.0
      %524 = vmatpush2.msra.mxu0 0.0
      %525 = vmatprep.subr.mxu0 0.0
      %526 = vmatpush2.msra.mxu0 0.0
      %527 = vmatprep.subr.mxu0 0.0
      %528 = vmatpush2.msra.mxu0 0.0
      %529 = vmatprep.subr.mxu0 0.0
      %530 = vmatpush2.msra.mxu0 0.0
      %531 = vmatprep.subr.mxu0 0.0
      %532 = vmatpush2.msra.mxu0 0.0
      %533 = vmatprep.subr.mxu0 0.0
      %534 = vmatpush2.msra.mxu0 0.0
      %535 = vmatprep.subr.mxu0 0.0
      %536 = vmatpush2.msra.mxu0 0.0
      %537 = vmatprep.subr.mxu0 0.0
      %538 = vmatpush2.msra.mxu0 0.0
      %539 = vmatprep.subr.mxu0 0.0
      %540 = vmatpush2.msra.mxu0 0.0
      %541 = vmatprep.subr.mxu0 0.0
      %542 = vmatpush2.msra.mxu0 0.0
      %543 = vmatprep.mubr.f32.mxu0 0.0
      %544 = vmatmul.mubr.f32.gmra.mxu0 %v477
      %v545 = vpop.f32.mrf.mxu0
      %v546 = vadd.f32 %v438, %v545
      %v547 = vpop.f32.mrf.mxu0
      %v548 = vadd.f32 %v442, %v547
      %549 = vdwg.mxu0
      %550 = vmatprep.subr.mxu0 0.0
      %551 = vmatpush1.msra.mxu0 0.0
      %552 = vmatprep.subr.mxu0 0.0
      %553 = vmatpush1.msra.mxu0 0.0
      %554 = vmatprep.subr.mxu0 0.0
      %555 = vmatpush1.msra.mxu0 0.0
      %556 = vmatprep.subr.mxu0 0.0
      %557 = vmatpush1.msra.mxu0 0.0
      %558 = vmatprep.subr.mxu0 0.0
      %559 = vmatpush1.msra.mxu0 0.0
      %560 = vmatprep.subr.mxu0 0.0
      %561 = vmatpush1.msra.mxu0 0.0
      %562 = vmatprep.subr.mxu0 0.0
      %563 = vmatpush1.msra.mxu0 0.0
      %564 = vmatprep.subr.mxu0 0.0
      %565 = vmatpush1.msra.mxu0 0.0
      %566 = vmatprep.subr.mxu0 %v428
      %567 = vmatpush1.msra.mxu0 %v427
      %568 = vmatprep.subr.mxu0 %v420
      %569 = vmatpush1.msra.mxu0 %v419
      %570 = vmatprep.subr.mxu0 %v412
      %571 = vmatpush1.msra.mxu0 %v411
      %572 = vmatprep.subr.mxu0 %v404
      %573 = vmatpush1.msra.mxu0 %v403
      %574 = vmatprep.subr.mxu0 %v396
      %575 = vmatpush1.msra.mxu0 %v395
      %576 = vmatprep.subr.mxu0 %v388
      %577 = vmatpush1.msra.mxu0 %v387
      %578 = vmatprep.subr.mxu0 %v380
      %579 = vmatpush1.msra.mxu0 %v379
      %580 = vmatprep.subr.mxu0 %v372
      %581 = vmatpush1.msra.mxu0 %v371
      %582 = vmatprep.subr.mxu0 0.0
      %583 = vmatpush2.msra.mxu0 0.0
      %584 = vmatprep.subr.mxu0 0.0
      %585 = vmatpush2.msra.mxu0 0.0
      %586 = vmatprep.subr.mxu0 0.0
      %587 = vmatpush2.msra.mxu0 0.0
      %588 = vmatprep.subr.mxu0 0.0
      %589 = vmatpush2.msra.mxu0 0.0
      %590 = vmatprep.subr.mxu0 0.0
      %591 = vmatpush2.msra.mxu0 0.0
      %592 = vmatprep.subr.mxu0 0.0
      %593 = vmatpush2.msra.mxu0 0.0
      %594 = vmatprep.subr.mxu0 0.0
      %595 = vmatpush2.msra.mxu0 0.0
      %596 = vmatprep.subr.mxu0 0.0
      %597 = vmatpush2.msra.mxu0 0.0
      %598 = vmatprep.subr.mxu0 0.0
      %599 = vmatpush2.msra.mxu0 0.0
      %600 = vmatprep.subr.mxu0 0.0
      %601 = vmatpush2.msra.mxu0 0.0
      %602 = vmatprep.subr.mxu0 0.0
      %603 = vmatpush2.msra.mxu0 0.0
      %604 = vmatprep.subr.mxu0 0.0
      %605 = vmatpush2.msra.mxu0 0.0
      %606 = vmatprep.subr.mxu0 0.0
      %607 = vmatpush2.msra.mxu0 0.0
      %608 = vmatprep.subr.mxu0 0.0
      %609 = vmatpush2.msra.mxu0 0.0
      %610 = vmatprep.subr.mxu0 0.0
      %611 = vmatpush2.msra.mxu0 0.0
      %612 = vmatprep.subr.mxu0 0.0
      %613 = vmatpush2.msra.mxu0 0.0
      %614 = vmatprep.mubr.f32.mxu0 0.0
      %615 = vmatmul.mubr.f32.gmra.mxu0 %v477
      %v616 = vpop.f32.mrf.mxu0
      %v617 = vadd.f32 %v446, %v616
      %v618 = vpop.f32.mrf.mxu0
      %v619 = vadd.f32 %v450, %v618
      %620 = vdwg.mxu0
      %621 = vmatprep.subr.mxu0 0.0
      %622 = vmatpush1.msra.mxu0 0.0
      %623 = vmatprep.subr.mxu0 0.0
      %624 = vmatpush1.msra.mxu0 0.0
      %625 = vmatprep.subr.mxu0 0.0
      %626 = vmatpush1.msra.mxu0 0.0
      %627 = vmatprep.subr.mxu0 0.0
      %628 = vmatpush1.msra.mxu0 0.0
      %629 = vmatprep.subr.mxu0 0.0
      %630 = vmatpush1.msra.mxu0 0.0
      %631 = vmatprep.subr.mxu0 0.0
      %632 = vmatpush1.msra.mxu0 0.0
      %633 = vmatprep.subr.mxu0 0.0
      %634 = vmatpush1.msra.mxu0 0.0
      %635 = vmatprep.subr.mxu0 0.0
      %636 = vmatpush1.msra.mxu0 0.0
      %637 = vmatprep.subr.mxu0 %v430
      %638 = vmatpush1.msra.mxu0 %v429
      %639 = vmatprep.subr.mxu0 %v422
      %640 = vmatpush1.msra.mxu0 %v421
      %641 = vmatprep.subr.mxu0 %v414
      %642 = vmatpush1.msra.mxu0 %v413
      %643 = vmatprep.subr.mxu0 %v406
      %644 = vmatpush1.msra.mxu0 %v405
      %645 = vmatprep.subr.mxu0 %v398
      %646 = vmatpush1.msra.mxu0 %v397
      %647 = vmatprep.subr.mxu0 %v390
      %648 = vmatpush1.msra.mxu0 %v389
      %649 = vmatprep.subr.mxu0 %v382
      %650 = vmatpush1.msra.mxu0 %v381
      %651 = vmatprep.subr.mxu0 %v374
      %652 = vmatpush1.msra.mxu0 %v373
      %653 = vmatprep.subr.mxu0 0.0
      %654 = vmatpush2.msra.mxu0 0.0
      %655 = vmatprep.subr.mxu0 0.0
      %656 = vmatpush2.msra.mxu0 0.0
      %657 = vmatprep.subr.mxu0 0.0
      %658 = vmatpush2.msra.mxu0 0.0
      %659 = vmatprep.subr.mxu0 0.0
      %660 = vmatpush2.msra.mxu0 0.0
      %661 = vmatprep.subr.mxu0 0.0
      %662 = vmatpush2.msra.mxu0 0.0
      %663 = vmatprep.subr.mxu0 0.0
      %664 = vmatpush2.msra.mxu0 0.0
      %665 = vmatprep.subr.mxu0 0.0
      %666 = vmatpush2.msra.mxu0 0.0
      %667 = vmatprep.subr.mxu0 0.0
      %668 = vmatpush2.msra.mxu0 0.0
      %669 = vmatprep.subr.mxu0 0.0
      %670 = vmatpush2.msra.mxu0 0.0
      %671 = vmatprep.subr.mxu0 0.0
      %672 = vmatpush2.msra.mxu0 0.0
      %673 = vmatprep.subr.mxu0 0.0
      %674 = vmatpush2.msra.mxu0 0.0
      %675 = vmatprep.subr.mxu0 0.0
      %676 = vmatpush2.msra.mxu0 0.0
      %677 = vmatprep.subr.mxu0 0.0
      %678 = vmatpush2.msra.mxu0 0.0
      %679 = vmatprep.subr.mxu0 0.0
      %680 = vmatpush2.msra.mxu0 0.0
      %681 = vmatprep.subr.mxu0 0.0
      %682 = vmatpush2.msra.mxu0 0.0
      %683 = vmatprep.subr.mxu0 0.0
      %684 = vmatpush2.msra.mxu0 0.0
      %685 = vmatprep.mubr.f32.mxu0 0.0
      %686 = vmatmul.mubr.f32.gmra.mxu0 %v477
      %v687 = vpop.f32.mrf.mxu0
      %v688 = vadd.f32 %v454, %v687
      %v689 = vpop.f32.mrf.mxu0
      %v690 = vadd.f32 %v458, %v689
      %691 = vdwg.mxu0
      %692 = vmatprep.subr.mxu0 0.0
      %693 = vmatpush1.msra.mxu0 0.0
      %694 = vmatprep.subr.mxu0 0.0
      %695 = vmatpush1.msra.mxu0 0.0
      %696 = vmatprep.subr.mxu0 0.0
      %697 = vmatpush1.msra.mxu0 0.0
      %698 = vmatprep.subr.mxu0 0.0
      %699 = vmatpush1.msra.mxu0 0.0
      %700 = vmatprep.subr.mxu0 0.0
      %701 = vmatpush1.msra.mxu0 0.0
      %702 = vmatprep.subr.mxu0 0.0
      %703 = vmatpush1.msra.mxu0 0.0
      %704 = vmatprep.subr.mxu0 0.0
      %705 = vmatpush1.msra.mxu0 0.0
      %706 = vmatprep.subr.mxu0 0.0
      %707 = vmatpush1.msra.mxu0 0.0
      %708 = vmatprep.subr.mxu0 %v432
      %709 = vmatpush1.msra.mxu0 %v431
      %710 = vmatprep.subr.mxu0 %v424
      %711 = vmatpush1.msra.mxu0 %v423
      %712 = vmatprep.subr.mxu0 %v416
      %713 = vmatpush1.msra.mxu0 %v415
      %714 = vmatprep.subr.mxu0 %v408
      %715 = vmatpush1.msra.mxu0 %v407
      %716 = vmatprep.subr.mxu0 %v400
      %717 = vmatpush1.msra.mxu0 %v399
      %718 = vmatprep.subr.mxu0 %v392
      %719 = vmatpush1.msra.mxu0 %v391
      %720 = vmatprep.subr.mxu0 %v384
      %721 = vmatpush1.msra.mxu0 %v383
      %722 = vmatprep.subr.mxu0 %v376
      %723 = vmatpush1.msra.mxu0 %v375
      %724 = vmatprep.subr.mxu0 0.0
      %725 = vmatpush2.msra.mxu0 0.0
      %726 = vmatprep.subr.mxu0 0.0
      %727 = vmatpush2.msra.mxu0 0.0
      %728 = vmatprep.subr.mxu0 0.0
      %729 = vmatpush2.msra.mxu0 0.0
      %730 = vmatprep.subr.mxu0 0.0
      %731 = vmatpush2.msra.mxu0 0.0
      %732 = vmatprep.subr.mxu0 0.0
      %733 = vmatpush2.msra.mxu0 0.0
      %734 = vmatprep.subr.mxu0 0.0
      %735 = vmatpush2.msra.mxu0 0.0
      %736 = vmatprep.subr.mxu0 0.0
      %737 = vmatpush2.msra.mxu0 0.0
      %738 = vmatprep.subr.mxu0 0.0
      %739 = vmatpush2.msra.mxu0 0.0
      %740 = vmatprep.subr.mxu0 0.0
      %741 = vmatpush2.msra.mxu0 0.0
      %742 = vmatprep.subr.mxu0 0.0
      %743 = vmatpush2.msra.mxu0 0.0
      %744 = vmatprep.subr.mxu0 0.0
      %745 = vmatpush2.msra.mxu0 0.0
      %746 = vmatprep.subr.mxu0 0.0
      %747 = vmatpush2.msra.mxu0 0.0
      %748 = vmatprep.subr.mxu0 0.0
      %749 = vmatpush2.msra.mxu0 0.0
      %750 = vmatprep.subr.mxu0 0.0
      %751 = vmatpush2.msra.mxu0 0.0
      %752 = vmatprep.subr.mxu0 0.0
      %753 = vmatpush2.msra.mxu0 0.0
      %754 = vmatprep.subr.mxu0 0.0
      %755 = vmatpush2.msra.mxu0 0.0
      %756 = vmatprep.mubr.f32.mxu0 0.0
      %757 = vmatmul.mubr.f32.gmra.mxu0 %v477
      %v758 = vpop.f32.mrf.mxu0
      %v759 = vadd.f32 %v462, %v758
      %v760 = vpop.f32.mrf.mxu0
      %v761 = vadd.f32 %v466, %v760
      %762 = vdwg.mxu0
      %v763 = vld [vmem:[%s3] sm:$0xff]
      %v764 = vld [vmem:[%s3 + $0x8] sm:$0xff]
      %v765 = vld [vmem:[%s3 + $0x10] sm:$0xff]
      %v766 = vld [vmem:[%s3 + $0x18] sm:$0xff]
      %v767 = vld [vmem:[%s3 + $0x20] sm:$0xff]
      %v768 = vld [vmem:[%s3 + $0x28] sm:$0xff]
      %v769 = vld [vmem:[%s3 + $0x30] sm:$0xff]
      %v770 = vld [vmem:[%s3 + $0x38] sm:$0xff]
      %v771 = vld [vmem:[%s3 + $0x40] sm:$0xff]
      %v772 = vld [vmem:[%s3 + $0x48] sm:$0xff]
      %v773 = vld [vmem:[%s3 + $0x50] sm:$0xff]
      %v774 = vld [vmem:[%s3 + $0x58] sm:$0xff]
      %v775 = vld [vmem:[%s3 + $0x60] sm:$0xff]
      %v776 = vld [vmem:[%s3 + $0x68] sm:$0xff]
      %v777 = vld [vmem:[%s3 + $0x70] sm:$0xff]
      %v778 = vld [vmem:[%s3 + $0x78] sm:$0xff]
      %v779 = vld [vmem:[%s3 + $0x80] sm:$0xff]
      %v780 = vld [vmem:[%s3 + $0x88] sm:$0xff]
      %v781 = vld [vmem:[%s3 + $0x90] sm:$0xff]
      %v782 = vld [vmem:[%s3 + $0x98] sm:$0xff]
      %v783 = vld [vmem:[%s3 + $0xa0] sm:$0xff]
      %v784 = vld [vmem:[%s3 + $0xa8] sm:$0xff]
      %v785 = vld [vmem:[%s3 + $0xb0] sm:$0xff]
      %v786 = vld [vmem:[%s3 + $0xb8] sm:$0xff]
      %v787 = vld [vmem:[%s3 + $0xc0] sm:$0xff]
      %v788 = vld [vmem:[%s3 + $0xc8] sm:$0xff]
      %v789 = vld [vmem:[%s3 + $0xd0] sm:$0xff]
      %v790 = vld [vmem:[%s3 + $0xd8] sm:$0xff]
      %v791 = vld [vmem:[%s3 + $0xe0] sm:$0xff]
      %v792 = vld [vmem:[%s3 + $0xe8] sm:$0xff]
      %v793 = vld [vmem:[%s3 + $0xf0] sm:$0xff]
      %v794 = vld [vmem:[%s3 + $0xf8] sm:$0xff]
      %v795 = vld [vmem:[%s3 + $0x100] sm:$0xff]
      %v796 = vld [vmem:[%s3 + $0x108] sm:$0xff]
      %v797 = vld [vmem:[%s3 + $0x110] sm:$0xff]
      %v798 = vld [vmem:[%s3 + $0x118] sm:$0xff]
      %v799 = vld [vmem:[%s3 + $0x120] sm:$0xff]
      %v800 = vld [vmem:[%s3 + $0x128] sm:$0xff]
      %v801 = vld [vmem:[%s3 + $0x130] sm:$0xff]
      %v802 = vld [vmem:[%s3 + $0x138] sm:$0xff]
      %v803 = vld [vmem:[%s3 + $0x140] sm:$0xff]
      %v804 = vld [vmem:[%s3 + $0x148] sm:$0xff]
      %v805 = vld [vmem:[%s3 + $0x150] sm:$0xff]
      %v806 = vld [vmem:[%s3 + $0x158] sm:$0xff]
      %v807 = vld [vmem:[%s3 + $0x160] sm:$0xff]
      %v808 = vld [vmem:[%s3 + $0x168] sm:$0xff]
      %v809 = vld [vmem:[%s3 + $0x170] sm:$0xff]
      %v810 = vld [vmem:[%s3 + $0x178] sm:$0xff]
      %v811 = vld [vmem:[%s3 + $0x180] sm:$0xff]
      %v812 = vld [vmem:[%s3 + $0x188] sm:$0xff]
      %v813 = vld [vmem:[%s3 + $0x190] sm:$0xff]
      %v814 = vld [vmem:[%s3 + $0x198] sm:$0xff]
      %v815 = vld [vmem:[%s3 + $0x1a0] sm:$0xff]
      %v816 = vld [vmem:[%s3 + $0x1a8] sm:$0xff]
      %v817 = vld [vmem:[%s3 + $0x1b0] sm:$0xff]
      %v818 = vld [vmem:[%s3 + $0x1b8] sm:$0xff]
      %v819 = vld [vmem:[%s3 + $0x1c0] sm:$0xff]
      %v820 = vld [vmem:[%s3 + $0x1c8] sm:$0xff]
      %v821 = vld [vmem:[%s3 + $0x1d0] sm:$0xff]
      %v822 = vld [vmem:[%s3 + $0x1d8] sm:$0xff]
      %v823 = vld [vmem:[%s3 + $0x1e0] sm:$0xff]
      %v824 = vld [vmem:[%s3 + $0x1e8] sm:$0xff]
      %v825 = vld [vmem:[%s3 + $0x1f0] sm:$0xff]
      %v826 = vld [vmem:[%s3 + $0x1f8] sm:$0xff]
      %v827 = vld [vmem:[%s3 + $0x200] sm:$0xff]
      %v828 = vld [vmem:[%s3 + $0x208] sm:$0xff]
      %v829 = vld [vmem:[%s3 + $0x210] sm:$0xff]
      %v830 = vld [vmem:[%s3 + $0x218] sm:$0xff]
      %v831 = vld [vmem:[%s3 + $0x220] sm:$0xff]
      %v832 = vld [vmem:[%s3 + $0x228] sm:$0xff]
      %v833 = vld [vmem:[%s3 + $0x230] sm:$0xff]
      %v834 = vld [vmem:[%s3 + $0x238] sm:$0xff]
      %v835 = vld [vmem:[%s3 + $0x240] sm:$0xff]
      %v836 = vld [vmem:[%s3 + $0x248] sm:$0xff]
      %v837 = vld [vmem:[%s3 + $0x250] sm:$0xff]
      %v838 = vld [vmem:[%s3 + $0x258] sm:$0xff]
      %v839 = vld [vmem:[%s3 + $0x260] sm:$0xff]
      %v840 = vld [vmem:[%s3 + $0x268] sm:$0xff]
      %v841 = vld [vmem:[%s3 + $0x270] sm:$0xff]
      %v842 = vld [vmem:[%s3 + $0x278] sm:$0xff]
      %v843 = vld [vmem:[%s3 + $0x280] sm:$0xff]
      %v844 = vld [vmem:[%s3 + $0x288] sm:$0xff]
      %v845 = vld [vmem:[%s3 + $0x290] sm:$0xff]
      %v846 = vld [vmem:[%s3 + $0x298] sm:$0xff]
      %v847 = vld [vmem:[%s3 + $0x2a0] sm:$0xff]
      %v848 = vld [vmem:[%s3 + $0x2a8] sm:$0xff]
      %v849 = vld [vmem:[%s3 + $0x2b0] sm:$0xff]
      %v850 = vld [vmem:[%s3 + $0x2b8] sm:$0xff]
      %v851 = vld [vmem:[%s3 + $0x2c0] sm:$0xff]
      %v852 = vld [vmem:[%s3 + $0x2c8] sm:$0xff]
      %v853 = vld [vmem:[%s3 + $0x2d0] sm:$0xff]
      %v854 = vld [vmem:[%s3 + $0x2d8] sm:$0xff]
      %v855 = vld [vmem:[%s3 + $0x2e0] sm:$0xff]
      %v856 = vld [vmem:[%s3 + $0x2e8] sm:$0xff]
      %v857 = vld [vmem:[%s3 + $0x2f0] sm:$0xff]
      %v858 = vld [vmem:[%s3 + $0x2f8] sm:$0xff]
      %v859 = vld [vmem:[%s3 + $0x300] sm:$0xff]
      %v860 = vld [vmem:[%s3 + $0x308] sm:$0xff]
      %v861 = vld [vmem:[%s3 + $0x310] sm:$0xff]
      %v862 = vld [vmem:[%s3 + $0x318] sm:$0xff]
      %v863 = vld [vmem:[%s3 + $0x320] sm:$0xff]
      %v864 = vld [vmem:[%s3 + $0x328] sm:$0xff]
      %v865 = vld [vmem:[%s3 + $0x330] sm:$0xff]
      %v866 = vld [vmem:[%s3 + $0x338] sm:$0xff]
      %v867 = vld [vmem:[%s3 + $0x340] sm:$0xff]
      %v868 = vld [vmem:[%s3 + $0x348] sm:$0xff]
      %v869 = vld [vmem:[%s3 + $0x350] sm:$0xff]
      %v870 = vld [vmem:[%s3 + $0x358] sm:$0xff]
      %v871 = vld [vmem:[%s3 + $0x360] sm:$0xff]
      %v872 = vld [vmem:[%s3 + $0x368] sm:$0xff]
      %v873 = vld [vmem:[%s3 + $0x370] sm:$0xff]
      %v874 = vld [vmem:[%s3 + $0x378] sm:$0xff]
      %v875 = vld [vmem:[%s3 + $0x380] sm:$0xff]
      %v876 = vld [vmem:[%s3 + $0x388] sm:$0xff]
      %v877 = vld [vmem:[%s3 + $0x390] sm:$0xff]
      %v878 = vld [vmem:[%s3 + $0x398] sm:$0xff]
      %v879 = vld [vmem:[%s3 + $0x3a0] sm:$0xff]
      %v880 = vld [vmem:[%s3 + $0x3a8] sm:$0xff]
      %v881 = vld [vmem:[%s3 + $0x3b0] sm:$0xff]
      %v882 = vld [vmem:[%s3 + $0x3b8] sm:$0xff]
      %v883 = vld [vmem:[%s3 + $0x3c0] sm:$0xff]
      %v884 = vld [vmem:[%s3 + $0x3c8] sm:$0xff]
      %v885 = vld [vmem:[%s3 + $0x3d0] sm:$0xff]
      %v886 = vld [vmem:[%s3 + $0x3d8] sm:$0xff]
      %v887 = vld [vmem:[%s3 + $0x3e0] sm:$0xff]
      %v888 = vld [vmem:[%s4] sm:$0x1]
      %v890 = vlaneseq
      %v891 = vshrl.u32 %v890, 7
      %v892 = vsub.s32 0, %v891
      %v893 = vrot.slane %v888, %v892
      %vm895 = vcmask 850944
      %v897 = vsel %vm895, %v761, 0
      %899 = vmatprep.subr.mxu0 0.0
      %900 = vmatpush1.msra.mxu0 %v778
      %901 = vmatprep.subr.mxu0 0.0
      %902 = vmatpush1.msra.mxu0 %v777
      %903 = vmatprep.subr.mxu0 0.0
      %904 = vmatpush1.msra.mxu0 %v776
      %905 = vmatprep.subr.mxu0 0.0
      %906 = vmatpush1.msra.mxu0 %v775
      %907 = vmatprep.subr.mxu0 0.0
      %908 = vmatpush1.msra.mxu0 %v774
      %909 = vmatprep.subr.mxu0 0.0
      %910 = vmatpush1.msra.mxu0 %v773
      %911 = vmatprep.subr.mxu0 0.0
      %912 = vmatpush1.msra.mxu0 %v772
      %913 = vmatprep.subr.mxu0 0.0
      %914 = vmatpush1.msra.mxu0 %v771
      %915 = vmatprep.subr.mxu0 0.0
      %916 = vmatpush1.msra.mxu0 %v770
      %917 = vmatprep.subr.mxu0 0.0
      %918 = vmatpush1.msra.mxu0 %v769
      %919 = vmatprep.subr.mxu0 0.0
      %920 = vmatpush1.msra.mxu0 %v768
      %921 = vmatprep.subr.mxu0 0.0
      %922 = vmatpush1.msra.mxu0 %v767
      %923 = vmatprep.subr.mxu0 0.0
      %924 = vmatpush1.msra.mxu0 %v766
      %925 = vmatprep.subr.mxu0 0.0
      %926 = vmatpush1.msra.mxu0 %v765
      %927 = vmatprep.subr.mxu0 0.0
      %928 = vmatpush1.msra.mxu0 %v764
      %929 = vmatprep.subr.mxu0 0.0
      %930 = vmatpush1.msra.mxu0 %v763
      %931 = vmatprep.subr.mxu0 0.0
      %932 = vmatpush2.msra.mxu0 %v794
      %933 = vmatprep.subr.mxu0 0.0
      %934 = vmatpush2.msra.mxu0 %v793
      %935 = vmatprep.subr.mxu0 0.0
      %936 = vmatpush2.msra.mxu0 %v792
      %937 = vmatprep.subr.mxu0 0.0
      %938 = vmatpush2.msra.mxu0 %v791
      %939 = vmatprep.subr.mxu0 0.0
      %940 = vmatpush2.msra.mxu0 %v790
      %941 = vmatprep.subr.mxu0 0.0
      %942 = vmatpush2.msra.mxu0 %v789
      %943 = vmatprep.subr.mxu0 0.0
      %944 = vmatpush2.msra.mxu0 %v788
      %945 = vmatprep.subr.mxu0 0.0
      %946 = vmatpush2.msra.mxu0 %v787
      %947 = vmatprep.subr.mxu0 0.0
      %948 = vmatpush2.msra.mxu0 %v786
      %949 = vmatprep.subr.mxu0 0.0
      %950 = vmatpush2.msra.mxu0 %v785
      %951 = vmatprep.subr.mxu0 0.0
      %952 = vmatpush2.msra.mxu0 %v784
      %953 = vmatprep.subr.mxu0 0.0
      %954 = vmatpush2.msra.mxu0 %v783
      %955 = vmatprep.subr.mxu0 0.0
      %956 = vmatpush2.msra.mxu0 %v782
      %957 = vmatprep.subr.mxu0 0.0
      %958 = vmatpush2.msra.mxu0 %v781
      %959 = vmatprep.subr.mxu0 0.0
      %960 = vmatpush2.msra.mxu0 %v780
      %961 = vmatprep.subr.mxu0 0.0
      %962 = vmatpush2.msra.mxu0 %v779
      %963 = vmatprep.mubr.f32.mxu0 %v548
      %964 = vmatmul.mubr.f32.gmra.mxu0 %v546
      %v965 = vpop.f32.mrf.mxu0
      %v966 = vadd.f32 %v893, %v965
      %v967 = vpop.f32.mrf.mxu0
      %968 = vdwg.mxu0
      %969 = vmatprep.subr.mxu0 0.0
      %970 = vmatpush1.msra.mxu0 %v810
      %971 = vmatprep.subr.mxu0 0.0
      %972 = vmatpush1.msra.mxu0 %v809
      %973 = vmatprep.subr.mxu0 0.0
      %974 = vmatpush1.msra.mxu0 %v808
      %975 = vmatprep.subr.mxu0 0.0
      %976 = vmatpush1.msra.mxu0 %v807
      %977 = vmatprep.subr.mxu0 0.0
      %978 = vmatpush1.msra.mxu0 %v806
      %979 = vmatprep.subr.mxu0 0.0
      %980 = vmatpush1.msra.mxu0 %v805
      %981 = vmatprep.subr.mxu0 0.0
      %982 = vmatpush1.msra.mxu0 %v804
      %983 = vmatprep.subr.mxu0 0.0
      %984 = vmatpush1.msra.mxu0 %v803
      %985 = vmatprep.subr.mxu0 0.0
      %986 = vmatpush1.msra.mxu0 %v802
      %987 = vmatprep.subr.mxu0 0.0
      %988 = vmatpush1.msra.mxu0 %v801
      %989 = vmatprep.subr.mxu0 0.0
      %990 = vmatpush1.msra.mxu0 %v800
      %991 = vmatprep.subr.mxu0 0.0
      %992 = vmatpush1.msra.mxu0 %v799
      %993 = vmatprep.subr.mxu0 0.0
      %994 = vmatpush1.msra.mxu0 %v798
      %995 = vmatprep.subr.mxu0 0.0
      %996 = vmatpush1.msra.mxu0 %v797
      %997 = vmatprep.subr.mxu0 0.0
      %998 = vmatpush1.msra.mxu0 %v796
      %999 = vmatprep.subr.mxu0 0.0
      %1000 = vmatpush1.msra.mxu0 %v795
      %1001 = vmatprep.subr.mxu0 0.0
      %1002 = vmatpush2.msra.mxu0 %v826
      %1003 = vmatprep.subr.mxu0 0.0
      %1004 = vmatpush2.msra.mxu0 %v825
      %1005 = vmatprep.subr.mxu0 0.0
      %1006 = vmatpush2.msra.mxu0 %v824
      %1007 = vmatprep.subr.mxu0 0.0
      %1008 = vmatpush2.msra.mxu0 %v823
      %1009 = vmatprep.subr.mxu0 0.0
      %1010 = vmatpush2.msra.mxu0 %v822
      %1011 = vmatprep.subr.mxu0 0.0
      %1012 = vmatpush2.msra.mxu0 %v821
      %1013 = vmatprep.subr.mxu0 0.0
      %1014 = vmatpush2.msra.mxu0 %v820
      %1015 = vmatprep.subr.mxu0 0.0
      %1016 = vmatpush2.msra.mxu0 %v819
      %1017 = vmatprep.subr.mxu0 0.0
      %1018 = vmatpush2.msra.mxu0 %v818
      %1019 = vmatprep.subr.mxu0 0.0
      %1020 = vmatpush2.msra.mxu0 %v817
      %1021 = vmatprep.subr.mxu0 0.0
      %1022 = vmatpush2.msra.mxu0 %v816
      %1023 = vmatprep.subr.mxu0 0.0
      %1024 = vmatpush2.msra.mxu0 %v815
      %1025 = vmatprep.subr.mxu0 0.0
      %1026 = vmatpush2.msra.mxu0 %v814
      %1027 = vmatprep.subr.mxu0 0.0
      %1028 = vmatpush2.msra.mxu0 %v813
      %1029 = vmatprep.subr.mxu0 0.0
      %1030 = vmatpush2.msra.mxu0 %v812
      %1031 = vmatprep.subr.mxu0 0.0
      %1032 = vmatpush2.msra.mxu0 %v811
      %1033 = vmatprep.mubr.f32.mxu0 %v619
      %1034 = vmatmul.mubr.f32.gmra.mxu0 %v617
      %v1035 = vpop.f32.mrf.mxu0
      %v1036 = vadd.f32 %v966, %v1035
      %v1037 = vpop.f32.mrf.mxu0
      %1038 = vdwg.mxu0
      %1039 = vmatprep.subr.mxu0 0.0
      %1040 = vmatpush1.msra.mxu0 %v842
      %1041 = vmatprep.subr.mxu0 0.0
      %1042 = vmatpush1.msra.mxu0 %v841
      %1043 = vmatprep.subr.mxu0 0.0
      %1044 = vmatpush1.msra.mxu0 %v840
      %1045 = vmatprep.subr.mxu0 0.0
      %1046 = vmatpush1.msra.mxu0 %v839
      %1047 = vmatprep.subr.mxu0 0.0
      %1048 = vmatpush1.msra.mxu0 %v838
      %1049 = vmatprep.subr.mxu0 0.0
      %1050 = vmatpush1.msra.mxu0 %v837
      %1051 = vmatprep.subr.mxu0 0.0
      %1052 = vmatpush1.msra.mxu0 %v836
      %1053 = vmatprep.subr.mxu0 0.0
      %1054 = vmatpush1.msra.mxu0 %v835
      %1055 = vmatprep.subr.mxu0 0.0
      %1056 = vmatpush1.msra.mxu0 %v834
      %1057 = vmatprep.subr.mxu0 0.0
      %1058 = vmatpush1.msra.mxu0 %v833
      %1059 = vmatprep.subr.mxu0 0.0
      %1060 = vmatpush1.msra.mxu0 %v832
      %1061 = vmatprep.subr.mxu0 0.0
      %1062 = vmatpush1.msra.mxu0 %v831
      %1063 = vmatprep.subr.mxu0 0.0
      %1064 = vmatpush1.msra.mxu0 %v830
      %1065 = vmatprep.subr.mxu0 0.0
      %1066 = vmatpush1.msra.mxu0 %v829
      %1067 = vmatprep.subr.mxu0 0.0
      %1068 = vmatpush1.msra.mxu0 %v828
      %1069 = vmatprep.subr.mxu0 0.0
      %1070 = vmatpush1.msra.mxu0 %v827
      %1071 = vmatprep.subr.mxu0 0.0
      %1072 = vmatpush2.msra.mxu0 %v858
      %1073 = vmatprep.subr.mxu0 0.0
      %1074 = vmatpush2.msra.mxu0 %v857
      %1075 = vmatprep.subr.mxu0 0.0
      %1076 = vmatpush2.msra.mxu0 %v856
      %1077 = vmatprep.subr.mxu0 0.0
      %1078 = vmatpush2.msra.mxu0 %v855
      %1079 = vmatprep.subr.mxu0 0.0
      %1080 = vmatpush2.msra.mxu0 %v854
      %1081 = vmatprep.subr.mxu0 0.0
      %1082 = vmatpush2.msra.mxu0 %v853
      %1083 = vmatprep.subr.mxu0 0.0
      %1084 = vmatpush2.msra.mxu0 %v852
      %1085 = vmatprep.subr.mxu0 0.0
      %1086 = vmatpush2.msra.mxu0 %v851
      %1087 = vmatprep.subr.mxu0 0.0
      %1088 = vmatpush2.msra.mxu0 %v850
      %1089 = vmatprep.subr.mxu0 0.0
      %1090 = vmatpush2.msra.mxu0 %v849
      %1091 = vmatprep.subr.mxu0 0.0
      %1092 = vmatpush2.msra.mxu0 %v848
      %1093 = vmatprep.subr.mxu0 0.0
      %1094 = vmatpush2.msra.mxu0 %v847
      %1095 = vmatprep.subr.mxu0 0.0
      %1096 = vmatpush2.msra.mxu0 %v846
      %1097 = vmatprep.subr.mxu0 0.0
      %1098 = vmatpush2.msra.mxu0 %v845
      %1099 = vmatprep.subr.mxu0 0.0
      %1100 = vmatpush2.msra.mxu0 %v844
      %1101 = vmatprep.subr.mxu0 0.0
      %1102 = vmatpush2.msra.mxu0 %v843
      %1103 = vmatprep.mubr.f32.mxu0 %v690
      %1104 = vmatmul.mubr.f32.gmra.mxu0 %v688
      %v1105 = vpop.f32.mrf.mxu0
      %v1106 = vadd.f32 %v1036, %v1105
      %v1107 = vpop.f32.mrf.mxu0
      %1108 = vdwg.mxu0
      %1109 = vmatprep.subr.mxu0 0.0
      %1110 = vmatpush1.msra.mxu0 %v874
      %1111 = vmatprep.subr.mxu0 0.0
      %1112 = vmatpush1.msra.mxu0 %v873
      %1113 = vmatprep.subr.mxu0 0.0
      %1114 = vmatpush1.msra.mxu0 %v872
      %1115 = vmatprep.subr.mxu0 0.0
      %1116 = vmatpush1.msra.mxu0 %v871
      %1117 = vmatprep.subr.mxu0 0.0
      %1118 = vmatpush1.msra.mxu0 %v870
      %1119 = vmatprep.subr.mxu0 0.0
      %1120 = vmatpush1.msra.mxu0 %v869
      %1121 = vmatprep.subr.mxu0 0.0
      %1122 = vmatpush1.msra.mxu0 %v868
      %1123 = vmatprep.subr.mxu0 0.0
      %1124 = vmatpush1.msra.mxu0 %v867
      %1125 = vmatprep.subr.mxu0 0.0
      %1126 = vmatpush1.msra.mxu0 %v866
      %1127 = vmatprep.subr.mxu0 0.0
      %1128 = vmatpush1.msra.mxu0 %v865
      %1129 = vmatprep.subr.mxu0 0.0
      %1130 = vmatpush1.msra.mxu0 %v864
      %1131 = vmatprep.subr.mxu0 0.0
      %1132 = vmatpush1.msra.mxu0 %v863
      %1133 = vmatprep.subr.mxu0 0.0
      %1134 = vmatpush1.msra.mxu0 %v862
      %1135 = vmatprep.subr.mxu0 0.0
      %1136 = vmatpush1.msra.mxu0 %v861
      %1137 = vmatprep.subr.mxu0 0.0
      %1138 = vmatpush1.msra.mxu0 %v860
      %1139 = vmatprep.subr.mxu0 0.0
      %1140 = vmatpush1.msra.mxu0 %v859
      %1141 = vmatprep.subr.mxu0 0.0
      %1142 = vmatpush2.msra.mxu0 0.0
      %1143 = vmatprep.subr.mxu0 0.0
      %1144 = vmatpush2.msra.mxu0 0.0
      %1145 = vmatprep.subr.mxu0 0.0
      %1146 = vmatpush2.msra.mxu0 0.0
      %1147 = vmatprep.subr.mxu0 0.0
      %1148 = vmatpush2.msra.mxu0 %v887
      %1149 = vmatprep.subr.mxu0 0.0
      %1150 = vmatpush2.msra.mxu0 %v886
      %1151 = vmatprep.subr.mxu0 0.0
      %1152 = vmatpush2.msra.mxu0 %v885
      %1153 = vmatprep.subr.mxu0 0.0
      %1154 = vmatpush2.msra.mxu0 %v884
      %1155 = vmatprep.subr.mxu0 0.0
      %1156 = vmatpush2.msra.mxu0 %v883
      %1157 = vmatprep.subr.mxu0 0.0
      %1158 = vmatpush2.msra.mxu0 %v882
      %1159 = vmatprep.subr.mxu0 0.0
      %1160 = vmatpush2.msra.mxu0 %v881
      %1161 = vmatprep.subr.mxu0 0.0
      %1162 = vmatpush2.msra.mxu0 %v880
      %1163 = vmatprep.subr.mxu0 0.0
      %1164 = vmatpush2.msra.mxu0 %v879
      %1165 = vmatprep.subr.mxu0 0.0
      %1166 = vmatpush2.msra.mxu0 %v878
      %1167 = vmatprep.subr.mxu0 0.0
      %1168 = vmatpush2.msra.mxu0 %v877
      %1169 = vmatprep.subr.mxu0 0.0
      %1170 = vmatpush2.msra.mxu0 %v876
      %1171 = vmatprep.subr.mxu0 0.0
      %1172 = vmatpush2.msra.mxu0 %v875
      %1173 = vmatprep.mubr.f32.mxu0 %v897
      %1174 = vmatmul.mubr.f32.gmra.mxu0 %v759
      %v1175 = vpop.f32.mrf.mxu0
      %v1176 = vadd.f32 %v1106, %v1175
      %v1177 = vpop.f32.mrf.mxu0
      %1178 = vdwg.mxu0
      %v1179 = vtanh.pop %v1176
      %v1180 = vld [vmem:[%s5] sm:$0x1]
      %v1182 = vlaneseq
      %v1183 = vshrl.u32 %v1182, 7
      %v1184 = vsub.s32 0, %v1183
      %v1185 = vrot.slane %v1180, %v1184
      %v1187 = vmul.f32 %v1179, %v1185
      %vm1188 = vcmask 1043456
      %v1189 = vsel %vm1188, %v1187, 0.0
      %1190 = vadd.xlane.f32.xlu0 %v1189
      %v1191 = vpop.xlane.xlu0 %1190
      %v1192 = vld [vmem:[%s6] sm:$0x1]
      %v1194 = vlaneseq
      %v1195 = vshrl.u32 %v1194, 7
      %v1196 = vsub.s32 0, %v1195
      %v1197 = vrot.slane %v1192, %v1196
      %v1199 = vadd.f32 %v1191, %v1197
      %vm1200 = vcmask 3072
      %v1201 = vsel %vm1200, %v1199, -inf
      %v1202 = vrot.slane %v1201, 4
      %v1203 = vmax.f32 %v1201, %v1202
      %v1204 = vrot.slane %v1203, 2
      %v1205 = vmax.f32 %v1203, %v1204
      %v1206 = vrot.slane %v1205, 1
      %v1207 = vmax.f32 %v1205, %v1206
      %v1208 = vsub.f32 %v1199, %v1207
      %v1209 = vmul.f32 %v1208, 1.442695
      %v1210 = vpow.pop %v1209
      %v1211 = vsel %vm1200, %v1210, 0.0
      %v1212 = vrot.slane %v1211, 4
      %v1213 = vadd.f32 %v1211, %v1212
      %v1214 = vrot.slane %v1213, 2
      %v1215 = vadd.f32 %v1213, %v1214
      %v1216 = vrot.slane %v1215, 1
      %v1217 = vadd.f32 %v1215, %v1216
      %v1218 = vrcp.pop %v1217
      %v1219 = vmul.f32 %v1210, %v1218
      %1221 = vset.pattern.permute.xlu0 0
      %1222 = vperm.xlu0 %1221, %v1219
      %v1223 = vpop.permute.xlu0 %1222
      %v1225 = vmul.f32 %v1223, %v546
      %v1226 = vmul.f32 %v1223, %v548
      %v1227 = vmul.f32 %v1223, %v617
      %v1228 = vmul.f32 %v1223, %v619
      %v1229 = vmul.f32 %v1223, %v688
      %v1230 = vmul.f32 %v1223, %v690
      %v1231 = vmul.f32 %v1223, %v759
      %v1232 = vmul.f32 %v1223, %v761
      %v1233 = vsel %vm1188, %v1225, 0.0
      %v1234 = vrot.slane %v1233, 4
      %v1235 = vadd.f32 %v1233, %v1234
      %v1236 = vrot.slane %v1235, 2
      %v1237 = vadd.f32 %v1235, %v1236
      %v1238 = vrot.slane %v1237, 1
      %v1239 = vadd.f32 %v1237, %v1238
      %v1240 = vsel %vm1188, %v1226, 0.0
      %v1241 = vrot.slane %v1240, 4
      %v1242 = vadd.f32 %v1240, %v1241
      %v1243 = vrot.slane %v1242, 2
      %v1244 = vadd.f32 %v1242, %v1243
      %v1245 = vrot.slane %v1244, 1
      %v1246 = vadd.f32 %v1244, %v1245
      %v1247 = vsel %vm1188, %v1227, 0.0
      %v1248 = vrot.slane %v1247, 4
      %v1249 = vadd.f32 %v1247, %v1248
      %v1250 = vrot.slane %v1249, 2
      %v1251 = vadd.f32 %v1249, %v1250
      %v1252 = vrot.slane %v1251, 1
      %v1253 = vadd.f32 %v1251, %v1252
      %v1254 = vsel %vm1188, %v1228, 0.0
      %v1255 = vrot.slane %v1254, 4
      %v1256 = vadd.f32 %v1254, %v1255
      %v1257 = vrot.slane %v1256, 2
      %v1258 = vadd.f32 %v1256, %v1257
      %v1259 = vrot.slane %v1258, 1
      %v1260 = vadd.f32 %v1258, %v1259
      %v1261 = vsel %vm1188, %v1229, 0.0
      %v1262 = vrot.slane %v1261, 4
      %v1263 = vadd.f32 %v1261, %v1262
      %v1264 = vrot.slane %v1263, 2
      %v1265 = vadd.f32 %v1263, %v1264
      %v1266 = vrot.slane %v1265, 1
      %v1267 = vadd.f32 %v1265, %v1266
      %v1268 = vsel %vm1188, %v1230, 0.0
      %v1269 = vrot.slane %v1268, 4
      %v1270 = vadd.f32 %v1268, %v1269
      %v1271 = vrot.slane %v1270, 2
      %v1272 = vadd.f32 %v1270, %v1271
      %v1273 = vrot.slane %v1272, 1
      %v1274 = vadd.f32 %v1272, %v1273
      %v1275 = vsel %vm1188, %v1231, 0.0
      %v1276 = vrot.slane %v1275, 4
      %v1277 = vadd.f32 %v1275, %v1276
      %v1278 = vrot.slane %v1277, 2
      %v1279 = vadd.f32 %v1277, %v1278
      %v1280 = vrot.slane %v1279, 1
      %v1281 = vadd.f32 %v1279, %v1280
      %vm1282 = vcmask 846848
      %v1283 = vsel %vm1282, %v1232, 0.0
      %v1284 = vrot.slane %v1283, 4
      %v1285 = vadd.f32 %v1283, %v1284
      %v1286 = vrot.slane %v1285, 2
      %v1287 = vadd.f32 %v1285, %v1286
      %v1288 = vrot.slane %v1287, 1
      %v1289 = vadd.f32 %v1287, %v1288
      %v1290 = vld [vmem:[%s7] sm:$0xff]
      %v1292 = vlaneseq
      %v1293 = vshrl.u32 %v1292, 7
      %v1294 = vsub.s32 0, %v1293
      %v1295 = vrot.slane %v1290, %v1294
      %v1296 = vlaneseq
      %v1297 = vshrl.u32 %v1296, 7
      %v1298 = vsub.s32 1, %v1297
      %v1299 = vrot.slane %v1290, %v1298
      %v1300 = vlaneseq
      %v1301 = vshrl.u32 %v1300, 7
      %v1302 = vsub.s32 2, %v1301
      %v1303 = vrot.slane %v1290, %v1302
      %v1304 = vlaneseq
      %v1305 = vshrl.u32 %v1304, 7
      %v1306 = vsub.s32 3, %v1305
      %v1307 = vrot.slane %v1290, %v1306
      %v1308 = vlaneseq
      %v1309 = vshrl.u32 %v1308, 7
      %v1310 = vsub.s32 4, %v1309
      %v1311 = vrot.slane %v1290, %v1310
      %v1312 = vlaneseq
      %v1313 = vshrl.u32 %v1312, 7
      %v1314 = vsub.s32 5, %v1313
      %v1315 = vrot.slane %v1290, %v1314
      %v1316 = vlaneseq
      %v1317 = vshrl.u32 %v1316, 7
      %v1318 = vsub.s32 6, %v1317
      %v1319 = vrot.slane %v1290, %v1318
      %v1320 = vlaneseq
      %v1321 = vshrl.u32 %v1320, 7
      %v1322 = vsub.s32 7, %v1321
      %v1323 = vrot.slane %v1290, %v1322
      %v1332 = vmul.f32 %v1239, %v1295
      %v1333 = vmul.f32 %v1246, %v1299
      %v1334 = vmul.f32 %v1253, %v1303
      %v1335 = vmul.f32 %v1260, %v1307
      %v1336 = vmul.f32 %v1267, %v1311
      %v1337 = vmul.f32 %v1274, %v1315
      %v1338 = vmul.f32 %v1281, %v1319
      %v1339 = vmul.f32 %v1289, %v1323
      %vm1340 = vcmask 1040384
      %v1341 = vsel %vm1340, %v1332, 0.0
      %v1342 = vsel %vm1340, %v1333, 0.0
      %v1343 = vadd.f32 %v1341, %v1342
      %v1344 = vsel %vm1340, %v1334, 0.0
      %v1345 = vadd.f32 %v1343, %v1344
      %v1346 = vsel %vm1340, %v1335, 0.0
      %v1347 = vadd.f32 %v1345, %v1346
      %v1348 = vsel %vm1340, %v1336, 0.0
      %v1349 = vadd.f32 %v1347, %v1348
      %v1350 = vsel %vm1340, %v1337, 0.0
      %v1351 = vadd.f32 %v1349, %v1350
      %v1352 = vsel %vm1340, %v1338, 0.0
      %v1353 = vadd.f32 %v1351, %v1352
      %vm1354 = vcmask 843776
      %v1355 = vsel %vm1354, %v1339, 0.0
      %v1356 = vadd.f32 %v1353, %v1355
      %1357 = vadd.xlane.f32.xlu0 %v1356
      %v1358 = vpop.xlane.xlu0 %1357
      %v1359 = vld [vmem:[%s8] sm:$0x1]
      %v1360 = vadd.f32 %v1358, %v1359
      %vm1361 = vcmask 0
      %1362 = vst.msk [vmem:[%s362] sm:$0x1] %vm1361, %v1360
      %1363 = vst.msk [vmem:[%s367] sm:$0xf] %vm1200, %v1219
      %s1364 = scalar_lea.vmem %s3, 1000
      %v1365 = vld [vmem:[%s1364] sm:$0xff]
      %v1366 = vld [vmem:[%s1364 + $0x8] sm:$0xff]
      %v1367 = vld [vmem:[%s1364 + $0x10] sm:$0xff]
      %v1368 = vld [vmem:[%s1364 + $0x18] sm:$0xff]
      %v1369 = vld [vmem:[%s1364 + $0x20] sm:$0xff]
      %v1370 = vld [vmem:[%s1364 + $0x28] sm:$0xff]
      %v1371 = vld [vmem:[%s1364 + $0x30] sm:$0xff]
      %v1372 = vld [vmem:[%s1364 + $0x38] sm:$0xff]
      %v1373 = vld [vmem:[%s1364 + $0x40] sm:$0xff]
      %v1374 = vld [vmem:[%s1364 + $0x48] sm:$0xff]
      %v1375 = vld [vmem:[%s1364 + $0x50] sm:$0xff]
      %v1376 = vld [vmem:[%s1364 + $0x58] sm:$0xff]
      %v1377 = vld [vmem:[%s1364 + $0x60] sm:$0xff]
      %v1378 = vld [vmem:[%s1364 + $0x68] sm:$0xff]
      %v1379 = vld [vmem:[%s1364 + $0x70] sm:$0xff]
      %v1380 = vld [vmem:[%s1364 + $0x78] sm:$0xff]
      %v1381 = vld [vmem:[%s1364 + $0x80] sm:$0xff]
      %v1382 = vld [vmem:[%s1364 + $0x88] sm:$0xff]
      %v1383 = vld [vmem:[%s1364 + $0x90] sm:$0xff]
      %v1384 = vld [vmem:[%s1364 + $0x98] sm:$0xff]
      %v1385 = vld [vmem:[%s1364 + $0xa0] sm:$0xff]
      %v1386 = vld [vmem:[%s1364 + $0xa8] sm:$0xff]
      %v1387 = vld [vmem:[%s1364 + $0xb0] sm:$0xff]
      %v1388 = vld [vmem:[%s1364 + $0xb8] sm:$0xff]
      %v1389 = vld [vmem:[%s1364 + $0xc0] sm:$0xff]
      %v1390 = vld [vmem:[%s1364 + $0xc8] sm:$0xff]
      %v1391 = vld [vmem:[%s1364 + $0xd0] sm:$0xff]
      %v1392 = vld [vmem:[%s1364 + $0xd8] sm:$0xff]
      %v1393 = vld [vmem:[%s1364 + $0xe0] sm:$0xff]
      %v1394 = vld [vmem:[%s1364 + $0xe8] sm:$0xff]
      %v1395 = vld [vmem:[%s1364 + $0xf0] sm:$0xff]
      %v1396 = vld [vmem:[%s1364 + $0xf8] sm:$0xff]
      %v1397 = vld [vmem:[%s1364 + $0x100] sm:$0xff]
      %v1398 = vld [vmem:[%s1364 + $0x108] sm:$0xff]
      %v1399 = vld [vmem:[%s1364 + $0x110] sm:$0xff]
      %v1400 = vld [vmem:[%s1364 + $0x118] sm:$0xff]
      %v1401 = vld [vmem:[%s1364 + $0x120] sm:$0xff]
      %v1402 = vld [vmem:[%s1364 + $0x128] sm:$0xff]
      %v1403 = vld [vmem:[%s1364 + $0x130] sm:$0xff]
      %v1404 = vld [vmem:[%s1364 + $0x138] sm:$0xff]
      %v1405 = vld [vmem:[%s1364 + $0x140] sm:$0xff]
      %v1406 = vld [vmem:[%s1364 + $0x148] sm:$0xff]
      %v1407 = vld [vmem:[%s1364 + $0x150] sm:$0xff]
      %v1408 = vld [vmem:[%s1364 + $0x158] sm:$0xff]
      %v1409 = vld [vmem:[%s1364 + $0x160] sm:$0xff]
      %v1410 = vld [vmem:[%s1364 + $0x168] sm:$0xff]
      %v1411 = vld [vmem:[%s1364 + $0x170] sm:$0xff]
      %v1412 = vld [vmem:[%s1364 + $0x178] sm:$0xff]
      %v1413 = vld [vmem:[%s1364 + $0x180] sm:$0xff]
      %v1414 = vld [vmem:[%s1364 + $0x188] sm:$0xff]
      %v1415 = vld [vmem:[%s1364 + $0x190] sm:$0xff]
      %v1416 = vld [vmem:[%s1364 + $0x198] sm:$0xff]
      %v1417 = vld [vmem:[%s1364 + $0x1a0] sm:$0xff]
      %v1418 = vld [vmem:[%s1364 + $0x1a8] sm:$0xff]
      %v1419 = vld [vmem:[%s1364 + $0x1b0] sm:$0xff]
      %v1420 = vld [vmem:[%s1364 + $0x1b8] sm:$0xff]
      %v1421 = vld [vmem:[%s1364 + $0x1c0] sm:$0xff]
      %v1422 = vld [vmem:[%s1364 + $0x1c8] sm:$0xff]
      %v1423 = vld [vmem:[%s1364 + $0x1d0] sm:$0xff]
      %v1424 = vld [vmem:[%s1364 + $0x1d8] sm:$0xff]
      %v1425 = vld [vmem:[%s1364 + $0x1e0] sm:$0xff]
      %v1426 = vld [vmem:[%s1364 + $0x1e8] sm:$0xff]
      %v1427 = vld [vmem:[%s1364 + $0x1f0] sm:$0xff]
      %v1428 = vld [vmem:[%s1364 + $0x1f8] sm:$0xff]
      %v1429 = vld [vmem:[%s1364 + $0x200] sm:$0xff]
      %v1430 = vld [vmem:[%s1364 + $0x208] sm:$0xff]
      %v1431 = vld [vmem:[%s1364 + $0x210] sm:$0xff]
      %v1432 = vld [vmem:[%s1364 + $0x218] sm:$0xff]
      %v1433 = vld [vmem:[%s1364 + $0x220] sm:$0xff]
      %v1434 = vld [vmem:[%s1364 + $0x228] sm:$0xff]
      %v1435 = vld [vmem:[%s1364 + $0x230] sm:$0xff]
      %v1436 = vld [vmem:[%s1364 + $0x238] sm:$0xff]
      %v1437 = vld [vmem:[%s1364 + $0x240] sm:$0xff]
      %v1438 = vld [vmem:[%s1364 + $0x248] sm:$0xff]
      %v1439 = vld [vmem:[%s1364 + $0x250] sm:$0xff]
      %v1440 = vld [vmem:[%s1364 + $0x258] sm:$0xff]
      %v1441 = vld [vmem:[%s1364 + $0x260] sm:$0xff]
      %v1442 = vld [vmem:[%s1364 + $0x268] sm:$0xff]
      %v1443 = vld [vmem:[%s1364 + $0x270] sm:$0xff]
      %v1444 = vld [vmem:[%s1364 + $0x278] sm:$0xff]
      %v1445 = vld [vmem:[%s1364 + $0x280] sm:$0xff]
      %v1446 = vld [vmem:[%s1364 + $0x288] sm:$0xff]
      %v1447 = vld [vmem:[%s1364 + $0x290] sm:$0xff]
      %v1448 = vld [vmem:[%s1364 + $0x298] sm:$0xff]
      %v1449 = vld [vmem:[%s1364 + $0x2a0] sm:$0xff]
      %v1450 = vld [vmem:[%s1364 + $0x2a8] sm:$0xff]
      %v1451 = vld [vmem:[%s1364 + $0x2b0] sm:$0xff]
      %v1452 = vld [vmem:[%s1364 + $0x2b8] sm:$0xff]
      %v1453 = vld [vmem:[%s1364 + $0x2c0] sm:$0xff]
      %v1454 = vld [vmem:[%s1364 + $0x2c8] sm:$0xff]
      %v1455 = vld [vmem:[%s1364 + $0x2d0] sm:$0xff]
      %v1456 = vld [vmem:[%s1364 + $0x2d8] sm:$0xff]
      %v1457 = vld [vmem:[%s1364 + $0x2e0] sm:$0xff]
      %v1458 = vld [vmem:[%s1364 + $0x2e8] sm:$0xff]
      %v1459 = vld [vmem:[%s1364 + $0x2f0] sm:$0xff]
      %v1460 = vld [vmem:[%s1364 + $0x2f8] sm:$0xff]
      %v1461 = vld [vmem:[%s1364 + $0x300] sm:$0xff]
      %v1462 = vld [vmem:[%s1364 + $0x308] sm:$0xff]
      %v1463 = vld [vmem:[%s1364 + $0x310] sm:$0xff]
      %v1464 = vld [vmem:[%s1364 + $0x318] sm:$0xff]
      %v1465 = vld [vmem:[%s1364 + $0x320] sm:$0xff]
      %v1466 = vld [vmem:[%s1364 + $0x328] sm:$0xff]
      %v1467 = vld [vmem:[%s1364 + $0x330] sm:$0xff]
      %v1468 = vld [vmem:[%s1364 + $0x338] sm:$0xff]
      %v1469 = vld [vmem:[%s1364 + $0x340] sm:$0xff]
      %v1470 = vld [vmem:[%s1364 + $0x348] sm:$0xff]
      %v1471 = vld [vmem:[%s1364 + $0x350] sm:$0xff]
      %v1472 = vld [vmem:[%s1364 + $0x358] sm:$0xff]
      %v1473 = vld [vmem:[%s1364 + $0x360] sm:$0xff]
      %v1474 = vld [vmem:[%s1364 + $0x368] sm:$0xff]
      %v1475 = vld [vmem:[%s1364 + $0x370] sm:$0xff]
      %v1476 = vld [vmem:[%s1364 + $0x378] sm:$0xff]
      %v1477 = vld [vmem:[%s1364 + $0x380] sm:$0xff]
      %v1478 = vld [vmem:[%s1364 + $0x388] sm:$0xff]
      %v1479 = vld [vmem:[%s1364 + $0x390] sm:$0xff]
      %v1480 = vld [vmem:[%s1364 + $0x398] sm:$0xff]
      %v1481 = vld [vmem:[%s1364 + $0x3a0] sm:$0xff]
      %v1482 = vld [vmem:[%s1364 + $0x3a8] sm:$0xff]
      %v1483 = vld [vmem:[%s1364 + $0x3b0] sm:$0xff]
      %v1484 = vld [vmem:[%s1364 + $0x3b8] sm:$0xff]
      %v1485 = vld [vmem:[%s1364 + $0x3c0] sm:$0xff]
      %v1486 = vld [vmem:[%s1364 + $0x3c8] sm:$0xff]
      %v1487 = vld [vmem:[%s1364 + $0x3d0] sm:$0xff]
      %v1488 = vld [vmem:[%s1364 + $0x3d8] sm:$0xff]
      %v1489 = vld [vmem:[%s1364 + $0x3e0] sm:$0xff]
      %s1490 = scalar_lea.vmem %s4, 1
      %v1491 = vld [vmem:[%s1490] sm:$0x1]
      %v1493 = vlaneseq
      %v1494 = vshrl.u32 %v1493, 7
      %v1495 = vsub.s32 0, %v1494
      %v1496 = vrot.slane %v1491, %v1495
      %1498 = vmatprep.subr.mxu0 0.0
      %1499 = vmatpush1.msra.mxu0 %v1380
      %1500 = vmatprep.subr.mxu0 0.0
      %1501 = vmatpush1.msra.mxu0 %v1379
      %1502 = vmatprep.subr.mxu0 0.0
      %1503 = vmatpush1.msra.mxu0 %v1378
      %1504 = vmatprep.subr.mxu0 0.0
      %1505 = vmatpush1.msra.mxu0 %v1377
      %1506 = vmatprep.subr.mxu0 0.0
      %1507 = vmatpush1.msra.mxu0 %v1376
      %1508 = vmatprep.subr.mxu0 0.0
      %1509 = vmatpush1.msra.mxu0 %v1375
      %1510 = vmatprep.subr.mxu0 0.0
      %1511 = vmatpush1.msra.mxu0 %v1374
      %1512 = vmatprep.subr.mxu0 0.0
      %1513 = vmatpush1.msra.mxu0 %v1373
      %1514 = vmatprep.subr.mxu0 0.0
      %1515 = vmatpush1.msra.mxu0 %v1372
      %1516 = vmatprep.subr.mxu0 0.0
      %1517 = vmatpush1.msra.mxu0 %v1371
      %1518 = vmatprep.subr.mxu0 0.0
      %1519 = vmatpush1.msra.mxu0 %v1370
      %1520 = vmatprep.subr.mxu0 0.0
      %1521 = vmatpush1.msra.mxu0 %v1369
      %1522 = vmatprep.subr.mxu0 0.0
      %1523 = vmatpush1.msra.mxu0 %v1368
      %1524 = vmatprep.subr.mxu0 0.0
      %1525 = vmatpush1.msra.mxu0 %v1367
      %1526 = vmatprep.subr.mxu0 0.0
      %1527 = vmatpush1.msra.mxu0 %v1366
      %1528 = vmatprep.subr.mxu0 0.0
      %1529 = vmatpush1.msra.mxu0 %v1365
      %1530 = vmatprep.subr.mxu0 0.0
      %1531 = vmatpush2.msra.mxu0 %v1396
      %1532 = vmatprep.subr.mxu0 0.0
      %1533 = vmatpush2.msra.mxu0 %v1395
      %1534 = vmatprep.subr.mxu0 0.0
      %1535 = vmatpush2.msra.mxu0 %v1394
      %1536 = vmatprep.subr.mxu0 0.0
      %1537 = vmatpush2.msra.mxu0 %v1393
      %1538 = vmatprep.subr.mxu0 0.0
      %1539 = vmatpush2.msra.mxu0 %v1392
      %1540 = vmatprep.subr.mxu0 0.0
      %1541 = vmatpush2.msra.mxu0 %v1391
      %1542 = vmatprep.subr.mxu0 0.0
      %1543 = vmatpush2.msra.mxu0 %v1390
      %1544 = vmatprep.subr.mxu0 0.0
      %1545 = vmatpush2.msra.mxu0 %v1389
      %1546 = vmatprep.subr.mxu0 0.0
      %1547 = vmatpush2.msra.mxu0 %v1388
      %1548 = vmatprep.subr.mxu0 0.0
      %1549 = vmatpush2.msra.mxu0 %v1387
      %1550 = vmatprep.subr.mxu0 0.0
      %1551 = vmatpush2.msra.mxu0 %v1386
      %1552 = vmatprep.subr.mxu0 0.0
      %1553 = vmatpush2.msra.mxu0 %v1385
      %1554 = vmatprep.subr.mxu0 0.0
      %1555 = vmatpush2.msra.mxu0 %v1384
      %1556 = vmatprep.subr.mxu0 0.0
      %1557 = vmatpush2.msra.mxu0 %v1383
      %1558 = vmatprep.subr.mxu0 0.0
      %1559 = vmatpush2.msra.mxu0 %v1382
      %1560 = vmatprep.subr.mxu0 0.0
      %1561 = vmatpush2.msra.mxu0 %v1381
      %1562 = vmatprep.mubr.f32.mxu0 %v548
      %1563 = vmatmul.mubr.f32.gmra.mxu0 %v546
      %v1564 = vpop.f32.mrf.mxu0
      %v1565 = vadd.f32 %v1496, %v1564
      %v1566 = vpop.f32.mrf.mxu0
      %1567 = vdwg.mxu0
      %1568 = vmatprep.subr.mxu0 0.0
      %1569 = vmatpush1.msra.mxu0 %v1412
      %1570 = vmatprep.subr.mxu0 0.0
      %1571 = vmatpush1.msra.mxu0 %v1411
      %1572 = vmatprep.subr.mxu0 0.0
      %1573 = vmatpush1.msra.mxu0 %v1410
      %1574 = vmatprep.subr.mxu0 0.0
      %1575 = vmatpush1.msra.mxu0 %v1409
      %1576 = vmatprep.subr.mxu0 0.0
      %1577 = vmatpush1.msra.mxu0 %v1408
      %1578 = vmatprep.subr.mxu0 0.0
      %1579 = vmatpush1.msra.mxu0 %v1407
      %1580 = vmatprep.subr.mxu0 0.0
      %1581 = vmatpush1.msra.mxu0 %v1406
      %1582 = vmatprep.subr.mxu0 0.0
      %1583 = vmatpush1.msra.mxu0 %v1405
      %1584 = vmatprep.subr.mxu0 0.0
      %1585 = vmatpush1.msra.mxu0 %v1404
      %1586 = vmatprep.subr.mxu0 0.0
      %1587 = vmatpush1.msra.mxu0 %v1403
      %1588 = vmatprep.subr.mxu0 0.0
      %1589 = vmatpush1.msra.mxu0 %v1402
      %1590 = vmatprep.subr.mxu0 0.0
      %1591 = vmatpush1.msra.mxu0 %v1401
      %1592 = vmatprep.subr.mxu0 0.0
      %1593 = vmatpush1.msra.mxu0 %v1400
      %1594 = vmatprep.subr.mxu0 0.0
      %1595 = vmatpush1.msra.mxu0 %v1399
      %1596 = vmatprep.subr.mxu0 0.0
      %1597 = vmatpush1.msra.mxu0 %v1398
      %1598 = vmatprep.subr.mxu0 0.0
      %1599 = vmatpush1.msra.mxu0 %v1397
      %1600 = vmatprep.subr.mxu0 0.0
      %1601 = vmatpush2.msra.mxu0 %v1428
      %1602 = vmatprep.subr.mxu0 0.0
      %1603 = vmatpush2.msra.mxu0 %v1427
      %1604 = vmatprep.subr.mxu0 0.0
      %1605 = vmatpush2.msra.mxu0 %v1426
      %1606 = vmatprep.subr.mxu0 0.0
      %1607 = vmatpush2.msra.mxu0 %v1425
      %1608 = vmatprep.subr.mxu0 0.0
      %1609 = vmatpush2.msra.mxu0 %v1424
      %1610 = vmatprep.subr.mxu0 0.0
      %1611 = vmatpush2.msra.mxu0 %v1423
      %1612 = vmatprep.subr.mxu0 0.0
      %1613 = vmatpush2.msra.mxu0 %v1422
      %1614 = vmatprep.subr.mxu0 0.0
      %1615 = vmatpush2.msra.mxu0 %v1421
      %1616 = vmatprep.subr.mxu0 0.0
      %1617 = vmatpush2.msra.mxu0 %v1420
      %1618 = vmatprep.subr.mxu0 0.0
      %1619 = vmatpush2.msra.mxu0 %v1419
      %1620 = vmatprep.subr.mxu0 0.0
      %1621 = vmatpush2.msra.mxu0 %v1418
      %1622 = vmatprep.subr.mxu0 0.0
      %1623 = vmatpush2.msra.mxu0 %v1417
      %1624 = vmatprep.subr.mxu0 0.0
      %1625 = vmatpush2.msra.mxu0 %v1416
      %1626 = vmatprep.subr.mxu0 0.0
      %1627 = vmatpush2.msra.mxu0 %v1415
      %1628 = vmatprep.subr.mxu0 0.0
      %1629 = vmatpush2.msra.mxu0 %v1414
      %1630 = vmatprep.subr.mxu0 0.0
      %1631 = vmatpush2.msra.mxu0 %v1413
      %1632 = vmatprep.mubr.f32.mxu0 %v619
      %1633 = vmatmul.mubr.f32.gmra.mxu0 %v617
      %v1634 = vpop.f32.mrf.mxu0
      %v1635 = vadd.f32 %v1565, %v1634
      %v1636 = vpop.f32.mrf.mxu0
      %1637 = vdwg.mxu0
      %1638 = vmatprep.subr.mxu0 0.0
      %1639 = vmatpush1.msra.mxu0 %v1444
      %1640 = vmatprep.subr.mxu0 0.0
      %1641 = vmatpush1.msra.mxu0 %v1443
      %1642 = vmatprep.subr.mxu0 0.0
      %1643 = vmatpush1.msra.mxu0 %v1442
      %1644 = vmatprep.subr.mxu0 0.0
      %1645 = vmatpush1.msra.mxu0 %v1441
      %1646 = vmatprep.subr.mxu0 0.0
      %1647 = vmatpush1.msra.mxu0 %v1440
      %1648 = vmatprep.subr.mxu0 0.0
      %1649 = vmatpush1.msra.mxu0 %v1439
      %1650 = vmatprep.subr.mxu0 0.0
      %1651 = vmatpush1.msra.mxu0 %v1438
      %1652 = vmatprep.subr.mxu0 0.0
      %1653 = vmatpush1.msra.mxu0 %v1437
      %1654 = vmatprep.subr.mxu0 0.0
      %1655 = vmatpush1.msra.mxu0 %v1436
      %1656 = vmatprep.subr.mxu0 0.0
      %1657 = vmatpush1.msra.mxu0 %v1435
      %1658 = vmatprep.subr.mxu0 0.0
      %1659 = vmatpush1.msra.mxu0 %v1434
      %1660 = vmatprep.subr.mxu0 0.0
      %1661 = vmatpush1.msra.mxu0 %v1433
      %1662 = vmatprep.subr.mxu0 0.0
      %1663 = vmatpush1.msra.mxu0 %v1432
      %1664 = vmatprep.subr.mxu0 0.0
      %1665 = vmatpush1.msra.mxu0 %v1431
      %1666 = vmatprep.subr.mxu0 0.0
      %1667 = vmatpush1.msra.mxu0 %v1430
      %1668 = vmatprep.subr.mxu0 0.0
      %1669 = vmatpush1.msra.mxu0 %v1429
      %1670 = vmatprep.subr.mxu0 0.0
      %1671 = vmatpush2.msra.mxu0 %v1460
      %1672 = vmatprep.subr.mxu0 0.0
      %1673 = vmatpush2.msra.mxu0 %v1459
      %1674 = vmatprep.subr.mxu0 0.0
      %1675 = vmatpush2.msra.mxu0 %v1458
      %1676 = vmatprep.subr.mxu0 0.0
      %1677 = vmatpush2.msra.mxu0 %v1457
      %1678 = vmatprep.subr.mxu0 0.0
      %1679 = vmatpush2.msra.mxu0 %v1456
      %1680 = vmatprep.subr.mxu0 0.0
      %1681 = vmatpush2.msra.mxu0 %v1455
      %1682 = vmatprep.subr.mxu0 0.0
      %1683 = vmatpush2.msra.mxu0 %v1454
      %1684 = vmatprep.subr.mxu0 0.0
      %1685 = vmatpush2.msra.mxu0 %v1453
      %1686 = vmatprep.subr.mxu0 0.0
      %1687 = vmatpush2.msra.mxu0 %v1452
      %1688 = vmatprep.subr.mxu0 0.0
      %1689 = vmatpush2.msra.mxu0 %v1451
      %1690 = vmatprep.subr.mxu0 0.0
      %1691 = vmatpush2.msra.mxu0 %v1450
      %1692 = vmatprep.subr.mxu0 0.0
      %1693 = vmatpush2.msra.mxu0 %v1449
      %1694 = vmatprep.subr.mxu0 0.0
      %1695 = vmatpush2.msra.mxu0 %v1448
      %1696 = vmatprep.subr.mxu0 0.0
      %1697 = vmatpush2.msra.mxu0 %v1447
      %1698 = vmatprep.subr.mxu0 0.0
      %1699 = vmatpush2.msra.mxu0 %v1446
      %1700 = vmatprep.subr.mxu0 0.0
      %1701 = vmatpush2.msra.mxu0 %v1445
      %1702 = vmatprep.mubr.f32.mxu0 %v690
      %1703 = vmatmul.mubr.f32.gmra.mxu0 %v688
      %v1704 = vpop.f32.mrf.mxu0
      %v1705 = vadd.f32 %v1635, %v1704
      %v1706 = vpop.f32.mrf.mxu0
      %1707 = vdwg.mxu0
      %1708 = vmatprep.subr.mxu0 0.0
      %1709 = vmatpush1.msra.mxu0 %v1476
      %1710 = vmatprep.subr.mxu0 0.0
      %1711 = vmatpush1.msra.mxu0 %v1475
      %1712 = vmatprep.subr.mxu0 0.0
      %1713 = vmatpush1.msra.mxu0 %v1474
      %1714 = vmatprep.subr.mxu0 0.0
      %1715 = vmatpush1.msra.mxu0 %v1473
      %1716 = vmatprep.subr.mxu0 0.0
      %1717 = vmatpush1.msra.mxu0 %v1472
      %1718 = vmatprep.subr.mxu0 0.0
      %1719 = vmatpush1.msra.mxu0 %v1471
      %1720 = vmatprep.subr.mxu0 0.0
      %1721 = vmatpush1.msra.mxu0 %v1470
      %1722 = vmatprep.subr.mxu0 0.0
      %1723 = vmatpush1.msra.mxu0 %v1469
      %1724 = vmatprep.subr.mxu0 0.0
      %1725 = vmatpush1.msra.mxu0 %v1468
      %1726 = vmatprep.subr.mxu0 0.0
      %1727 = vmatpush1.msra.mxu0 %v1467
      %1728 = vmatprep.subr.mxu0 0.0
      %1729 = vmatpush1.msra.mxu0 %v1466
      %1730 = vmatprep.subr.mxu0 0.0
      %1731 = vmatpush1.msra.mxu0 %v1465
      %1732 = vmatprep.subr.mxu0 0.0
      %1733 = vmatpush1.msra.mxu0 %v1464
      %1734 = vmatprep.subr.mxu0 0.0
      %1735 = vmatpush1.msra.mxu0 %v1463
      %1736 = vmatprep.subr.mxu0 0.0
      %1737 = vmatpush1.msra.mxu0 %v1462
      %1738 = vmatprep.subr.mxu0 0.0
      %1739 = vmatpush1.msra.mxu0 %v1461
      %1740 = vmatprep.subr.mxu0 0.0
      %1741 = vmatpush2.msra.mxu0 0.0
      %1742 = vmatprep.subr.mxu0 0.0
      %1743 = vmatpush2.msra.mxu0 0.0
      %1744 = vmatprep.subr.mxu0 0.0
      %1745 = vmatpush2.msra.mxu0 0.0
      %1746 = vmatprep.subr.mxu0 0.0
      %1747 = vmatpush2.msra.mxu0 %v1489
      %1748 = vmatprep.subr.mxu0 0.0
      %1749 = vmatpush2.msra.mxu0 %v1488
      %1750 = vmatprep.subr.mxu0 0.0
      %1751 = vmatpush2.msra.mxu0 %v1487
      %1752 = vmatprep.subr.mxu0 0.0
      %1753 = vmatpush2.msra.mxu0 %v1486
      %1754 = vmatprep.subr.mxu0 0.0
      %1755 = vmatpush2.msra.mxu0 %v1485
      %1756 = vmatprep.subr.mxu0 0.0
      %1757 = vmatpush2.msra.mxu0 %v1484
      %1758 = vmatprep.subr.mxu0 0.0
      %1759 = vmatpush2.msra.mxu0 %v1483
      %1760 = vmatprep.subr.mxu0 0.0
      %1761 = vmatpush2.msra.mxu0 %v1482
      %1762 = vmatprep.subr.mxu0 0.0
      %1763 = vmatpush2.msra.mxu0 %v1481
      %1764 = vmatprep.subr.mxu0 0.0
      %1765 = vmatpush2.msra.mxu0 %v1480
      %1766 = vmatprep.subr.mxu0 0.0
      %1767 = vmatpush2.msra.mxu0 %v1479
      %1768 = vmatprep.subr.mxu0 0.0
      %1769 = vmatpush2.msra.mxu0 %v1478
      %1770 = vmatprep.subr.mxu0 0.0
      %1771 = vmatpush2.msra.mxu0 %v1477
      %1772 = vmatprep.mubr.f32.mxu0 %v897
      %1773 = vmatmul.mubr.f32.gmra.mxu0 %v759
      %v1774 = vpop.f32.mrf.mxu0
      %v1775 = vadd.f32 %v1705, %v1774
      %v1776 = vpop.f32.mrf.mxu0
      %1777 = vdwg.mxu0
      %v1778 = vtanh.pop %v1775
      %s1779 = scalar_lea.vmem %s5, 1
      %v1780 = vld [vmem:[%s1779] sm:$0x1]
      %v1782 = vlaneseq
      %v1783 = vshrl.u32 %v1782, 7
      %v1784 = vsub.s32 0, %v1783
      %v1785 = vrot.slane %v1780, %v1784
      %v1787 = vmul.f32 %v1778, %v1785
      %v1788 = vsel %vm1188, %v1787, 0.0
      %1789 = vadd.xlane.f32.xlu0 %v1788
      %v1790 = vpop.xlane.xlu0 %1789
      %s1791 = scalar_lea.vmem %s6, 1
      %v1792 = vld [vmem:[%s1791] sm:$0x1]
      %v1794 = vlaneseq
      %v1795 = vshrl.u32 %v1794, 7
      %v1796 = vsub.s32 0, %v1795
      %v1797 = vrot.slane %v1792, %v1796
      %v1799 = vadd.f32 %v1790, %v1797
      %v1800 = vsel %vm1200, %v1799, -inf
      %v1801 = vrot.slane %v1800, 4
      %v1802 = vmax.f32 %v1800, %v1801
      %v1803 = vrot.slane %v1802, 2
      %v1804 = vmax.f32 %v1802, %v1803
      %v1805 = vrot.slane %v1804, 1
      %v1806 = vmax.f32 %v1804, %v1805
      %v1807 = vsub.f32 %v1799, %v1806
      %v1808 = vmul.f32 %v1807, 1.442695
      %v1809 = vpow.pop %v1808
      %v1810 = vsel %vm1200, %v1809, 0.0
      %v1811 = vrot.slane %v1810, 4
      %v1812 = vadd.f32 %v1810, %v1811
      %v1813 = vrot.slane %v1812, 2
      %v1814 = vadd.f32 %v1812, %v1813
      %v1815 = vrot.slane %v1814, 1
      %v1816 = vadd.f32 %v1814, %v1815
      %v1817 = vrcp.pop %v1816
      %v1818 = vmul.f32 %v1809, %v1817
      %1820 = vset.pattern.permute.xlu0 0
      %1821 = vperm.xlu0 %1820, %v1818
      %v1822 = vpop.permute.xlu0 %1821
      %v1824 = vmul.f32 %v1822, %v546
      %v1825 = vmul.f32 %v1822, %v548
      %v1826 = vmul.f32 %v1822, %v617
      %v1827 = vmul.f32 %v1822, %v619
      %v1828 = vmul.f32 %v1822, %v688
      %v1829 = vmul.f32 %v1822, %v690
      %v1830 = vmul.f32 %v1822, %v759
      %v1831 = vmul.f32 %v1822, %v761
      %v1832 = vsel %vm1188, %v1824, 0.0
      %v1833 = vrot.slane %v1832, 4
      %v1834 = vadd.f32 %v1832, %v1833
      %v1835 = vrot.slane %v1834, 2
      %v1836 = vadd.f32 %v1834, %v1835
      %v1837 = vrot.slane %v1836, 1
      %v1838 = vadd.f32 %v1836, %v1837
      %v1839 = vsel %vm1188, %v1825, 0.0
      %v1840 = vrot.slane %v1839, 4
      %v1841 = vadd.f32 %v1839, %v1840
      %v1842 = vrot.slane %v1841, 2
      %v1843 = vadd.f32 %v1841, %v1842
      %v1844 = vrot.slane %v1843, 1
      %v1845 = vadd.f32 %v1843, %v1844
      %v1846 = vsel %vm1188, %v1826, 0.0
      %v1847 = vrot.slane %v1846, 4
      %v1848 = vadd.f32 %v1846, %v1847
      %v1849 = vrot.slane %v1848, 2
      %v1850 = vadd.f32 %v1848, %v1849
      %v1851 = vrot.slane %v1850, 1
      %v1852 = vadd.f32 %v1850, %v1851
      %v1853 = vsel %vm1188, %v1827, 0.0
      %v1854 = vrot.slane %v1853, 4
      %v1855 = vadd.f32 %v1853, %v1854
      %v1856 = vrot.slane %v1855, 2
      %v1857 = vadd.f32 %v1855, %v1856
      %v1858 = vrot.slane %v1857, 1
      %v1859 = vadd.f32 %v1857, %v1858
      %v1860 = vsel %vm1188, %v1828, 0.0
      %v1861 = vrot.slane %v1860, 4
      %v1862 = vadd.f32 %v1860, %v1861
      %v1863 = vrot.slane %v1862, 2
      %v1864 = vadd.f32 %v1862, %v1863
      %v1865 = vrot.slane %v1864, 1
      %v1866 = vadd.f32 %v1864, %v1865
      %v1867 = vsel %vm1188, %v1829, 0.0
      %v1868 = vrot.slane %v1867, 4
      %v1869 = vadd.f32 %v1867, %v1868
      %v1870 = vrot.slane %v1869, 2
      %v1871 = vadd.f32 %v1869, %v1870
      %v1872 = vrot.slane %v1871, 1
      %v1873 = vadd.f32 %v1871, %v1872
      %v1874 = vsel %vm1188, %v1830, 0.0
      %v1875 = vrot.slane %v1874, 4
      %v1876 = vadd.f32 %v1874, %v1875
      %v1877 = vrot.slane %v1876, 2
      %v1878 = vadd.f32 %v1876, %v1877
      %v1879 = vrot.slane %v1878, 1
      %v1880 = vadd.f32 %v1878, %v1879
      %v1881 = vsel %vm1282, %v1831, 0.0
      %v1882 = vrot.slane %v1881, 4
      %v1883 = vadd.f32 %v1881, %v1882
      %v1884 = vrot.slane %v1883, 2
      %v1885 = vadd.f32 %v1883, %v1884
      %v1886 = vrot.slane %v1885, 1
      %v1887 = vadd.f32 %v1885, %v1886
      %s1888 = scalar_lea.vmem %s7, 8
      %v1889 = vld [vmem:[%s1888] sm:$0xff]
      %v1891 = vlaneseq
      %v1892 = vshrl.u32 %v1891, 7
      %v1893 = vsub.s32 0, %v1892
      %v1894 = vrot.slane %v1889, %v1893
      %v1895 = vlaneseq
      %v1896 = vshrl.u32 %v1895, 7
      %v1897 = vsub.s32 1, %v1896
      %v1898 = vrot.slane %v1889, %v1897
      %v1899 = vlaneseq
      %v1900 = vshrl.u32 %v1899, 7
      %v1901 = vsub.s32 2, %v1900
      %v1902 = vrot.slane %v1889, %v1901
      %v1903 = vlaneseq
      %v1904 = vshrl.u32 %v1903, 7
      %v1905 = vsub.s32 3, %v1904
      %v1906 = vrot.slane %v1889, %v1905
      %v1907 = vlaneseq
      %v1908 = vshrl.u32 %v1907, 7
      %v1909 = vsub.s32 4, %v1908
      %v1910 = vrot.slane %v1889, %v1909
      %v1911 = vlaneseq
      %v1912 = vshrl.u32 %v1911, 7
      %v1913 = vsub.s32 5, %v1912
      %v1914 = vrot.slane %v1889, %v1913
      %v1915 = vlaneseq
      %v1916 = vshrl.u32 %v1915, 7
      %v1917 = vsub.s32 6, %v1916
      %v1918 = vrot.slane %v1889, %v1917
      %v1919 = vlaneseq
      %v1920 = vshrl.u32 %v1919, 7
      %v1921 = vsub.s32 7, %v1920
      %v1922 = vrot.slane %v1889, %v1921
      %v1931 = vmul.f32 %v1838, %v1894
      %v1932 = vmul.f32 %v1845, %v1898
      %v1933 = vmul.f32 %v1852, %v1902
      %v1934 = vmul.f32 %v1859, %v1906
      %v1935 = vmul.f32 %v1866, %v1910
      %v1936 = vmul.f32 %v1873, %v1914
      %v1937 = vmul.f32 %v1880, %v1918
      %v1938 = vmul.f32 %v1887, %v1922
      %v1939 = vsel %vm1340, %v1931, 0.0
      %v1940 = vsel %vm1340, %v1932, 0.0
      %v1941 = vadd.f32 %v1939, %v1940
      %v1942 = vsel %vm1340, %v1933, 0.0
      %v1943 = vadd.f32 %v1941, %v1942
      %v1944 = vsel %vm1340, %v1934, 0.0
      %v1945 = vadd.f32 %v1943, %v1944
      %v1946 = vsel %vm1340, %v1935, 0.0
      %v1947 = vadd.f32 %v1945, %v1946
      %v1948 = vsel %vm1340, %v1936, 0.0
      %v1949 = vadd.f32 %v1947, %v1948
      %v1950 = vsel %vm1340, %v1937, 0.0
      %v1951 = vadd.f32 %v1949, %v1950
      %v1952 = vsel %vm1354, %v1938, 0.0
      %v1953 = vadd.f32 %v1951, %v1952
      %1954 = vadd.xlane.f32.xlu0 %v1953
      %v1955 = vpop.xlane.xlu0 %1954
      %s1956 = scalar_lea.vmem %s8, 1
      %v1957 = vld [vmem:[%s1956] sm:$0x1]
      %v1958 = vadd.f32 %v1955, %v1957
      %s1959 = scalar_lea.vmem %s362, 1
      %1960 = vst.msk [vmem:[%s1959] sm:$0x1] %vm1361, %v1958
      %s1961 = scalar_lea.vmem %s367, 4
      %1962 = vst.msk [vmem:[%s1961] sm:$0xf] %vm1200, %v1818
      %p1963 = scmp.lt.s32.totalorder %s22, 1
      %s1964 = scalar_select %p1963, %s22, 1
      %s1965 = smul.addr %s1964, 2
      %s1966 = scalar_lea.vmem %s9, %s1965
      %p1967 = scmp.lt.s32.totalorder %s22, 1
      %s1968 = scalar_select %p1967, %s22, 1
      %s1969 = smul.addr %s1968, 2
      %s1970 = smul.addr %s1969, 4
      %s1971 = scalar_lea.vmem %s10, %s1970
      // Predicated region
      $region57: #{attention_slide_forward.3} parent=55 // pred_check
        %p1972 = pneg %p234
      $region58: #{attention_slide_forward.3} parent=55 // pred_check_branch
        %1974 = sbr.rel (%p1972) target = $region60
      $region59: #{attention_slide_forward.3} parent=55 // pred_region
        _
      $region60: #{attention_slide_forward.3} parent=55 // pred_fallthru
        _
      // Predicated region
      $region61: #{attention_slide_forward.3} parent=55 // pred_check
        %p1975 = pneg %p260
      $region62: #{attention_slide_forward.3} parent=55 // pred_check_branch
        %1977 = sbr.rel (%p1975) target = $region64
      $region63: #{attention_slide_forward.3} parent=55 // pred_region
        _
      $region64: #{attention_slide_forward.3} parent=55 // pred_fallthru
        _
    $region56: #{attention_slide_forward.3} parent=5 // pred_fallthru
      _
    %p1978 = scmp.le.s32.totalorder 2, %s17
    // Predicated region
    $region65: #{attention_slide_forward.3} parent=5 // pred_check
      %p1979 = pneg %p1978
    $region66: #{attention_slide_forward.3} parent=5 // pred_check_branch
      %1981 = sbr.rel (%p1979) target = $region68
    $region67: #{attention_slide_forward.3} parent=5 // pred_region
      %s1982 = ssub.s32 %s17, 2
      // Predicated region
      $region69: #{attention_slide_forward.3} parent=67 // pred_check
        %p1983 = pneg %p240
      $region70: #{attention_slide_forward.3} parent=67 // pred_check_branch
        %1985 = sbr.rel (%p1983) target = $region72
      $region71: #{attention_slide_forward.3} parent=67 // pred_region
        %p1986 = scmp.lt.s32.totalorder %s23, 1
        %s1987 = scalar_select %p1986, %s23, 1
        %s1988 = smul.addr %s1987, 2
        %s1989 = scalar_lea.vmem %s9, %s1988
      $region72: #{attention_slide_forward.3} parent=67 // pred_fallthru
        _
      // Predicated region
      $region73: #{attention_slide_forward.3} parent=67 // pred_check
        %p1990 = pneg %p266
      $region74: #{attention_slide_forward.3} parent=67 // pred_check_branch
        %1992 = sbr.rel (%p1990) target = $region76
      $region75: #{attention_slide_forward.3} parent=67 // pred_region
        %p1993 = scmp.lt.s32.totalorder %s23, 1
        %s1994 = scalar_select %p1993, %s23, 1
        %s1995 = smul.addr %s1994, 2
        %s1996 = smul.addr %s1995, 4
        %s1997 = scalar_lea.vmem %s10, %s1996
      $region76: #{attention_slide_forward.3} parent=67 // pred_fallthru
        _
    $region68: #{attention_slide_forward.3} parent=5 // pred_fallthru
      _
  $region6: #{attention_slide_forward.3} parent=0 // loop_footer
    %s21 = sadd.s32 1, %s17
  $region7: #{attention_slide_forward.3} parent=0 // loop_footer_branch
    %16 = sbr.rel target = $region3
  $region8: #{attention_slide_forward.3} parent=0 // loop_exit
    _

</llo_original>
